<compile_context>
chip_gen: v5e
topology: v5e:2x2
jax: 0.10.0
libtpu: 0.0.40
codegen_flags: <defaults>
</compile_context>

<pallas_src>
import jax
import jax.numpy as jnp
import numpy as np
from jax import lax
from jax.experimental import pallas as pl
from jax.experimental.pallas import tpu as pltpu


def _round_up(x, m):
    return ((x + m - 1) // m) * m


def _tpu_kind():
    try:
        return jax.devices()[0].device_kind.lower()
    except Exception:
        return ""


# ---------------------------------------------------------------------------
# Pallas kernel: tiled dense-CRF energy accumulation over the tile-pair triangle
# ---------------------------------------------------------------------------
def dense_energy_pallas(packed, *, n_feat_aug, n_cls, tile, use_bf16, core_parallel):
    """packed: (N, P, C), C = 2*n_feat_aug + 3*n_cls. Returns (N, P//tile) partials."""
    N, P, C = packed.shape
    FU = n_feat_aug
    K = n_cls
    assert P % tile == 0
    nblk = P // tile

    # Linearized upper triangle of tile pairs, row-major:
    #   (0,0),(0,1),...,(0,nb-1),(1,1),...,(nb-1,nb-1)
    ii, jj = np.triu_indices(nblk)
    i_tab = jnp.asarray(ii, dtype=jnp.int32)
    j_tab = jnp.asarray(jj, dtype=jnp.int32)
    n_pairs = int(ii.shape[0])

    cdt = jnp.bfloat16 if use_bf16 else jnp.float32

    def kernel(i_tab_ref, j_tab_ref, pi_ref, pj_ref, o_ref, acc_ref):
        t = pl.program_id(1)
        i = i_tab_ref[t]
        j = j_tab_ref[t]

        # First pair of row i is the diagonal pair (i, i): reset the accumulator.
        @pl.when(j == i)
        def _init():
            acc_ref[...] = jnp.zeros_like(acc_ref)

        pi = pi_ref[0]                                   # (T, C)  i-rows
        pj = pj_ref[0]                                   # (T, C)  j-rows
        u_i = pi[:, :FU]                                 # [f_i, -||f_i||^2/2, 1, 0..]
        v_j = pj[:, FU:2 * FU]                           # [f_j, 1, -||f_j||^2/2, 0..]
        as_i = pi[:, 2 * FU:2 * FU + 2 * K]              # [A_i | S_i]
        sa_j = pj[:, 2 * FU + K:2 * FU + 3 * K]          # [S_j | A_j]

        # logw = -0.5 * ||f_i - f_j||^2 as one MXU "NT" matmul (norms folded).
        # Full f32 precision: the folded norm terms can be O(100) while the
        # pairwise differences that matter are O(1).
        logw = lax.dot_general(
            u_i, v_j, (((1,), (1,)), ((), ())),
            precision=lax.Precision.HIGHEST,
            preferred_element_type=jnp.float32)          # (T, T)

        # Bilateral affinity (EUP-bound); bf16 on v6e/v7x, f32 on v5e.
        w = jnp.exp(logw.astype(cdt))                    # (T, T)

        # j-tile contraction on the MXU: (T, T) @ (T, 2K), f32 accumulation.
        wsa = jnp.dot(w, sa_j.astype(cdt), preferred_element_type=jnp.float32)

        # Symmetric fold: off-diagonal tile pairs carry both (i,j) and (j,i)
        # via [A_i|S_i].[S_j|A_j]; diagonal tile pairs are halved.
        scale = jnp.where(j == i, jnp.float32(0.5), jnp.float32(1.0))
        acc_ref[...] += scale * (as_i * wsa)             # cheap (T, 2K) VPU update

        # Last pair of row i is (i, nblk-1): emit the per-(n, i) partial energy.
        @pl.when(j == nblk - 1)
        def _finalize():
            o_ref[...] = jnp.zeros_like(o_ref) + jnp.sum(acc_ref[...])

    flops = int(2 * N * n_pairs * tile * tile * (FU + 2 * K))
    transcendentals = int(N * n_pairs * tile * tile)     # only executed (triangle) exps
    bytes_accessed = int(N * n_pairs * 2 * tile * C * 4 + N * nblk * 4)
    cost = pl.CostEstimate(flops=flops, transcendentals=transcendentals,
                           bytes_accessed=bytes_accessed)

    batch_sem = pltpu.CORE_PARALLEL if core_parallel else pltpu.PARALLEL

    out = pl.pallas_call(
        kernel,
        out_shape=jax.ShapeDtypeStruct((N, nblk, 1, 1), jnp.float32),
        grid_spec=pltpu.PrefetchScalarGridSpec(
            num_scalar_prefetch=2,
            grid=(N, n_pairs),
            in_specs=[
                pl.BlockSpec((1, tile, C), lambda n, t, it, jt: (n, it[t], 0)),  # i-rows
                pl.BlockSpec((1, tile, C), lambda n, t, it, jt: (n, jt[t], 0)),  # j-rows
            ],
            out_specs=pl.BlockSpec((1, 1, 1, 1),
                                   lambda n, t, it, jt: (n, it[t], 0, 0)),
            scratch_shapes=[pltpu.VMEM((tile, 2 * K), jnp.float32)],
        ),
        compiler_params=pltpu.CompilerParams(
            dimension_semantics=(batch_sem, pltpu.ARBITRARY),
        ),
        cost_estimate=cost,
    )(i_tab, j_tab, packed, packed)
    return out[..., 0, 0]                                # (N, nblk)


# ---------------------------------------------------------------------------
# Plain-JAX glue: interpolation (PyTorch F.interpolate semantics), Gate,
# layout conversion and feature packing.
# ---------------------------------------------------------------------------
def _interp_nearest(x, out_h, out_w):
    # PyTorch mode='nearest': src = floor(dst * in/out)
    _, _, H, W = x.shape
    rows = jnp.floor(jnp.arange(out_h) * (H / out_h)).astype(jnp.int32)
    cols = jnp.floor(jnp.arange(out_w) * (W / out_w)).astype(jnp.int32)
    return x[:, :, rows][:, :, :, cols]


def _interp_bilinear(x, out_h, out_w):
    # PyTorch mode='bilinear', align_corners=False: src = (dst+0.5)*in/out - 0.5
    _, _, H, W = x.shape

    def coords(out, inp):
        src = (jnp.arange(out, dtype=jnp.float32) + 0.5) * (inp / out) - 0.5
        src = jnp.clip(src, 0.0, inp - 1.0)
        i0 = jnp.floor(src).astype(jnp.int32)
        i1 = jnp.minimum(i0 + 1, inp - 1)
        frac = src - i0.astype(jnp.float32)
        return i0, i1, frac

    r0, r1, wr = coords(out_h, H)
    c0, c1, wc = coords(out_w, W)
    top = x[:, :, r0][..., c0] * (1.0 - wc) + x[:, :, r0][..., c1] * wc
    bot = x[:, :, r1][..., c0] * (1.0 - wc) + x[:, :, r1][..., c1] * wc
    wr = wr[None, None, :, None]
    return top * (1.0 - wr) + bot * wr


def _preprocess(images, segmentations, rois, seg_label, *,
                sigma_rgb, sigma_xy, scale_factor):
    """Returns feats (N,P,F), A = gate*segROI (N,P,K), S = segROI (N,P,K)."""
    N, K, H, W = segmentations.shape
    out_h = int(H * scale_factor)
    out_w = int(W * scale_factor)

    scaled_images = _interp_nearest(images, out_h, out_w)
    scaled_segs = _interp_bilinear(segmentations, out_h, out_w)
    scaled_rois = _interp_nearest(rois[:, None], out_h, out_w)[:, 0]
    scaled_label = _interp_nearest(seg_label, out_h, out_w)
    unlabel_region = (scaled_label.astype(jnp.int32) == 255)[:, 0]   # (N, h, w)

    sxy = sigma_xy * scale_factor

    # Gate = ROI - max_k(seg); Gate[unlabeled] = 1; Gate[Gate < 0] = 0
    seg_max = jnp.max(scaled_segs, axis=1)
    gate = scaled_rois - seg_max
    gate = jnp.where(unlabel_region, 1.0, gate)
    gate = jnp.maximum(gate, 0.0)                                    # (N, h, w)

    seg_roi = scaled_segs * scaled_rois[:, None]                     # (N, K, h, w)

    P = out_h * out_w
    C_img = scaled_images.shape[1]

    yy, xx = jnp.meshgrid(
        jnp.arange(out_h, dtype=jnp.float32),
        jnp.arange(out_w, dtype=jnp.float32),
        indexing="ij",
    )
    xy = jnp.stack([xx, yy], axis=-1).reshape(P, 2) / sxy
    rgb = scaled_images.transpose(0, 2, 3, 1).reshape(N, P, C_img) / sigma_rgb
    feats = jnp.concatenate(
        [jnp.broadcast_to(xy[None], (N, P, 2)), rgb], axis=-1
    ).astype(jnp.float32)                                            # (N, P, F)

    s_mat = seg_roi.transpose(0, 2, 3, 1).reshape(N, P, K).astype(jnp.float32)
    a_mat = s_mat * gate.reshape(N, P, 1)
    return feats, a_mat, s_mat


def dense_energy_loss(images, segmentations, rois, seg_label, *,
                      weight, sigma_rgb, sigma_xy, scale_factor,
                      tile=512, use_bf16=None, core_parallel=None):
    """JAX/Pallas equivalent of DenseEnergyLoss.forward (loss value only)."""
    N = segmentations.shape[0]
    feats, a_mat, s_mat = _preprocess(
        images, segmentations, rois, seg_label,
        sigma_rgb=sigma_rgb, sigma_xy=sigma_xy, scale_factor=scale_factor)

    # Per-image mean-centering: distances are translation invariant, and smaller
    # magnitudes keep the norm-folded MXU contraction well conditioned.
    feats = feats - jnp.mean(feats, axis=1, keepdims=True)

    P, F = feats.shape[1], feats.shape[2]
    K = s_mat.shape[-1]

    if use_bf16 is None or core_parallel is None:
        kind = _tpu_kind()
        if use_bf16 is None:
            # bf16 EUP/VPU only on v6e / v7x; keep f32 on v5e and older.
            use_bf16 = ("v6" in kind) or ("v7" in kind)
        if core_parallel is None:
            # explicit 2-TensorCore split only on v7x.
            core_parallel = "v7" in kind

    # Pack [u | v | A | S | A] so u_i . v_j = -0.5*||f_i - f_j||^2 (norms hoisted)
    # and both [A_i|S_i] and [S_j|A_j] are contiguous lane slices of one array.
    # Geometry channels stay f32 (do NOT cast: ||f||^2 can be O(100)).
    n2 = jnp.sum(feats * feats, axis=-1, keepdims=True)
    ones = jnp.ones_like(n2)
    u = jnp.concatenate([feats, -0.5 * n2, ones], axis=-1)           # (N, P, F+2)
    v = jnp.concatenate([feats, ones, -0.5 * n2], axis=-1)           # (N, P, F+2)
    FU = F + 2
    FU_pad = _round_up(FU, 8)   # keep the skinny MXU contraction 8-aligned
    if FU_pad != FU:
        zpad = jnp.zeros(u.shape[:-1] + (FU_pad - FU,), u.dtype)
        u = jnp.concatenate([u, zpad], axis=-1)
        v = jnp.concatenate([v, zpad], axis=-1)
    packed = jnp.concatenate([u, v, a_mat, s_mat, a_mat], axis=-1).astype(jnp.float32)

    # Pad P to a sublane/tile-friendly size; zero seg rows contribute nothing.
    eff_tile = min(_round_up(tile, 8), _round_up(P, 8))
    P_pad = _round_up(P, eff_tile)
    if P_pad != P:
        packed = jnp.pad(packed, ((0, 0), (0, P_pad - P), (0, 0)))

    partials = dense_energy_pallas(packed, n_feat_aug=FU_pad, n_cls=K,
                                   tile=eff_tile, use_bf16=use_bf16,
                                   core_parallel=core_parallel)
    energy = jnp.sum(partials)                # final f32 reduction in plain JAX
    return weight * (-energy / N)


def dense_energy_loss_ref(images, segmentations, rois, seg_label, *,
                          weight, sigma_rgb, sigma_xy, scale_factor):
    """Pure-JAX O(P^2) reference (VPU-only ops) for correctness checking."""
    N = segmentations.shape[0]
    feats, a_mat, s_mat = _preprocess(
        images, segmentations, rois, seg_label,
        sigma_rgb=sigma_rgb, sigma_xy=sigma_xy, scale_factor=scale_factor)
    d2 = jnp.sum((feats[:, :, None, :] - feats[:, None, :, :]) ** 2, axis=-1)
    w = jnp.exp(-0.5 * d2)                                           # (N, P, P)
    ss = jnp.sum(a_mat[:, :, None, :] * s_mat[:, None, :, :], axis=-1)
    energy = jnp.sum(w * ss)
    return weight * (-energy / N)


# ---------------------------------------------------------------------------
if __name__ == "__main__":
    # Hyper-parameters of DenseEnergyLoss.__init__ (no learned weights).
    weight = 0.1
    sigma_rgb = 15.0
    sigma_xy = 80.0
    scale_factor = 0.5

    N, C_img, K, H, W = 2, 3, 4, 32, 32

    key = jax.random.PRNGKey(0)
    k1, k2, k3, k4, k5 = jax.random.split(key, 5)
    images = jax.random.uniform(k1, (N, C_img, H, W), jnp.float32, 0.0, 255.0)
    segmentations = jax.nn.softmax(
        jax.random.normal(k2, (N, K, H, W), jnp.float32), axis=1)
    rois = (jax.random.uniform(k3, (N, H, W)) > 0.2).astype(jnp.float32)
    labels = jax.random.randint(k4, (N, 1, H, W), 0, K).astype(jnp.float32)
    unlabeled = jax.random.uniform(k5, (N, 1, H, W)) > 0.7
    seg_label = jnp.where(unlabeled, 255.0, labels)

    common = dict(weight=weight, sigma_rgb=sigma_rgb, sigma_xy=sigma_xy,
                  scale_factor=scale_factor)

    # Default (single-tile) path and a small-tile path that exercises the
    # linearized upper-triangle accumulation and per-(n, i) partial outputs.
    loss_big = dense_energy_loss(images, segmentations, rois, seg_label,
                                 tile=512, **common)
    loss_small = dense_energy_loss(images, segmentations, rois, seg_label,
                                   tile=64, **common)
    ref = dense_energy_loss_ref(images, segmentations, rois, seg_label, **common)
    jax.block_until_ready((loss_big, loss_small, ref))

    assert loss_big.shape == () and bool(jnp.isfinite(loss_big))
    assert loss_small.shape == () and bool(jnp.isfinite(loss_small))
    # rtol covers the bf16 exp / bf16 second-matmul path on v6e/v7x.
    assert jnp.allclose(loss_big, ref, rtol=1e-2, atol=1e-4)
    assert jnp.allclose(loss_small, ref, rtol=1e-2, atol=1e-4)
    print("KERNEL_OK")
</pallas_src>

<mosaic_0001>
module attributes {stable_mosaic.version = 11 : i64} {
  func.func @kernel(%arg0: i32, %arg1: i32, %arg2: memref<1xi32, #tpu.memory_space<smem>>, %arg3: memref<1xi32, #tpu.memory_space<smem>>, %arg4: memref<1x256x28xf32, #tpu.memory_space<vmem>>, %arg5: memref<1x256x28xf32, #tpu.memory_space<vmem>>, %arg6: memref<1x1x1x1xf32, #tpu.memory_space<vmem>>, %arg7: memref<256x8xf32, #tpu.memory_space<vmem>>) attributes {dimension_semantics = [#tpu.dimension_semantics<parallel>, #tpu.dimension_semantics<arbitrary>], iteration_bounds = array<i64: 2, 1>, scalar_prefetch = 2 : i64, scratch_operands = 1 : i64, tpu.core_type = #tpu.core_type<tc>, window_params = [{transform_indices = @transform_0, window_bounds = array<i64: 1, 256, 28>}, {transform_indices = @transform_1, window_bounds = array<i64: 1, 256, 28>}, {transform_indices = @transform_2, window_bounds = array<i64: 1, 1, 1, 1>}]} {
    %0 = arith.index_cast %arg1 : i32 to index
    %1 = memref.load %arg2[%0] : memref<1xi32, #tpu.memory_space<smem>>
    %2 = arith.index_cast %arg1 : i32 to index
    %3 = memref.load %arg3[%2] : memref<1xi32, #tpu.memory_space<smem>>
    %4 = arith.cmpi eq, %3, %1 : i32
    %5 = arith.extui %4 : i1 to i32
    %c0_i32 = arith.constant 0 : i32
    %6 = arith.cmpi ne, %5, %c0_i32 : i32
    scf.if %6 {
      %cst_14 = arith.constant 0.000000e+00 : f32
      %29 = vector.broadcast %cst_14 : f32 to vector<256x8xf32>
      %c0_15 = arith.constant 0 : index
      %c0_16 = arith.constant 0 : index
      %30 = vector.load %arg7[%c0_15, %c0_16] : memref<256x8xf32, #tpu.memory_space<vmem>>, vector<256x8xf32>
      tpu.vector_store %arg7[%c0_15, %c0_16], %29 {strides = array<i32>} : memref<256x8xf32, #tpu.memory_space<vmem>>, vector<256x8xf32>,
    } else {
    }
    %c0 = arith.constant 0 : index
    %c0_0 = arith.constant 0 : index
    %c0_1 = arith.constant 0 : index
    %7 = vector.load %arg4[%c0, %c0_0, %c0_1] : memref<1x256x28xf32, #tpu.memory_space<vmem>>, vector<1x256x28xf32>
    %8 = vector.shape_cast %7 : vector<1x256x28xf32> to vector<256x28xf32>
    %c0_2 = arith.constant 0 : index
    %c0_3 = arith.constant 0 : index
    %c0_4 = arith.constant 0 : index
    %9 = vector.load %arg5[%c0_2, %c0_3, %c0_4] : memref<1x256x28xf32, #tpu.memory_space<vmem>>, vector<1x256x28xf32>
    %10 = vector.shape_cast %9 : vector<1x256x28xf32> to vector<256x28xf32>
    %11 = vector.extract_strided_slice %8 {offsets = [0, 0], sizes = [256, 8], strides = [1, 1]} : vector<256x28xf32> to vector<256x8xf32>
    %12 = vector.extract_strided_slice %10 {offsets = [0, 8], sizes = [256, 8], strides = [1, 1]} : vector<256x28xf32> to vector<256x8xf32>
    %13 = vector.extract_strided_slice %8 {offsets = [0, 16], sizes = [256, 8], strides = [1, 1]} : vector<256x28xf32> to vector<256x8xf32>
    %14 = vector.extract_strided_slice %10 {offsets = [0, 20], sizes = [256, 8], strides = [1, 1]} : vector<256x28xf32> to vector<256x8xf32>
    %cst = arith.constant dense<0.000000e+00> : vector<256x256xf32>
    %15 = tpu.matmul %11, %12, %cst {dimension_numbers = #tpu.dot_dimension_numbers<[1], [1], [0], [0], [0, 0, 1, 0], [], []>, precision = #tpu.contract_precision<fp32>} : vector<256x8xf32>, vector<256x8xf32>, vector<256x256xf32> -> vector<256x256xf32>
    %16 = math.exp %15 : vector<256x256xf32>
    %cst_5 = arith.constant dense<0.000000e+00> : vector<256x8xf32>
    %17 = tpu.matmul %16, %14, %cst_5 {dimension_numbers = #tpu.dot_dimension_numbers<[1], [0], [0], [1], [0, 0, 1, 1], [], []>} : vector<256x256xf32>, vector<256x8xf32>, vector<256x8xf32> -> vector<256x8xf32>
    %18 = arith.cmpi eq, %3, %1 : i32
    %cst_6 = arith.constant 5.000000e-01 : f32
    %cst_7 = arith.constant 1.000000e+00 : f32
    %19 = arith.select %18, %cst_6, %cst_7 : f32
    %c0_8 = arith.constant 0 : index
    %c0_9 = arith.constant 0 : index
    %20 = vector.load %arg7[%c0_8, %c0_9] : memref<256x8xf32, #tpu.memory_space<vmem>>, vector<256x8xf32>
    %21 = arith.mulf %13, %17 : vector<256x8xf32>
    %22 = vector.broadcast %19 : f32 to vector<256x8xf32>
    %23 = arith.mulf %22, %21 : vector<256x8xf32>
    %24 = arith.addf %20, %23 : vector<256x8xf32>
    %c0_10 = arith.constant 0 : index
    %c0_11 = arith.constant 0 : index
    %25 = vector.load %arg7[%c0_10, %c0_11] : memref<256x8xf32, #tpu.memory_space<vmem>>, vector<256x8xf32>
    tpu.vector_store %arg7[%c0_10, %c0_11], %24 {strides = array<i32>} : memref<256x8xf32, #tpu.memory_space<vmem>>, vector<256x8xf32>,
    %c0_i32_12 = arith.constant 0 : i32
    %26 = arith.cmpi eq, %3, %c0_i32_12 : i32
    %27 = arith.extui %26 : i1 to i32
    %c0_i32_13 = arith.constant 0 : i32
    %28 = arith.cmpi ne, %27, %c0_i32_13 : i32
    scf.if %28 {
      %cst_14 = arith.constant 0.000000e+00 : f32
      %29 = vector.broadcast %cst_14 : f32 to vector<1x1x1x1xf32>
      %c0_15 = arith.constant 0 : index
      %c0_16 = arith.constant 0 : index
      %30 = vector.load %arg7[%c0_15, %c0_16] : memref<256x8xf32, #tpu.memory_space<vmem>>, vector<256x8xf32>
      %31 = vector.shape_cast %30 : vector<256x8xf32> to vector<1x256x8xf32>
      %cst_17 = arith.constant dense<0.000000e+00> : vector<1xf32>
      %32 = vector.multi_reduction <add>, %31, %cst_17 [1, 2] : vector<1x256x8xf32> to vector<1xf32>
      %33 = vector.shape_cast %32 : vector<1xf32> to vector<1x1x1xf32>
      %34 = vector.extract %33[0, 0, 0] : f32 from vector<1x1x1xf32>
      %35 = vector.broadcast %34 : f32 to vector<1x1x1x1xf32>
      %36 = arith.addf %29, %35 : vector<1x1x1x1xf32>
      %c0_18 = arith.constant 0 : index
      %c0_19 = arith.constant 0 : index
      %c0_20 = arith.constant 0 : index
      %c0_21 = arith.constant 0 : index
      %37 = vector.load %arg6[%c0_18, %c0_19, %c0_20, %c0_21] : memref<1x1x1x1xf32, #tpu.memory_space<vmem>>, vector<1x1x1x1xf32>
      tpu.vector_store %arg6[%c0_18, %c0_19, %c0_20, %c0_21], %36 {strides = array<i32>} : memref<1x1x1x1xf32, #tpu.memory_space<vmem>>, vector<1x1x1x1xf32>,
    } else {
    }
    return
  }
  func.func @transform_0(%arg0: i32, %arg1: i32, %arg2: memref<1xi32, #tpu.memory_space<smem>>, %arg3: memref<1xi32, #tpu.memory_space<smem>>) -> (i32, i32, i32) {
    %0 = arith.index_cast %arg1 : i32 to index
    %1 = memref.load %arg2[%0] : memref<1xi32, #tpu.memory_space<smem>>
    %c0_i32 = arith.constant 0 : i32
    %c0_i32_0 = arith.constant 0 : i32
    return %arg0, %1, %c0_i32 : i32, i32, i32
  }
  func.func @transform_1(%arg0: i32, %arg1: i32, %arg2: memref<1xi32, #tpu.memory_space<smem>>, %arg3: memref<1xi32, #tpu.memory_space<smem>>) -> (i32, i32, i32) {
    %0 = arith.index_cast %arg1 : i32 to index
    %1 = memref.load %arg3[%0] : memref<1xi32, #tpu.memory_space<smem>>
    %c0_i32 = arith.constant 0 : i32
    %c0_i32_0 = arith.constant 0 : i32
    return %arg0, %1, %c0_i32 : i32, i32, i32
  }
  func.func @transform_2(%arg0: i32, %arg1: i32, %arg2: memref<1xi32, #tpu.memory_space<smem>>, %arg3: memref<1xi32, #tpu.memory_space<smem>>) -> (i32, i32, i32, i32) {
    %0 = arith.index_cast %arg1 : i32 to index
    %1 = memref.load %arg2[%0] : memref<1xi32, #tpu.memory_space<smem>>
    %c0_i32 = arith.constant 0 : i32
    %c0_i32_0 = arith.constant 0 : i32
    %c0_i32_1 = arith.constant 0 : i32
    return %arg0, %1, %c0_i32, %c0_i32_0 : i32, i32, i32, i32
  }
}

</mosaic_0001>

<llo_original>
// kernel: tpu_custom_call.1
$region0: #{tpu_custom_call.1}
  #allocation0 [shape = 'u32[]', space=smem, size = 0x4, offset = 0x4, fixed_abs, tag = 'smem constant byte address 0x4 - core index']
  #allocation1 [shape = 'u32[72,128]{1,0:T(1,128)}', space=vmem, size = 0x9000, scoped, tag = 'internal scratch']
  #allocation2 [shape = 'f32[256,8]{1,0:T(8,128)}', space=vmem, size = 0x20000, scoped, tag = 'scratch operand']
  #allocation3 [shape = 's32[1]{0}', space=sflag, size = 0x4, scoped, tag = 'scoped memory for tpu_custom_call.1']
  #allocation4 [shape = 's32[1]{0:T(128)S(6)}', space=smem, size = 0x200, scoped, tag = 'prefetched SMEM operand 0']
  #allocation5 [shape = 's32[1]{0:T(128)S(6)}', space=smem, size = 0x200, scoped, tag = 'prefetched SMEM operand 1']
  %s0 = inlined_call_operand.<no memory space> [shape: s32[1], index: 0, kind: input, shape index: {}]
  %s1 = inlined_call_operand.<no memory space> [shape: s32[1], index: 1, kind: input, shape index: {}]
  %s2 = inlined_call_operand.vmem [shape: f32[2,256,28], index: 2, kind: input, shape index: {}]
  %s3 = inlined_call_operand.vmem [shape: f32[2,256,28], index: 3, kind: input, shape index: {}]
  %s4 = inlined_call_operand.vmem [shape: f32[2,1,1,1], index: 4, kind: output, shape index: {}]
  %s5 = sld [smem:[#allocation0]]
  $region49: #{tpu_custom_call.1} parent=0
    _
  %s7 = ssub.s32 1, %s5
  %s8 = scalar_select 0, %s7, %s5
  %9 = sst [smem:[#allocation4]] %s0
  %10 = sst [smem:[#allocation5]] %s1
  loop: start=0, step=1, limit=4
  $region2: #{tpu_custom_call.1} parent=0 // loop_pre_header
    _
  $region3: #{tpu_custom_call.1} parent=0 // loop_header
    %s12 = sphi 0, %s16
    %p13 = scmp.ge.s32.totalorder %s12, 4
    %s19 = sphi 0, %s31
    %s20 = sphi 0, %s27
    %s21 = sphi 0, %s19
    %s22 = sphi 0, %s20
    %s23 = sphi 0, %s21
    %s24 = sphi 0, %s22
    %s38 = sphi 0, %s40
    %s41 = sphi 0, %s38
    %s42 = sphi 0, %s41
    %s58 = sphi 0, %s42
    %s68 = sphi 0, %s70
    %s71 = sphi 0, %s68
    %s72 = sphi 0, %s71
    %s88 = sphi 0, %s72
    %s98 = sphi 0, %s100
    %s101 = sphi 0, %s98
    %s102 = sphi 0, %s101
    %s118 = sphi 0, %s102
  $region4: #{tpu_custom_call.1} parent=0 // loop_header_branch
    %15 = sbr.rel (%p13) target = $region8
  $region5: #{tpu_custom_call.1} parent=0 // loop_body
    %s17 = ssub.s32 %s12, 1
    %s18 = ssub.s32 %s12, 2
    %s25 = sadd.s32 1, %s20
    %p26 = scmp.ge.s32.totalorder %s25, 1
    %s27 = scalar_select %p26, 0, %s25
    %s28 = sadd.s32 1, %s19
    %s29 = scalar_select %p26, %s28, %s19
    %p30 = scmp.ge.s32.totalorder %s29, 2
    %s31 = scalar_select %p30, 0, %s29
    %s32 = sld [smem:[#allocation4 + %s20]]
    %s33 = sld [smem:[#allocation4 + %s27]]
    %s34 = ssub.s32 %s19, %s31
    %s35 = ssub.s32 %s32, %s33
    %s36 = sor.u32 %s34, %s35
    %p37 = scmp.eq.s32.totalorder %s36, 0
    %s39 = sadd.s32 %s38, 1
    %s40 = scalar_select %p37, %s38, %s39
    %p43 = pneg %p37
    %p44 = scmp.eq.s32.totalorder %s12, 1
    %p45 = por %p43, %p44
    %p46 = scmp.ne.s32.totalorder %s38, %s41
    %p47 = scmp.eq.s32.totalorder %s12, 0
    %p48 = por %p46, %p47
    %p49 = scmp.ne.s32.totalorder %s38, %s41
    %p50 = scmp.eq.s32.totalorder %s17, 1
    %p51 = por %p49, %p50
    %p52 = scmp.ne.s32.totalorder %s41, %s42
    %p53 = scmp.eq.s32.totalorder %s17, 0
    %p54 = por %p52, %p53
    %p55 = scmp.ne.s32.totalorder %s41, %s42
    %p56 = scmp.eq.s32.totalorder %s18, 1
    %p57 = por %p55, %p56
    %p59 = scmp.ne.s32.totalorder %s42, %s58
    %p60 = scmp.eq.s32.totalorder %s18, 0
    %p61 = por %p59, %p60
    %s62 = sld [smem:[#allocation5 + %s20]]
    %s63 = sld [smem:[#allocation5 + %s27]]
    %s64 = ssub.s32 %s19, %s31
    %s65 = ssub.s32 %s62, %s63
    %s66 = sor.u32 %s64, %s65
    %p67 = scmp.eq.s32.totalorder %s66, 0
    %s69 = sadd.s32 %s68, 1
    %s70 = scalar_select %p67, %s68, %s69
    %p73 = pneg %p67
    %p74 = scmp.eq.s32.totalorder %s12, 1
    %p75 = por %p73, %p74
    %p76 = scmp.ne.s32.totalorder %s68, %s71
    %p77 = scmp.eq.s32.totalorder %s12, 0
    %p78 = por %p76, %p77
    %p79 = scmp.ne.s32.totalorder %s68, %s71
    %p80 = scmp.eq.s32.totalorder %s17, 1
    %p81 = por %p79, %p80
    %p82 = scmp.ne.s32.totalorder %s71, %s72
    %p83 = scmp.eq.s32.totalorder %s17, 0
    %p84 = por %p82, %p83
    %p85 = scmp.ne.s32.totalorder %s71, %s72
    %p86 = scmp.eq.s32.totalorder %s18, 1
    %p87 = por %p85, %p86
    %p89 = scmp.ne.s32.totalorder %s72, %s88
    %p90 = scmp.eq.s32.totalorder %s18, 0
    %p91 = por %p89, %p90
    %s92 = sld [smem:[#allocation4 + %s20]]
    %s93 = sld [smem:[#allocation4 + %s27]]
    %s94 = ssub.s32 %s19, %s31
    %s95 = ssub.s32 %s92, %s93
    %s96 = sor.u32 %s94, %s95
    %p97 = scmp.eq.s32.totalorder %s96, 0
    %s99 = sadd.s32 %s98, 1
    %s100 = scalar_select %p97, %s98, %s99
    %p103 = pneg %p97
    %p104 = scmp.eq.s32.totalorder %s12, 1
    %p105 = por %p103, %p104
    %p106 = scmp.ne.s32.totalorder %s98, %s101
    %p107 = scmp.eq.s32.totalorder %s12, 0
    %p108 = por %p106, %p107
    %p109 = scmp.ne.s32.totalorder %s98, %s101
    %p110 = scmp.eq.s32.totalorder %s17, 1
    %p111 = por %p109, %p110
    %p112 = scmp.ne.s32.totalorder %s101, %s102
    %p113 = scmp.eq.s32.totalorder %s17, 0
    %p114 = por %p112, %p113
    %p115 = scmp.ne.s32.totalorder %s101, %s102
    %p116 = scmp.eq.s32.totalorder %s18, 1
    %p117 = por %p115, %p116
    %p119 = scmp.ne.s32.totalorder %s102, %s118
    %p120 = scmp.eq.s32.totalorder %s18, 0
    %p121 = por %p119, %p120
    %p122 = scmp.le.s32.totalorder 1, %s12
    %p123 = scmp.lt.s32.totalorder %s12, 3
    %p124 = pnand %p122, %p123
    %p125 = pneg %p124
    // Predicated region
    $region9: #{tpu_custom_call.1} parent=5 // pred_check
      _
    $region10: #{tpu_custom_call.1} parent=5 // pred_check_branch
      %127 = sbr.rel (%p124) target = $region12
    $region11: #{tpu_custom_call.1} parent=5 // pred_region
      %s128 = ssub.s32 %s12, 1
    $region12: #{tpu_custom_call.1} parent=5 // pred_fallthru
      _
    %p129 = scmp.lt.s32.totalorder %s12, 2
    // Predicated region
    $region13: #{tpu_custom_call.1} parent=5 // pred_check
      %p130 = pneg %p129
    $region14: #{tpu_custom_call.1} parent=5 // pred_check_branch
      %132 = sbr.rel (%p130) target = $region16
    $region15: #{tpu_custom_call.1} parent=5 // pred_region
      // Predicated region
      $region17: #{tpu_custom_call.1} parent=15 // pred_check
        %p133 = pneg %p48
      $region18: #{tpu_custom_call.1} parent=15 // pred_check_branch
        %135 = sbr.rel (%p133) target = $region20
      $region19: #{tpu_custom_call.1} parent=15 // pred_region
        %s136 = sld [smem:[#allocation4 + %s20]]
        %s137 = smul.u32 32, %s136
        %p138 = scmp.lt.s32.totalorder %s19, 1
        %s139 = scalar_select %p138, %s19, 1
        %p140 = scmp.lt.s32.totalorder %s137, 31
        %s141 = scalar_select %p140, %s137, 31
        %s142 = smul.addr %s139, 32
        %s143 = sadd.s32 %s141, %s142
        %s144 = smul.addr %s143, 8
        %s145 = scalar_lea.vmem %s2, %s144
        %s146 = sld [smem:[#allocation4 + %s20]]
        %s147 = smul.u32 32, %s146
      $region20: #{tpu_custom_call.1} parent=15 // pred_fallthru
        _
      // Predicated region
      $region21: #{tpu_custom_call.1} parent=15 // pred_check
        %p148 = pneg %p78
      $region22: #{tpu_custom_call.1} parent=15 // pred_check_branch
        %150 = sbr.rel (%p148) target = $region24
      $region23: #{tpu_custom_call.1} parent=15 // pred_region
        %s151 = sld [smem:[#allocation5 + %s20]]
        %s152 = smul.u32 32, %s151
        %p153 = scmp.lt.s32.totalorder %s19, 1
        %s154 = scalar_select %p153, %s19, 1
        %p155 = scmp.lt.s32.totalorder %s152, 31
        %s156 = scalar_select %p155, %s152, 31
        %s157 = smul.addr %s154, 32
        %s158 = sadd.s32 %s156, %s157
        %s159 = smul.addr %s158, 8
        %s160 = scalar_lea.vmem %s3, %s159
        %s161 = sld [smem:[#allocation5 + %s20]]
        %s162 = smul.u32 32, %s161
      $region24: #{tpu_custom_call.1} parent=15 // pred_fallthru
        _
    $region16: #{tpu_custom_call.1} parent=5 // pred_fallthru
      _
    %p163 = scmp.le.s32.totalorder 1, %s12
    %p164 = scmp.lt.s32.totalorder %s12, 3
    %p165 = pnand %p163, %p164
    %p166 = pneg %p165
    // Predicated region
    $region25: #{tpu_custom_call.1} parent=5 // pred_check
      _
    $region26: #{tpu_custom_call.1} parent=5 // pred_check_branch
      %168 = sbr.rel (%p165) target = $region28
    $region27: #{tpu_custom_call.1} parent=5 // pred_region
      %s169 = ssub.s32 %s12, 1
      %s170 = sld [smem:[#allocation4 + %s22]]
      %s171 = smul.u32 32, %s170
      %p172 = scmp.lt.s32.totalorder %s21, 1
      %s173 = scalar_select %p172, %s21, 1
      %p174 = scmp.lt.s32.totalorder %s171, 31
      %s175 = scalar_select %p174, %s171, 31
      %s176 = smul.addr %s173, 32
      %s177 = sadd.s32 %s175, %s176
      %s178 = smul.addr %s177, 8
      %s179 = scalar_lea.vmem %s2, %s178
      %p180 = pneg %p54
      %p181 = pneg %p51
      %s182 = sld [smem:[#allocation5 + %s22]]
      %s183 = smul.u32 32, %s182
      %p184 = scmp.lt.s32.totalorder %s21, 1
      %s185 = scalar_select %p184, %s21, 1
      %p186 = scmp.lt.s32.totalorder %s183, 31
      %s187 = scalar_select %p186, %s183, 31
      %s188 = smul.addr %s185, 32
      %s189 = sadd.s32 %s187, %s188
      %s190 = smul.addr %s189, 8
      %s191 = scalar_lea.vmem %s3, %s190
      %p192 = pneg %p84
      %p193 = pneg %p81
      %p194 = pneg %p114
      %p195 = pneg %p111
      %s196 = sld [smem:[#allocation4 + %s22]]
      %p197 = scmp.lt.s32.totalorder %s21, 1
      %s198 = scalar_select %p197, %s21, 1
      %p199 = scmp.lt.s32.totalorder %s196, 0
      %s200 = scalar_select %p199, %s196, 0
      %s201 = sadd.s32 %s200, %s198
      %s202 = scalar_lea.vmem %s4, %s201
      %s203 = sld [smem:[#allocation4 + %s22]]
      %s204 = smul.u32 32, %s203
      %p205 = scmp.lt.s32.totalorder %s21, 1
      %s206 = scalar_select %p205, %s21, 1
      %p207 = scmp.lt.s32.totalorder %s204, 31
      %s208 = scalar_select %p207, %s204, 31
      %s209 = smul.addr %s206, 32
      %s210 = sadd.s32 %s208, %s209
      %s211 = smul.addr %s210, 8
      %s212 = scalar_lea.vmem %s2, %s211
      %s213 = sld [smem:[#allocation4 + %s22]]
      %s214 = smul.u32 32, %s213
      %s215 = sld [smem:[#allocation5 + %s22]]
      %s216 = smul.u32 32, %s215
      %p217 = scmp.lt.s32.totalorder %s21, 1
      %s218 = scalar_select %p217, %s21, 1
      %p219 = scmp.lt.s32.totalorder %s216, 31
      %s220 = scalar_select %p219, %s216, 31
      %s221 = smul.addr %s218, 32
      %s222 = sadd.s32 %s220, %s221
      %s223 = smul.addr %s222, 8
      %s224 = scalar_lea.vmem %s3, %s223
      %s225 = sld [smem:[#allocation5 + %s22]]
      %s226 = smul.u32 32, %s225
      %s227 = sld [smem:[#allocation4 + %s22]]
      %p228 = scmp.lt.s32.totalorder %s21, 1
      %s229 = scalar_select %p228, %s21, 1
      %p230 = scmp.lt.s32.totalorder %s227, 0
      %s231 = scalar_select %p230, %s227, 0
      %s232 = sadd.s32 %s231, %s229
      %s233 = scalar_lea.vmem %s4, %s232
      %s234 = sld [smem:[#allocation4 + %s22]]
      %s235 = sld [smem:[#allocation4 + %s22]]
      %s236 = sld [smem:[#allocation5 + %s22]]
      %p237 = scmp.eq.s32.totalorder %s236, %s235
      // Predicated region
      $region29: #{tpu_custom_call.1} parent=27 // pred_check
        %p238 = pneg %p237
      $region30: #{tpu_custom_call.1} parent=27 // pred_check_branch
        %240 = sbr.rel (%p238) target = $region32
      $region31: #{tpu_custom_call.1} parent=27 // pred_region
        %vm241 = vcmask 64512
        %242 = vst.msk [vmem:[#allocation2] sm:$0xff] %vm241, 0.0
        %243 = vst.msk [vmem:[#allocation2 + $0x8] sm:$0xff] %vm241, 0.0
        %244 = vst.msk [vmem:[#allocation2 + $0x10] sm:$0xff] %vm241, 0.0
        %245 = vst.msk [vmem:[#allocation2 + $0x18] sm:$0xff] %vm241, 0.0
        %246 = vst.msk [vmem:[#allocation2 + $0x20] sm:$0xff] %vm241, 0.0
        %247 = vst.msk [vmem:[#allocation2 + $0x28] sm:$0xff] %vm241, 0.0
        %248 = vst.msk [vmem:[#allocation2 + $0x30] sm:$0xff] %vm241, 0.0
        %249 = vst.msk [vmem:[#allocation2 + $0x38] sm:$0xff] %vm241, 0.0
        %250 = vst.msk [vmem:[#allocation2 + $0x40] sm:$0xff] %vm241, 0.0
        %251 = vst.msk [vmem:[#allocation2 + $0x48] sm:$0xff] %vm241, 0.0
        %252 = vst.msk [vmem:[#allocation2 + $0x50] sm:$0xff] %vm241, 0.0
        %253 = vst.msk [vmem:[#allocation2 + $0x58] sm:$0xff] %vm241, 0.0
        %254 = vst.msk [vmem:[#allocation2 + $0x60] sm:$0xff] %vm241, 0.0
        %255 = vst.msk [vmem:[#allocation2 + $0x68] sm:$0xff] %vm241, 0.0
        %256 = vst.msk [vmem:[#allocation2 + $0x70] sm:$0xff] %vm241, 0.0
        %257 = vst.msk [vmem:[#allocation2 + $0x78] sm:$0xff] %vm241, 0.0
        %258 = vst.msk [vmem:[#allocation2 + $0x80] sm:$0xff] %vm241, 0.0
        %259 = vst.msk [vmem:[#allocation2 + $0x88] sm:$0xff] %vm241, 0.0
        %260 = vst.msk [vmem:[#allocation2 + $0x90] sm:$0xff] %vm241, 0.0
        %261 = vst.msk [vmem:[#allocation2 + $0x98] sm:$0xff] %vm241, 0.0
        %262 = vst.msk [vmem:[#allocation2 + $0xa0] sm:$0xff] %vm241, 0.0
        %263 = vst.msk [vmem:[#allocation2 + $0xa8] sm:$0xff] %vm241, 0.0
        %264 = vst.msk [vmem:[#allocation2 + $0xb0] sm:$0xff] %vm241, 0.0
        %265 = vst.msk [vmem:[#allocation2 + $0xb8] sm:$0xff] %vm241, 0.0
        %266 = vst.msk [vmem:[#allocation2 + $0xc0] sm:$0xff] %vm241, 0.0
        %267 = vst.msk [vmem:[#allocation2 + $0xc8] sm:$0xff] %vm241, 0.0
        %268 = vst.msk [vmem:[#allocation2 + $0xd0] sm:$0xff] %vm241, 0.0
        %269 = vst.msk [vmem:[#allocation2 + $0xd8] sm:$0xff] %vm241, 0.0
        %270 = vst.msk [vmem:[#allocation2 + $0xe0] sm:$0xff] %vm241, 0.0
        %271 = vst.msk [vmem:[#allocation2 + $0xe8] sm:$0xff] %vm241, 0.0
        %272 = vst.msk [vmem:[#allocation2 + $0xf0] sm:$0xff] %vm241, 0.0
        %273 = vst.msk [vmem:[#allocation2 + $0xf8] sm:$0xff] %vm241, 0.0
      $region32: #{tpu_custom_call.1} parent=27 // pred_fallthru
        _
      %v274 = vld [vmem:[%s212] sm:$0xff]
      %v275 = vld [vmem:[%s212 + $0x8] sm:$0xff]
      %v276 = vld [vmem:[%s212 + $0x10] sm:$0xff]
      %v277 = vld [vmem:[%s212 + $0x18] sm:$0xff]
      %v278 = vld [vmem:[%s212 + $0x20] sm:$0xff]
      %v279 = vld [vmem:[%s212 + $0x28] sm:$0xff]
      %v280 = vld [vmem:[%s212 + $0x30] sm:$0xff]
      %v281 = vld [vmem:[%s212 + $0x38] sm:$0xff]
      %v282 = vld [vmem:[%s212 + $0x40] sm:$0xff]
      %v283 = vld [vmem:[%s212 + $0x48] sm:$0xff]
      %v284 = vld [vmem:[%s212 + $0x50] sm:$0xff]
      %v285 = vld [vmem:[%s212 + $0x58] sm:$0xff]
      %v286 = vld [vmem:[%s212 + $0x60] sm:$0xff]
      %v287 = vld [vmem:[%s212 + $0x68] sm:$0xff]
      %v288 = vld [vmem:[%s212 + $0x70] sm:$0xff]
      %v289 = vld [vmem:[%s212 + $0x78] sm:$0xff]
      %v290 = vld [vmem:[%s212 + $0x80] sm:$0xff]
      %v291 = vld [vmem:[%s212 + $0x88] sm:$0xff]
      %v292 = vld [vmem:[%s212 + $0x90] sm:$0xff]
      %v293 = vld [vmem:[%s212 + $0x98] sm:$0xff]
      %v294 = vld [vmem:[%s212 + $0xa0] sm:$0xff]
      %v295 = vld [vmem:[%s212 + $0xa8] sm:$0xff]
      %v296 = vld [vmem:[%s212 + $0xb0] sm:$0xff]
      %v297 = vld [vmem:[%s212 + $0xb8] sm:$0xff]
      %v298 = vld [vmem:[%s212 + $0xc0] sm:$0xff]
      %v299 = vld [vmem:[%s212 + $0xc8] sm:$0xff]
      %v300 = vld [vmem:[%s212 + $0xd0] sm:$0xff]
      %v301 = vld [vmem:[%s212 + $0xd8] sm:$0xff]
      %v302 = vld [vmem:[%s212 + $0xe0] sm:$0xff]
      %v303 = vld [vmem:[%s212 + $0xe8] sm:$0xff]
      %v304 = vld [vmem:[%s212 + $0xf0] sm:$0xff]
      %v305 = vld [vmem:[%s212 + $0xf8] sm:$0xff]
      %v306 = vld [vmem:[%s224] sm:$0xff]
      %v307 = vld [vmem:[%s224 + $0x8] sm:$0xff]
      %v308 = vld [vmem:[%s224 + $0x10] sm:$0xff]
      %v309 = vld [vmem:[%s224 + $0x18] sm:$0xff]
      %v310 = vld [vmem:[%s224 + $0x20] sm:$0xff]
      %v311 = vld [vmem:[%s224 + $0x28] sm:$0xff]
      %v312 = vld [vmem:[%s224 + $0x30] sm:$0xff]
      %v313 = vld [vmem:[%s224 + $0x38] sm:$0xff]
      %v314 = vld [vmem:[%s224 + $0x40] sm:$0xff]
      %v315 = vld [vmem:[%s224 + $0x48] sm:$0xff]
      %v316 = vld [vmem:[%s224 + $0x50] sm:$0xff]
      %v317 = vld [vmem:[%s224 + $0x58] sm:$0xff]
      %v318 = vld [vmem:[%s224 + $0x60] sm:$0xff]
      %v319 = vld [vmem:[%s224 + $0x68] sm:$0xff]
      %v320 = vld [vmem:[%s224 + $0x70] sm:$0xff]
      %v321 = vld [vmem:[%s224 + $0x78] sm:$0xff]
      %v322 = vld [vmem:[%s224 + $0x80] sm:$0xff]
      %v323 = vld [vmem:[%s224 + $0x88] sm:$0xff]
      %v324 = vld [vmem:[%s224 + $0x90] sm:$0xff]
      %v325 = vld [vmem:[%s224 + $0x98] sm:$0xff]
      %v326 = vld [vmem:[%s224 + $0xa0] sm:$0xff]
      %v327 = vld [vmem:[%s224 + $0xa8] sm:$0xff]
      %v328 = vld [vmem:[%s224 + $0xb0] sm:$0xff]
      %v329 = vld [vmem:[%s224 + $0xb8] sm:$0xff]
      %v330 = vld [vmem:[%s224 + $0xc0] sm:$0xff]
      %v331 = vld [vmem:[%s224 + $0xc8] sm:$0xff]
      %v332 = vld [vmem:[%s224 + $0xd0] sm:$0xff]
      %v333 = vld [vmem:[%s224 + $0xd8] sm:$0xff]
      %v334 = vld [vmem:[%s224 + $0xe0] sm:$0xff]
      %v335 = vld [vmem:[%s224 + $0xe8] sm:$0xff]
      %v336 = vld [vmem:[%s224 + $0xf0] sm:$0xff]
      %v337 = vld [vmem:[%s224 + $0xf8] sm:$0xff]
      %370 = vrot.lane.b32.xlu0 %v306, 120
      %v371 = vpop.permute.xlu0 %370
      %372 = vrot.lane.b32.xlu0 %v307, 120
      %v373 = vpop.permute.xlu0 %372
      %374 = vrot.lane.b32.xlu0 %v308, 120
      %v375 = vpop.permute.xlu0 %374
      %376 = vrot.lane.b32.xlu0 %v309, 120
      %v377 = vpop.permute.xlu0 %376
      %378 = vrot.lane.b32.xlu0 %v310, 120
      %v379 = vpop.permute.xlu0 %378
      %380 = vrot.lane.b32.xlu0 %v311, 120
      %v381 = vpop.permute.xlu0 %380
      %382 = vrot.lane.b32.xlu0 %v312, 120
      %v383 = vpop.permute.xlu0 %382
      %384 = vrot.lane.b32.xlu0 %v313, 120
      %v385 = vpop.permute.xlu0 %384
      %386 = vrot.lane.b32.xlu0 %v314, 120
      %v387 = vpop.permute.xlu0 %386
      %388 = vrot.lane.b32.xlu0 %v315, 120
      %v389 = vpop.permute.xlu0 %388
      %390 = vrot.lane.b32.xlu0 %v316, 120
      %v391 = vpop.permute.xlu0 %390
      %392 = vrot.lane.b32.xlu0 %v317, 120
      %v393 = vpop.permute.xlu0 %392
      %394 = vrot.lane.b32.xlu0 %v318, 120
      %v395 = vpop.permute.xlu0 %394
      %396 = vrot.lane.b32.xlu0 %v319, 120
      %v397 = vpop.permute.xlu0 %396
      %398 = vrot.lane.b32.xlu0 %v320, 120
      %v399 = vpop.permute.xlu0 %398
      %400 = vrot.lane.b32.xlu0 %v321, 120
      %v401 = vpop.permute.xlu0 %400
      %402 = vrot.lane.b32.xlu0 %v322, 120
      %v403 = vpop.permute.xlu0 %402
      %404 = vrot.lane.b32.xlu0 %v323, 120
      %v405 = vpop.permute.xlu0 %404
      %406 = vrot.lane.b32.xlu0 %v324, 120
      %v407 = vpop.permute.xlu0 %406
      %408 = vrot.lane.b32.xlu0 %v325, 120
      %v409 = vpop.permute.xlu0 %408
      %410 = vrot.lane.b32.xlu0 %v326, 120
      %v411 = vpop.permute.xlu0 %410
      %412 = vrot.lane.b32.xlu0 %v327, 120
      %v413 = vpop.permute.xlu0 %412
      %414 = vrot.lane.b32.xlu0 %v328, 120
      %v415 = vpop.permute.xlu0 %414
      %416 = vrot.lane.b32.xlu0 %v329, 120
      %v417 = vpop.permute.xlu0 %416
      %418 = vrot.lane.b32.xlu0 %v330, 120
      %v419 = vpop.permute.xlu0 %418
      %420 = vrot.lane.b32.xlu0 %v331, 120
      %v421 = vpop.permute.xlu0 %420
      %422 = vrot.lane.b32.xlu0 %v332, 120
      %v423 = vpop.permute.xlu0 %422
      %424 = vrot.lane.b32.xlu0 %v333, 120
      %v425 = vpop.permute.xlu0 %424
      %426 = vrot.lane.b32.xlu0 %v334, 120
      %v427 = vpop.permute.xlu0 %426
      %428 = vrot.lane.b32.xlu0 %v335, 120
      %v429 = vpop.permute.xlu0 %428
      %430 = vrot.lane.b32.xlu0 %v336, 120
      %v431 = vpop.permute.xlu0 %430
      %432 = vrot.lane.b32.xlu0 %v337, 120
      %v433 = vpop.permute.xlu0 %432
      %vm434 = vcmask 64512
      %v436 = vsel %vm434, %v274, 0
      %v439 = vsel %vm434, %v275, 0
      %v442 = vsel %vm434, %v276, 0
      %v445 = vsel %vm434, %v277, 0
      %v448 = vsel %vm434, %v278, 0
      %v451 = vsel %vm434, %v279, 0
      %v454 = vsel %vm434, %v280, 0
      %v457 = vsel %vm434, %v281, 0
      %v460 = vsel %vm434, %v282, 0
      %v463 = vsel %vm434, %v283, 0
      %v466 = vsel %vm434, %v284, 0
      %v469 = vsel %vm434, %v285, 0
      %v472 = vsel %vm434, %v286, 0
      %v475 = vsel %vm434, %v287, 0
      %v478 = vsel %vm434, %v288, 0
      %v481 = vsel %vm434, %v289, 0
      %v484 = vsel %vm434, %v290, 0
      %v487 = vsel %vm434, %v291, 0
      %v490 = vsel %vm434, %v292, 0
      %v493 = vsel %vm434, %v293, 0
      %v496 = vsel %vm434, %v294, 0
      %v499 = vsel %vm434, %v295, 0
      %v502 = vsel %vm434, %v296, 0
      %v505 = vsel %vm434, %v297, 0
      %v508 = vsel %vm434, %v298, 0
      %v511 = vsel %vm434, %v299, 0
      %v514 = vsel %vm434, %v300, 0
      %v517 = vsel %vm434, %v301, 0
      %v520 = vsel %vm434, %v302, 0
      %v523 = vsel %vm434, %v303, 0
      %v526 = vsel %vm434, %v304, 0
      %v529 = vsel %vm434, %v305, 0
      %v531 = vsel %vm434, %v371, 0
      %v533 = vsel %vm434, %v373, 0
      %v535 = vsel %vm434, %v375, 0
      %v537 = vsel %vm434, %v377, 0
      %v539 = vsel %vm434, %v379, 0
      %v541 = vsel %vm434, %v381, 0
      %v543 = vsel %vm434, %v383, 0
      %v545 = vsel %vm434, %v385, 0
      %v547 = vsel %vm434, %v387, 0
      %v549 = vsel %vm434, %v389, 0
      %v551 = vsel %vm434, %v391, 0
      %v553 = vsel %vm434, %v393, 0
      %v555 = vsel %vm434, %v395, 0
      %v557 = vsel %vm434, %v397, 0
      %v559 = vsel %vm434, %v399, 0
      %v561 = vsel %vm434, %v401, 0
      %v563 = vsel %vm434, %v403, 0
      %v565 = vsel %vm434, %v405, 0
      %v567 = vsel %vm434, %v407, 0
      %v569 = vsel %vm434, %v409, 0
      %v571 = vsel %vm434, %v411, 0
      %v573 = vsel %vm434, %v413, 0
      %v575 = vsel %vm434, %v415, 0
      %v577 = vsel %vm434, %v417, 0
      %v579 = vsel %vm434, %v419, 0
      %v581 = vsel %vm434, %v421, 0
      %v583 = vsel %vm434, %v423, 0
      %v585 = vsel %vm434, %v425, 0
      %v587 = vsel %vm434, %v427, 0
      %v589 = vsel %vm434, %v429, 0
      %v591 = vsel %vm434, %v431, 0
      %v593 = vsel %vm434, %v433, 0
      %v595 = vand.u32 %v561, 4294901760
      %596 = vmatpush.xpose.msra.mxu0 %v595
      %v597 = vand.u32 %v559, 4294901760
      %598 = vmatpush.xpose.msra.mxu0 %v597
      %v599 = vand.u32 %v557, 4294901760
      %600 = vmatpush.xpose.msra.mxu0 %v599
      %v601 = vand.u32 %v555, 4294901760
      %602 = vmatpush.xpose.msra.mxu0 %v601
      %v603 = vand.u32 %v553, 4294901760
      %604 = vmatpush.xpose.msra.mxu0 %v603
      %v605 = vand.u32 %v551, 4294901760
      %606 = vmatpush.xpose.msra.mxu0 %v605
      %v607 = vand.u32 %v549, 4294901760
      %608 = vmatpush.xpose.msra.mxu0 %v607
      %v609 = vand.u32 %v547, 4294901760
      %610 = vmatpush.xpose.msra.mxu0 %v609
      %v611 = vand.u32 %v545, 4294901760
      %612 = vmatpush.xpose.msra.mxu0 %v611
      %v613 = vand.u32 %v543, 4294901760
      %614 = vmatpush.xpose.msra.mxu0 %v613
      %v615 = vand.u32 %v541, 4294901760
      %616 = vmatpush.xpose.msra.mxu0 %v615
      %v617 = vand.u32 %v539, 4294901760
      %618 = vmatpush.xpose.msra.mxu0 %v617
      %v619 = vand.u32 %v537, 4294901760
      %620 = vmatpush.xpose.msra.mxu0 %v619
      %v621 = vand.u32 %v535, 4294901760
      %622 = vmatpush.xpose.msra.mxu0 %v621
      %v623 = vand.u32 %v533, 4294901760
      %624 = vmatpush.xpose.msra.mxu0 %v623
      %v625 = vand.u32 %v531, 4294901760
      %626 = vmatpush.xpose.msra.mxu0 %v625
      %v627 = vand.u32 %v436, 4294901760
      %v628 = vsub.f32 %v436, %v627
      %v629 = vand.u32 %v628, 4294901760
      %v630 = vsub.f32 %v628, %v629
      %v631 = vand.u32 %v630, 4294901760
      %632 = vmatmul.f32.gmra.mxu0 %v631
      %v633 = vpop.f32.mrf.mxu0
      %v634 = vadd.f32 0.0, %v633
      %v635 = vand.u32 %v439, 4294901760
      %v636 = vsub.f32 %v439, %v635
      %v637 = vand.u32 %v636, 4294901760
      %v638 = vsub.f32 %v636, %v637
      %v639 = vand.u32 %v638, 4294901760
      %640 = vmatmul.f32.gmra.mxu0 %v639
      %v641 = vpop.f32.mrf.mxu0
      %v642 = vadd.f32 0.0, %v641
      %v643 = vand.u32 %v442, 4294901760
      %v644 = vsub.f32 %v442, %v643
      %v645 = vand.u32 %v644, 4294901760
      %v646 = vsub.f32 %v644, %v645
      %v647 = vand.u32 %v646, 4294901760
      %648 = vmatmul.f32.gmra.mxu0 %v647
      %v649 = vpop.f32.mrf.mxu0
      %v650 = vadd.f32 0.0, %v649
      %v651 = vand.u32 %v445, 4294901760
      %v652 = vsub.f32 %v445, %v651
      %v653 = vand.u32 %v652, 4294901760
      %v654 = vsub.f32 %v652, %v653
      %v655 = vand.u32 %v654, 4294901760
      %656 = vmatmul.f32.gmra.mxu0 %v655
      %v657 = vpop.f32.mrf.mxu0
      %v658 = vadd.f32 0.0, %v657
      %v659 = vand.u32 %v448, 4294901760
      %v660 = vsub.f32 %v448, %v659
      %v661 = vand.u32 %v660, 4294901760
      %v662 = vsub.f32 %v660, %v661
      %v663 = vand.u32 %v662, 4294901760
      %664 = vmatmul.f32.gmra.mxu0 %v663
      %v665 = vpop.f32.mrf.mxu0
      %v666 = vadd.f32 0.0, %v665
      %v667 = vand.u32 %v451, 4294901760
      %v668 = vsub.f32 %v451, %v667
      %v669 = vand.u32 %v668, 4294901760
      %v670 = vsub.f32 %v668, %v669
      %v671 = vand.u32 %v670, 4294901760
      %672 = vmatmul.f32.gmra.mxu0 %v671
      %v673 = vpop.f32.mrf.mxu0
      %v674 = vadd.f32 0.0, %v673
      %v675 = vand.u32 %v454, 4294901760
      %v676 = vsub.f32 %v454, %v675
      %v677 = vand.u32 %v676, 4294901760
      %v678 = vsub.f32 %v676, %v677
      %v679 = vand.u32 %v678, 4294901760
      %680 = vmatmul.f32.gmra.mxu0 %v679
      %v681 = vpop.f32.mrf.mxu0
      %v682 = vadd.f32 0.0, %v681
      %v683 = vand.u32 %v457, 4294901760
      %v684 = vsub.f32 %v457, %v683
      %v685 = vand.u32 %v684, 4294901760
      %v686 = vsub.f32 %v684, %v685
      %v687 = vand.u32 %v686, 4294901760
      %688 = vmatmul.f32.gmra.mxu0 %v687
      %v689 = vpop.f32.mrf.mxu0
      %v690 = vadd.f32 0.0, %v689
      %v691 = vand.u32 %v460, 4294901760
      %v692 = vsub.f32 %v460, %v691
      %v693 = vand.u32 %v692, 4294901760
      %v694 = vsub.f32 %v692, %v693
      %v695 = vand.u32 %v694, 4294901760
      %696 = vmatmul.f32.gmra.mxu0 %v695
      %v697 = vpop.f32.mrf.mxu0
      %v698 = vadd.f32 0.0, %v697
      %v699 = vand.u32 %v463, 4294901760
      %v700 = vsub.f32 %v463, %v699
      %v701 = vand.u32 %v700, 4294901760
      %v702 = vsub.f32 %v700, %v701
      %v703 = vand.u32 %v702, 4294901760
      %704 = vmatmul.f32.gmra.mxu0 %v703
      %v705 = vpop.f32.mrf.mxu0
      %v706 = vadd.f32 0.0, %v705
      %v707 = vand.u32 %v466, 4294901760
      %v708 = vsub.f32 %v466, %v707
      %v709 = vand.u32 %v708, 4294901760
      %v710 = vsub.f32 %v708, %v709
      %v711 = vand.u32 %v710, 4294901760
      %712 = vmatmul.f32.gmra.mxu0 %v711
      %v713 = vpop.f32.mrf.mxu0
      %v714 = vadd.f32 0.0, %v713
      %v715 = vand.u32 %v469, 4294901760
      %v716 = vsub.f32 %v469, %v715
      %v717 = vand.u32 %v716, 4294901760
      %v718 = vsub.f32 %v716, %v717
      %v719 = vand.u32 %v718, 4294901760
      %720 = vmatmul.f32.gmra.mxu0 %v719
      %v721 = vpop.f32.mrf.mxu0
      %v722 = vadd.f32 0.0, %v721
      %v723 = vand.u32 %v472, 4294901760
      %v724 = vsub.f32 %v472, %v723
      %v725 = vand.u32 %v724, 4294901760
      %v726 = vsub.f32 %v724, %v725
      %v727 = vand.u32 %v726, 4294901760
      %728 = vmatmul.f32.gmra.mxu0 %v727
      %v729 = vpop.f32.mrf.mxu0
      %v730 = vadd.f32 0.0, %v729
      %v731 = vand.u32 %v475, 4294901760
      %v732 = vsub.f32 %v475, %v731
      %v733 = vand.u32 %v732, 4294901760
      %v734 = vsub.f32 %v732, %v733
      %v735 = vand.u32 %v734, 4294901760
      %736 = vmatmul.f32.gmra.mxu0 %v735
      %v737 = vpop.f32.mrf.mxu0
      %v738 = vadd.f32 0.0, %v737
      %v739 = vand.u32 %v478, 4294901760
      %v740 = vsub.f32 %v478, %v739
      %v741 = vand.u32 %v740, 4294901760
      %v742 = vsub.f32 %v740, %v741
      %v743 = vand.u32 %v742, 4294901760
      %744 = vmatmul.f32.gmra.mxu0 %v743
      %v745 = vpop.f32.mrf.mxu0
      %v746 = vadd.f32 0.0, %v745
      %v747 = vand.u32 %v481, 4294901760
      %v748 = vsub.f32 %v481, %v747
      %v749 = vand.u32 %v748, 4294901760
      %v750 = vsub.f32 %v748, %v749
      %v751 = vand.u32 %v750, 4294901760
      %752 = vmatmul.f32.gmra.mxu0 %v751
      %v753 = vpop.f32.mrf.mxu0
      %v754 = vadd.f32 0.0, %v753
      %v755 = vand.u32 %v484, 4294901760
      %v756 = vsub.f32 %v484, %v755
      %v757 = vand.u32 %v756, 4294901760
      %v758 = vsub.f32 %v756, %v757
      %v759 = vand.u32 %v758, 4294901760
      %760 = vmatmul.f32.gmra.mxu0 %v759
      %v761 = vpop.f32.mrf.mxu0
      %v762 = vadd.f32 0.0, %v761
      %v763 = vand.u32 %v487, 4294901760
      %v764 = vsub.f32 %v487, %v763
      %v765 = vand.u32 %v764, 4294901760
      %v766 = vsub.f32 %v764, %v765
      %v767 = vand.u32 %v766, 4294901760
      %768 = vmatmul.f32.gmra.mxu0 %v767
      %v769 = vpop.f32.mrf.mxu0
      %v770 = vadd.f32 0.0, %v769
      %v771 = vand.u32 %v490, 4294901760
      %v772 = vsub.f32 %v490, %v771
      %v773 = vand.u32 %v772, 4294901760
      %v774 = vsub.f32 %v772, %v773
      %v775 = vand.u32 %v774, 4294901760
      %776 = vmatmul.f32.gmra.mxu0 %v775
      %v777 = vpop.f32.mrf.mxu0
      %v778 = vadd.f32 0.0, %v777
      %v779 = vand.u32 %v493, 4294901760
      %v780 = vsub.f32 %v493, %v779
      %v781 = vand.u32 %v780, 4294901760
      %v782 = vsub.f32 %v780, %v781
      %v783 = vand.u32 %v782, 4294901760
      %784 = vmatmul.f32.gmra.mxu0 %v783
      %v785 = vpop.f32.mrf.mxu0
      %v786 = vadd.f32 0.0, %v785
      %v787 = vand.u32 %v496, 4294901760
      %v788 = vsub.f32 %v496, %v787
      %v789 = vand.u32 %v788, 4294901760
      %v790 = vsub.f32 %v788, %v789
      %v791 = vand.u32 %v790, 4294901760
      %792 = vmatmul.f32.gmra.mxu0 %v791
      %v793 = vpop.f32.mrf.mxu0
      %v794 = vadd.f32 0.0, %v793
      %v795 = vand.u32 %v499, 4294901760
      %v796 = vsub.f32 %v499, %v795
      %v797 = vand.u32 %v796, 4294901760
      %v798 = vsub.f32 %v796, %v797
      %v799 = vand.u32 %v798, 4294901760
      %800 = vmatmul.f32.gmra.mxu0 %v799
      %v801 = vpop.f32.mrf.mxu0
      %v802 = vadd.f32 0.0, %v801
      %v803 = vand.u32 %v502, 4294901760
      %v804 = vsub.f32 %v502, %v803
      %v805 = vand.u32 %v804, 4294901760
      %v806 = vsub.f32 %v804, %v805
      %v807 = vand.u32 %v806, 4294901760
      %808 = vmatmul.f32.gmra.mxu0 %v807
      %v809 = vpop.f32.mrf.mxu0
      %v810 = vadd.f32 0.0, %v809
      %v811 = vand.u32 %v505, 4294901760
      %v812 = vsub.f32 %v505, %v811
      %v813 = vand.u32 %v812, 4294901760
      %v814 = vsub.f32 %v812, %v813
      %v815 = vand.u32 %v814, 4294901760
      %816 = vmatmul.f32.gmra.mxu0 %v815
      %v817 = vpop.f32.mrf.mxu0
      %v818 = vadd.f32 0.0, %v817
      %v819 = vand.u32 %v508, 4294901760
      %v820 = vsub.f32 %v508, %v819
      %v821 = vand.u32 %v820, 4294901760
      %v822 = vsub.f32 %v820, %v821
      %v823 = vand.u32 %v822, 4294901760
      %824 = vmatmul.f32.gmra.mxu0 %v823
      %v825 = vpop.f32.mrf.mxu0
      %v826 = vadd.f32 0.0, %v825
      %v827 = vand.u32 %v511, 4294901760
      %v828 = vsub.f32 %v511, %v827
      %v829 = vand.u32 %v828, 4294901760
      %v830 = vsub.f32 %v828, %v829
      %v831 = vand.u32 %v830, 4294901760
      %832 = vmatmul.f32.gmra.mxu0 %v831
      %v833 = vpop.f32.mrf.mxu0
      %v834 = vadd.f32 0.0, %v833
      %v835 = vand.u32 %v514, 4294901760
      %v836 = vsub.f32 %v514, %v835
      %v837 = vand.u32 %v836, 4294901760
      %v838 = vsub.f32 %v836, %v837
      %v839 = vand.u32 %v838, 4294901760
      %840 = vmatmul.f32.gmra.mxu0 %v839
      %v841 = vpop.f32.mrf.mxu0
      %v842 = vadd.f32 0.0, %v841
      %v843 = vand.u32 %v517, 4294901760
      %v844 = vsub.f32 %v517, %v843
      %v845 = vand.u32 %v844, 4294901760
      %v846 = vsub.f32 %v844, %v845
      %v847 = vand.u32 %v846, 4294901760
      %848 = vmatmul.f32.gmra.mxu0 %v847
      %v849 = vpop.f32.mrf.mxu0
      %v850 = vadd.f32 0.0, %v849
      %v851 = vand.u32 %v520, 4294901760
      %v852 = vsub.f32 %v520, %v851
      %v853 = vand.u32 %v852, 4294901760
      %v854 = vsub.f32 %v852, %v853
      %v855 = vand.u32 %v854, 4294901760
      %856 = vmatmul.f32.gmra.mxu0 %v855
      %v857 = vpop.f32.mrf.mxu0
      %v858 = vadd.f32 0.0, %v857
      %v859 = vand.u32 %v523, 4294901760
      %v860 = vsub.f32 %v523, %v859
      %v861 = vand.u32 %v860, 4294901760
      %v862 = vsub.f32 %v860, %v861
      %v863 = vand.u32 %v862, 4294901760
      %864 = vmatmul.f32.gmra.mxu0 %v863
      %v865 = vpop.f32.mrf.mxu0
      %v866 = vadd.f32 0.0, %v865
      %v867 = vand.u32 %v526, 4294901760
      %v868 = vsub.f32 %v526, %v867
      %v869 = vand.u32 %v868, 4294901760
      %v870 = vsub.f32 %v868, %v869
      %v871 = vand.u32 %v870, 4294901760
      %872 = vmatmul.f32.gmra.mxu0 %v871
      %v873 = vpop.f32.mrf.mxu0
      %v874 = vadd.f32 0.0, %v873
      %v875 = vand.u32 %v529, 4294901760
      %v876 = vsub.f32 %v529, %v875
      %v877 = vand.u32 %v876, 4294901760
      %v878 = vsub.f32 %v876, %v877
      %v879 = vand.u32 %v878, 4294901760
      %880 = vmatmul.f32.gmra.mxu0 %v879
      %v881 = vpop.f32.mrf.mxu0
      %v882 = vadd.f32 0.0, %v881
      %883 = vdwg.mxu0
      %v884 = vand.u32 %v561, 4294901760
      %v885 = vsub.f32 %v561, %v884
      %v886 = vand.u32 %v885, 4294901760
      %v887 = vsub.f32 %v885, %v886
      %v888 = vand.u32 %v887, 4294901760
      %889 = vmatpush.xpose.msra.mxu0 %v888
      %v890 = vand.u32 %v559, 4294901760
      %v891 = vsub.f32 %v559, %v890
      %v892 = vand.u32 %v891, 4294901760
      %v893 = vsub.f32 %v891, %v892
      %v894 = vand.u32 %v893, 4294901760
      %895 = vmatpush.xpose.msra.mxu0 %v894
      %v896 = vand.u32 %v557, 4294901760
      %v897 = vsub.f32 %v557, %v896
      %v898 = vand.u32 %v897, 4294901760
      %v899 = vsub.f32 %v897, %v898
      %v900 = vand.u32 %v899, 4294901760
      %901 = vmatpush.xpose.msra.mxu0 %v900
      %v902 = vand.u32 %v555, 4294901760
      %v903 = vsub.f32 %v555, %v902
      %v904 = vand.u32 %v903, 4294901760
      %v905 = vsub.f32 %v903, %v904
      %v906 = vand.u32 %v905, 4294901760
      %907 = vmatpush.xpose.msra.mxu0 %v906
      %v908 = vand.u32 %v553, 4294901760
      %v909 = vsub.f32 %v553, %v908
      %v910 = vand.u32 %v909, 4294901760
      %v911 = vsub.f32 %v909, %v910
      %v912 = vand.u32 %v911, 4294901760
      %913 = vmatpush.xpose.msra.mxu0 %v912
      %v914 = vand.u32 %v551, 4294901760
      %v915 = vsub.f32 %v551, %v914
      %v916 = vand.u32 %v915, 4294901760
      %v917 = vsub.f32 %v915, %v916
      %v918 = vand.u32 %v917, 4294901760
      %919 = vmatpush.xpose.msra.mxu0 %v918
      %v920 = vand.u32 %v549, 4294901760
      %v921 = vsub.f32 %v549, %v920
      %v922 = vand.u32 %v921, 4294901760
      %v923 = vsub.f32 %v921, %v922
      %v924 = vand.u32 %v923, 4294901760
      %925 = vmatpush.xpose.msra.mxu0 %v924
      %v926 = vand.u32 %v547, 4294901760
      %v927 = vsub.f32 %v547, %v926
      %v928 = vand.u32 %v927, 4294901760
      %v929 = vsub.f32 %v927, %v928
      %v930 = vand.u32 %v929, 4294901760
      %931 = vmatpush.xpose.msra.mxu0 %v930
      %v932 = vand.u32 %v545, 4294901760
      %v933 = vsub.f32 %v545, %v932
      %v934 = vand.u32 %v933, 4294901760
      %v935 = vsub.f32 %v933, %v934
      %v936 = vand.u32 %v935, 4294901760
      %937 = vmatpush.xpose.msra.mxu0 %v936
      %v938 = vand.u32 %v543, 4294901760
      %v939 = vsub.f32 %v543, %v938
      %v940 = vand.u32 %v939, 4294901760
      %v941 = vsub.f32 %v939, %v940
      %v942 = vand.u32 %v941, 4294901760
      %943 = vmatpush.xpose.msra.mxu0 %v942
      %v944 = vand.u32 %v541, 4294901760
      %v945 = vsub.f32 %v541, %v944
      %v946 = vand.u32 %v945, 4294901760
      %v947 = vsub.f32 %v945, %v946
      %v948 = vand.u32 %v947, 4294901760
      %949 = vmatpush.xpose.msra.mxu0 %v948
      %v950 = vand.u32 %v539, 4294901760
      %v951 = vsub.f32 %v539, %v950
      %v952 = vand.u32 %v951, 4294901760
      %v953 = vsub.f32 %v951, %v952
      %v954 = vand.u32 %v953, 4294901760
      %955 = vmatpush.xpose.msra.mxu0 %v954
      %v956 = vand.u32 %v537, 4294901760
      %v957 = vsub.f32 %v537, %v956
      %v958 = vand.u32 %v957, 4294901760
      %v959 = vsub.f32 %v957, %v958
      %v960 = vand.u32 %v959, 4294901760
      %961 = vmatpush.xpose.msra.mxu0 %v960
      %v962 = vand.u32 %v535, 4294901760
      %v963 = vsub.f32 %v535, %v962
      %v964 = vand.u32 %v963, 4294901760
      %v965 = vsub.f32 %v963, %v964
      %v966 = vand.u32 %v965, 4294901760
      %967 = vmatpush.xpose.msra.mxu0 %v966
      %v968 = vand.u32 %v533, 4294901760
      %v969 = vsub.f32 %v533, %v968
      %v970 = vand.u32 %v969, 4294901760
      %v971 = vsub.f32 %v969, %v970
      %v972 = vand.u32 %v971, 4294901760
      %973 = vmatpush.xpose.msra.mxu0 %v972
      %v974 = vand.u32 %v531, 4294901760
      %v975 = vsub.f32 %v531, %v974
      %v976 = vand.u32 %v975, 4294901760
      %v977 = vsub.f32 %v975, %v976
      %v978 = vand.u32 %v977, 4294901760
      %979 = vmatpush.xpose.msra.mxu0 %v978
      %v980 = vand.u32 %v436, 4294901760
      %981 = vmatmul.f32.gmra.mxu0 %v980
      %v982 = vpop.f32.mrf.mxu0
      %v983 = vadd.f32 %v634, %v982
      %v984 = vand.u32 %v439, 4294901760
      %985 = vmatmul.f32.gmra.mxu0 %v984
      %v986 = vpop.f32.mrf.mxu0
      %v987 = vadd.f32 %v642, %v986
      %v988 = vand.u32 %v442, 4294901760
      %989 = vmatmul.f32.gmra.mxu0 %v988
      %v990 = vpop.f32.mrf.mxu0
      %v991 = vadd.f32 %v650, %v990
      %v992 = vand.u32 %v445, 4294901760
      %993 = vmatmul.f32.gmra.mxu0 %v992
      %v994 = vpop.f32.mrf.mxu0
      %v995 = vadd.f32 %v658, %v994
      %v996 = vand.u32 %v448, 4294901760
      %997 = vmatmul.f32.gmra.mxu0 %v996
      %v998 = vpop.f32.mrf.mxu0
      %v999 = vadd.f32 %v666, %v998
      %v1000 = vand.u32 %v451, 4294901760
      %1001 = vmatmul.f32.gmra.mxu0 %v1000
      %v1002 = vpop.f32.mrf.mxu0
      %v1003 = vadd.f32 %v674, %v1002
      %v1004 = vand.u32 %v454, 4294901760
      %1005 = vmatmul.f32.gmra.mxu0 %v1004
      %v1006 = vpop.f32.mrf.mxu0
      %v1007 = vadd.f32 %v682, %v1006
      %v1008 = vand.u32 %v457, 4294901760
      %1009 = vmatmul.f32.gmra.mxu0 %v1008
      %v1010 = vpop.f32.mrf.mxu0
      %v1011 = vadd.f32 %v690, %v1010
      %v1012 = vand.u32 %v460, 4294901760
      %1013 = vmatmul.f32.gmra.mxu0 %v1012
      %v1014 = vpop.f32.mrf.mxu0
      %v1015 = vadd.f32 %v698, %v1014
      %v1016 = vand.u32 %v463, 4294901760
      %1017 = vmatmul.f32.gmra.mxu0 %v1016
      %v1018 = vpop.f32.mrf.mxu0
      %v1019 = vadd.f32 %v706, %v1018
      %v1020 = vand.u32 %v466, 4294901760
      %1021 = vmatmul.f32.gmra.mxu0 %v1020
      %v1022 = vpop.f32.mrf.mxu0
      %v1023 = vadd.f32 %v714, %v1022
      %v1024 = vand.u32 %v469, 4294901760
      %1025 = vmatmul.f32.gmra.mxu0 %v1024
      %v1026 = vpop.f32.mrf.mxu0
      %v1027 = vadd.f32 %v722, %v1026
      %v1028 = vand.u32 %v472, 4294901760
      %1029 = vmatmul.f32.gmra.mxu0 %v1028
      %v1030 = vpop.f32.mrf.mxu0
      %v1031 = vadd.f32 %v730, %v1030
      %v1032 = vand.u32 %v475, 4294901760
      %1033 = vmatmul.f32.gmra.mxu0 %v1032
      %v1034 = vpop.f32.mrf.mxu0
      %v1035 = vadd.f32 %v738, %v1034
      %v1036 = vand.u32 %v478, 4294901760
      %1037 = vmatmul.f32.gmra.mxu0 %v1036
      %v1038 = vpop.f32.mrf.mxu0
      %v1039 = vadd.f32 %v746, %v1038
      %v1040 = vand.u32 %v481, 4294901760
      %1041 = vmatmul.f32.gmra.mxu0 %v1040
      %v1042 = vpop.f32.mrf.mxu0
      %v1043 = vadd.f32 %v754, %v1042
      %v1044 = vand.u32 %v484, 4294901760
      %1045 = vmatmul.f32.gmra.mxu0 %v1044
      %v1046 = vpop.f32.mrf.mxu0
      %v1047 = vadd.f32 %v762, %v1046
      %v1048 = vand.u32 %v487, 4294901760
      %1049 = vmatmul.f32.gmra.mxu0 %v1048
      %v1050 = vpop.f32.mrf.mxu0
      %v1051 = vadd.f32 %v770, %v1050
      %v1052 = vand.u32 %v490, 4294901760
      %1053 = vmatmul.f32.gmra.mxu0 %v1052
      %v1054 = vpop.f32.mrf.mxu0
      %v1055 = vadd.f32 %v778, %v1054
      %v1056 = vand.u32 %v493, 4294901760
      %1057 = vmatmul.f32.gmra.mxu0 %v1056
      %v1058 = vpop.f32.mrf.mxu0
      %v1059 = vadd.f32 %v786, %v1058
      %v1060 = vand.u32 %v496, 4294901760
      %1061 = vmatmul.f32.gmra.mxu0 %v1060
      %v1062 = vpop.f32.mrf.mxu0
      %v1063 = vadd.f32 %v794, %v1062
      %v1064 = vand.u32 %v499, 4294901760
      %1065 = vmatmul.f32.gmra.mxu0 %v1064
      %v1066 = vpop.f32.mrf.mxu0
      %v1067 = vadd.f32 %v802, %v1066
      %v1068 = vand.u32 %v502, 4294901760
      %1069 = vmatmul.f32.gmra.mxu0 %v1068
      %v1070 = vpop.f32.mrf.mxu0
      %v1071 = vadd.f32 %v810, %v1070
      %v1072 = vand.u32 %v505, 4294901760
      %1073 = vmatmul.f32.gmra.mxu0 %v1072
      %v1074 = vpop.f32.mrf.mxu0
      %v1075 = vadd.f32 %v818, %v1074
      %v1076 = vand.u32 %v508, 4294901760
      %1077 = vmatmul.f32.gmra.mxu0 %v1076
      %v1078 = vpop.f32.mrf.mxu0
      %v1079 = vadd.f32 %v826, %v1078
      %v1080 = vand.u32 %v511, 4294901760
      %1081 = vmatmul.f32.gmra.mxu0 %v1080
      %v1082 = vpop.f32.mrf.mxu0
      %v1083 = vadd.f32 %v834, %v1082
      %v1084 = vand.u32 %v514, 4294901760
      %1085 = vmatmul.f32.gmra.mxu0 %v1084
      %v1086 = vpop.f32.mrf.mxu0
      %v1087 = vadd.f32 %v842, %v1086
      %v1088 = vand.u32 %v517, 4294901760
      %1089 = vmatmul.f32.gmra.mxu0 %v1088
      %v1090 = vpop.f32.mrf.mxu0
      %v1091 = vadd.f32 %v850, %v1090
      %v1092 = vand.u32 %v520, 4294901760
      %1093 = vmatmul.f32.gmra.mxu0 %v1092
      %v1094 = vpop.f32.mrf.mxu0
      %v1095 = vadd.f32 %v858, %v1094
      %v1096 = vand.u32 %v523, 4294901760
      %1097 = vmatmul.f32.gmra.mxu0 %v1096
      %v1098 = vpop.f32.mrf.mxu0
      %v1099 = vadd.f32 %v866, %v1098
      %v1100 = vand.u32 %v526, 4294901760
      %1101 = vmatmul.f32.gmra.mxu0 %v1100
      %v1102 = vpop.f32.mrf.mxu0
      %v1103 = vadd.f32 %v874, %v1102
      %v1104 = vand.u32 %v529, 4294901760
      %1105 = vmatmul.f32.gmra.mxu0 %v1104
      %v1106 = vpop.f32.mrf.mxu0
      %v1107 = vadd.f32 %v882, %v1106
      %1108 = vdwg.mxu0
      %v1109 = vand.u32 %v561, 4294901760
      %v1110 = vsub.f32 %v561, %v1109
      %1111 = vmatpush.xpose.msra.mxu0 %v1110
      %v1112 = vand.u32 %v559, 4294901760
      %v1113 = vsub.f32 %v559, %v1112
      %1114 = vmatpush.xpose.msra.mxu0 %v1113
      %v1115 = vand.u32 %v557, 4294901760
      %v1116 = vsub.f32 %v557, %v1115
      %1117 = vmatpush.xpose.msra.mxu0 %v1116
      %v1118 = vand.u32 %v555, 4294901760
      %v1119 = vsub.f32 %v555, %v1118
      %1120 = vmatpush.xpose.msra.mxu0 %v1119
      %v1121 = vand.u32 %v553, 4294901760
      %v1122 = vsub.f32 %v553, %v1121
      %1123 = vmatpush.xpose.msra.mxu0 %v1122
      %v1124 = vand.u32 %v551, 4294901760
      %v1125 = vsub.f32 %v551, %v1124
      %1126 = vmatpush.xpose.msra.mxu0 %v1125
      %v1127 = vand.u32 %v549, 4294901760
      %v1128 = vsub.f32 %v549, %v1127
      %1129 = vmatpush.xpose.msra.mxu0 %v1128
      %v1130 = vand.u32 %v547, 4294901760
      %v1131 = vsub.f32 %v547, %v1130
      %1132 = vmatpush.xpose.msra.mxu0 %v1131
      %v1133 = vand.u32 %v545, 4294901760
      %v1134 = vsub.f32 %v545, %v1133
      %1135 = vmatpush.xpose.msra.mxu0 %v1134
      %v1136 = vand.u32 %v543, 4294901760
      %v1137 = vsub.f32 %v543, %v1136
      %1138 = vmatpush.xpose.msra.mxu0 %v1137
      %v1139 = vand.u32 %v541, 4294901760
      %v1140 = vsub.f32 %v541, %v1139
      %1141 = vmatpush.xpose.msra.mxu0 %v1140
      %v1142 = vand.u32 %v539, 4294901760
      %v1143 = vsub.f32 %v539, %v1142
      %1144 = vmatpush.xpose.msra.mxu0 %v1143
      %v1145 = vand.u32 %v537, 4294901760
      %v1146 = vsub.f32 %v537, %v1145
      %1147 = vmatpush.xpose.msra.mxu0 %v1146
      %v1148 = vand.u32 %v535, 4294901760
      %v1149 = vsub.f32 %v535, %v1148
      %1150 = vmatpush.xpose.msra.mxu0 %v1149
      %v1151 = vand.u32 %v533, 4294901760
      %v1152 = vsub.f32 %v533, %v1151
      %1153 = vmatpush.xpose.msra.mxu0 %v1152
      %v1154 = vand.u32 %v531, 4294901760
      %v1155 = vsub.f32 %v531, %v1154
      %1156 = vmatpush.xpose.msra.mxu0 %v1155
      %v1157 = vand.u32 %v436, 4294901760
      %v1158 = vsub.f32 %v436, %v1157
      %1159 = vmatmul.f32.gmra.mxu0 %v1158
      %v1160 = vpop.f32.mrf.mxu0
      %v1161 = vadd.f32 %v983, %v1160
      %v1162 = vand.u32 %v439, 4294901760
      %v1163 = vsub.f32 %v439, %v1162
      %1164 = vmatmul.f32.gmra.mxu0 %v1163
      %v1165 = vpop.f32.mrf.mxu0
      %v1166 = vadd.f32 %v987, %v1165
      %v1167 = vand.u32 %v442, 4294901760
      %v1168 = vsub.f32 %v442, %v1167
      %1169 = vmatmul.f32.gmra.mxu0 %v1168
      %v1170 = vpop.f32.mrf.mxu0
      %v1171 = vadd.f32 %v991, %v1170
      %v1172 = vand.u32 %v445, 4294901760
      %v1173 = vsub.f32 %v445, %v1172
      %1174 = vmatmul.f32.gmra.mxu0 %v1173
      %v1175 = vpop.f32.mrf.mxu0
      %v1176 = vadd.f32 %v995, %v1175
      %v1177 = vand.u32 %v448, 4294901760
      %v1178 = vsub.f32 %v448, %v1177
      %1179 = vmatmul.f32.gmra.mxu0 %v1178
      %v1180 = vpop.f32.mrf.mxu0
      %v1181 = vadd.f32 %v999, %v1180
      %v1182 = vand.u32 %v451, 4294901760
      %v1183 = vsub.f32 %v451, %v1182
      %1184 = vmatmul.f32.gmra.mxu0 %v1183
      %v1185 = vpop.f32.mrf.mxu0
      %v1186 = vadd.f32 %v1003, %v1185
      %v1187 = vand.u32 %v454, 4294901760
      %v1188 = vsub.f32 %v454, %v1187
      %1189 = vmatmul.f32.gmra.mxu0 %v1188
      %v1190 = vpop.f32.mrf.mxu0
      %v1191 = vadd.f32 %v1007, %v1190
      %v1192 = vand.u32 %v457, 4294901760
      %v1193 = vsub.f32 %v457, %v1192
      %1194 = vmatmul.f32.gmra.mxu0 %v1193
      %v1195 = vpop.f32.mrf.mxu0
      %v1196 = vadd.f32 %v1011, %v1195
      %v1197 = vand.u32 %v460, 4294901760
      %v1198 = vsub.f32 %v460, %v1197
      %1199 = vmatmul.f32.gmra.mxu0 %v1198
      %v1200 = vpop.f32.mrf.mxu0
      %v1201 = vadd.f32 %v1015, %v1200
      %v1202 = vand.u32 %v463, 4294901760
      %v1203 = vsub.f32 %v463, %v1202
      %1204 = vmatmul.f32.gmra.mxu0 %v1203
      %v1205 = vpop.f32.mrf.mxu0
      %v1206 = vadd.f32 %v1019, %v1205
      %v1207 = vand.u32 %v466, 4294901760
      %v1208 = vsub.f32 %v466, %v1207
      %1209 = vmatmul.f32.gmra.mxu0 %v1208
      %v1210 = vpop.f32.mrf.mxu0
      %v1211 = vadd.f32 %v1023, %v1210
      %v1212 = vand.u32 %v469, 4294901760
      %v1213 = vsub.f32 %v469, %v1212
      %1214 = vmatmul.f32.gmra.mxu0 %v1213
      %v1215 = vpop.f32.mrf.mxu0
      %v1216 = vadd.f32 %v1027, %v1215
      %v1217 = vand.u32 %v472, 4294901760
      %v1218 = vsub.f32 %v472, %v1217
      %1219 = vmatmul.f32.gmra.mxu0 %v1218
      %v1220 = vpop.f32.mrf.mxu0
      %v1221 = vadd.f32 %v1031, %v1220
      %v1222 = vand.u32 %v475, 4294901760
      %v1223 = vsub.f32 %v475, %v1222
      %1224 = vmatmul.f32.gmra.mxu0 %v1223
      %v1225 = vpop.f32.mrf.mxu0
      %v1226 = vadd.f32 %v1035, %v1225
      %v1227 = vand.u32 %v478, 4294901760
      %v1228 = vsub.f32 %v478, %v1227
      %1229 = vmatmul.f32.gmra.mxu0 %v1228
      %v1230 = vpop.f32.mrf.mxu0
      %v1231 = vadd.f32 %v1039, %v1230
      %v1232 = vand.u32 %v481, 4294901760
      %v1233 = vsub.f32 %v481, %v1232
      %1234 = vmatmul.f32.gmra.mxu0 %v1233
      %v1235 = vpop.f32.mrf.mxu0
      %v1236 = vadd.f32 %v1043, %v1235
      %v1237 = vand.u32 %v484, 4294901760
      %v1238 = vsub.f32 %v484, %v1237
      %1239 = vmatmul.f32.gmra.mxu0 %v1238
      %v1240 = vpop.f32.mrf.mxu0
      %v1241 = vadd.f32 %v1047, %v1240
      %v1242 = vand.u32 %v487, 4294901760
      %v1243 = vsub.f32 %v487, %v1242
      %1244 = vmatmul.f32.gmra.mxu0 %v1243
      %v1245 = vpop.f32.mrf.mxu0
      %v1246 = vadd.f32 %v1051, %v1245
      %v1247 = vand.u32 %v490, 4294901760
      %v1248 = vsub.f32 %v490, %v1247
      %1249 = vmatmul.f32.gmra.mxu0 %v1248
      %v1250 = vpop.f32.mrf.mxu0
      %v1251 = vadd.f32 %v1055, %v1250
      %v1252 = vand.u32 %v493, 4294901760
      %v1253 = vsub.f32 %v493, %v1252
      %1254 = vmatmul.f32.gmra.mxu0 %v1253
      %v1255 = vpop.f32.mrf.mxu0
      %v1256 = vadd.f32 %v1059, %v1255
      %v1257 = vand.u32 %v496, 4294901760
      %v1258 = vsub.f32 %v496, %v1257
      %1259 = vmatmul.f32.gmra.mxu0 %v1258
      %v1260 = vpop.f32.mrf.mxu0
      %v1261 = vadd.f32 %v1063, %v1260
      %v1262 = vand.u32 %v499, 4294901760
      %v1263 = vsub.f32 %v499, %v1262
      %1264 = vmatmul.f32.gmra.mxu0 %v1263
      %v1265 = vpop.f32.mrf.mxu0
      %v1266 = vadd.f32 %v1067, %v1265
      %v1267 = vand.u32 %v502, 4294901760
      %v1268 = vsub.f32 %v502, %v1267
      %1269 = vmatmul.f32.gmra.mxu0 %v1268
      %v1270 = vpop.f32.mrf.mxu0
      %v1271 = vadd.f32 %v1071, %v1270
      %v1272 = vand.u32 %v505, 4294901760
      %v1273 = vsub.f32 %v505, %v1272
      %1274 = vmatmul.f32.gmra.mxu0 %v1273
      %v1275 = vpop.f32.mrf.mxu0
      %v1276 = vadd.f32 %v1075, %v1275
      %v1277 = vand.u32 %v508, 4294901760
      %v1278 = vsub.f32 %v508, %v1277
      %1279 = vmatmul.f32.gmra.mxu0 %v1278
      %v1280 = vpop.f32.mrf.mxu0
      %v1281 = vadd.f32 %v1079, %v1280
      %v1282 = vand.u32 %v511, 4294901760
      %v1283 = vsub.f32 %v511, %v1282
      %1284 = vmatmul.f32.gmra.mxu0 %v1283
      %v1285 = vpop.f32.mrf.mxu0
      %v1286 = vadd.f32 %v1083, %v1285
      %v1287 = vand.u32 %v514, 4294901760
      %v1288 = vsub.f32 %v514, %v1287
      %1289 = vmatmul.f32.gmra.mxu0 %v1288
      %v1290 = vpop.f32.mrf.mxu0
      %v1291 = vadd.f32 %v1087, %v1290
      %v1292 = vand.u32 %v517, 4294901760
      %v1293 = vsub.f32 %v517, %v1292
      %1294 = vmatmul.f32.gmra.mxu0 %v1293
      %v1295 = vpop.f32.mrf.mxu0
      %v1296 = vadd.f32 %v1091, %v1295
      %v1297 = vand.u32 %v520, 4294901760
      %v1298 = vsub.f32 %v520, %v1297
      %1299 = vmatmul.f32.gmra.mxu0 %v1298
      %v1300 = vpop.f32.mrf.mxu0
      %v1301 = vadd.f32 %v1095, %v1300
      %v1302 = vand.u32 %v523, 4294901760
      %v1303 = vsub.f32 %v523, %v1302
      %1304 = vmatmul.f32.gmra.mxu0 %v1303
      %v1305 = vpop.f32.mrf.mxu0
      %v1306 = vadd.f32 %v1099, %v1305
      %v1307 = vand.u32 %v526, 4294901760
      %v1308 = vsub.f32 %v526, %v1307
      %1309 = vmatmul.f32.gmra.mxu0 %v1308
      %v1310 = vpop.f32.mrf.mxu0
      %v1311 = vadd.f32 %v1103, %v1310
      %v1312 = vand.u32 %v529, 4294901760
      %v1313 = vsub.f32 %v529, %v1312
      %1314 = vmatmul.f32.gmra.mxu0 %v1313
      %v1315 = vpop.f32.mrf.mxu0
      %v1316 = vadd.f32 %v1107, %v1315
      %1317 = vdwg.mxu0
      %v1318 = vand.u32 %v561, 4294901760
      %1319 = vmatpush.xpose.msra.mxu0 %v1318
      %v1320 = vand.u32 %v559, 4294901760
      %1321 = vmatpush.xpose.msra.mxu0 %v1320
      %v1322 = vand.u32 %v557, 4294901760
      %1323 = vmatpush.xpose.msra.mxu0 %v1322
      %v1324 = vand.u32 %v555, 4294901760
      %1325 = vmatpush.xpose.msra.mxu0 %v1324
      %v1326 = vand.u32 %v553, 4294901760
      %1327 = vmatpush.xpose.msra.mxu0 %v1326
      %v1328 = vand.u32 %v551, 4294901760
      %1329 = vmatpush.xpose.msra.mxu0 %v1328
      %v1330 = vand.u32 %v549, 4294901760
      %1331 = vmatpush.xpose.msra.mxu0 %v1330
      %v1332 = vand.u32 %v547, 4294901760
      %1333 = vmatpush.xpose.msra.mxu0 %v1332
      %v1334 = vand.u32 %v545, 4294901760
      %1335 = vmatpush.xpose.msra.mxu0 %v1334
      %v1336 = vand.u32 %v543, 4294901760
      %1337 = vmatpush.xpose.msra.mxu0 %v1336
      %v1338 = vand.u32 %v541, 4294901760
      %1339 = vmatpush.xpose.msra.mxu0 %v1338
      %v1340 = vand.u32 %v539, 4294901760
      %1341 = vmatpush.xpose.msra.mxu0 %v1340
      %v1342 = vand.u32 %v537, 4294901760
      %1343 = vmatpush.xpose.msra.mxu0 %v1342
      %v1344 = vand.u32 %v535, 4294901760
      %1345 = vmatpush.xpose.msra.mxu0 %v1344
      %v1346 = vand.u32 %v533, 4294901760
      %1347 = vmatpush.xpose.msra.mxu0 %v1346
      %v1348 = vand.u32 %v531, 4294901760
      %1349 = vmatpush.xpose.msra.mxu0 %v1348
      %v1350 = vand.u32 %v436, 4294901760
      %v1351 = vsub.f32 %v436, %v1350
      %v1352 = vand.u32 %v1351, 4294901760
      %1353 = vmatmul.f32.gmra.mxu0 %v1352
      %v1354 = vpop.f32.mrf.mxu0
      %v1355 = vadd.f32 %v1161, %v1354
      %v1356 = vand.u32 %v439, 4294901760
      %v1357 = vsub.f32 %v439, %v1356
      %v1358 = vand.u32 %v1357, 4294901760
      %1359 = vmatmul.f32.gmra.mxu0 %v1358
      %v1360 = vpop.f32.mrf.mxu0
      %v1361 = vadd.f32 %v1166, %v1360
      %v1362 = vand.u32 %v442, 4294901760
      %v1363 = vsub.f32 %v442, %v1362
      %v1364 = vand.u32 %v1363, 4294901760
      %1365 = vmatmul.f32.gmra.mxu0 %v1364
      %v1366 = vpop.f32.mrf.mxu0
      %v1367 = vadd.f32 %v1171, %v1366
      %v1368 = vand.u32 %v445, 4294901760
      %v1369 = vsub.f32 %v445, %v1368
      %v1370 = vand.u32 %v1369, 4294901760
      %1371 = vmatmul.f32.gmra.mxu0 %v1370
      %v1372 = vpop.f32.mrf.mxu0
      %v1373 = vadd.f32 %v1176, %v1372
      %v1374 = vand.u32 %v448, 4294901760
      %v1375 = vsub.f32 %v448, %v1374
      %v1376 = vand.u32 %v1375, 4294901760
      %1377 = vmatmul.f32.gmra.mxu0 %v1376
      %v1378 = vpop.f32.mrf.mxu0
      %v1379 = vadd.f32 %v1181, %v1378
      %v1380 = vand.u32 %v451, 4294901760
      %v1381 = vsub.f32 %v451, %v1380
      %v1382 = vand.u32 %v1381, 4294901760
      %1383 = vmatmul.f32.gmra.mxu0 %v1382
      %v1384 = vpop.f32.mrf.mxu0
      %v1385 = vadd.f32 %v1186, %v1384
      %v1386 = vand.u32 %v454, 4294901760
      %v1387 = vsub.f32 %v454, %v1386
      %v1388 = vand.u32 %v1387, 4294901760
      %1389 = vmatmul.f32.gmra.mxu0 %v1388
      %v1390 = vpop.f32.mrf.mxu0
      %v1391 = vadd.f32 %v1191, %v1390
      %v1392 = vand.u32 %v457, 4294901760
      %v1393 = vsub.f32 %v457, %v1392
      %v1394 = vand.u32 %v1393, 4294901760
      %1395 = vmatmul.f32.gmra.mxu0 %v1394
      %v1396 = vpop.f32.mrf.mxu0
      %v1397 = vadd.f32 %v1196, %v1396
      %v1398 = vand.u32 %v460, 4294901760
      %v1399 = vsub.f32 %v460, %v1398
      %v1400 = vand.u32 %v1399, 4294901760
      %1401 = vmatmul.f32.gmra.mxu0 %v1400
      %v1402 = vpop.f32.mrf.mxu0
      %v1403 = vadd.f32 %v1201, %v1402
      %v1404 = vand.u32 %v463, 4294901760
      %v1405 = vsub.f32 %v463, %v1404
      %v1406 = vand.u32 %v1405, 4294901760
      %1407 = vmatmul.f32.gmra.mxu0 %v1406
      %v1408 = vpop.f32.mrf.mxu0
      %v1409 = vadd.f32 %v1206, %v1408
      %v1410 = vand.u32 %v466, 4294901760
      %v1411 = vsub.f32 %v466, %v1410
      %v1412 = vand.u32 %v1411, 4294901760
      %1413 = vmatmul.f32.gmra.mxu0 %v1412
      %v1414 = vpop.f32.mrf.mxu0
      %v1415 = vadd.f32 %v1211, %v1414
      %v1416 = vand.u32 %v469, 4294901760
      %v1417 = vsub.f32 %v469, %v1416
      %v1418 = vand.u32 %v1417, 4294901760
      %1419 = vmatmul.f32.gmra.mxu0 %v1418
      %v1420 = vpop.f32.mrf.mxu0
      %v1421 = vadd.f32 %v1216, %v1420
      %v1422 = vand.u32 %v472, 4294901760
      %v1423 = vsub.f32 %v472, %v1422
      %v1424 = vand.u32 %v1423, 4294901760
      %1425 = vmatmul.f32.gmra.mxu0 %v1424
      %v1426 = vpop.f32.mrf.mxu0
      %v1427 = vadd.f32 %v1221, %v1426
      %v1428 = vand.u32 %v475, 4294901760
      %v1429 = vsub.f32 %v475, %v1428
      %v1430 = vand.u32 %v1429, 4294901760
      %1431 = vmatmul.f32.gmra.mxu0 %v1430
      %v1432 = vpop.f32.mrf.mxu0
      %v1433 = vadd.f32 %v1226, %v1432
      %v1434 = vand.u32 %v478, 4294901760
      %v1435 = vsub.f32 %v478, %v1434
      %v1436 = vand.u32 %v1435, 4294901760
      %1437 = vmatmul.f32.gmra.mxu0 %v1436
      %v1438 = vpop.f32.mrf.mxu0
      %v1439 = vadd.f32 %v1231, %v1438
      %v1440 = vand.u32 %v481, 4294901760
      %v1441 = vsub.f32 %v481, %v1440
      %v1442 = vand.u32 %v1441, 4294901760
      %1443 = vmatmul.f32.gmra.mxu0 %v1442
      %v1444 = vpop.f32.mrf.mxu0
      %v1445 = vadd.f32 %v1236, %v1444
      %v1446 = vand.u32 %v484, 4294901760
      %v1447 = vsub.f32 %v484, %v1446
      %v1448 = vand.u32 %v1447, 4294901760
      %1449 = vmatmul.f32.gmra.mxu0 %v1448
      %v1450 = vpop.f32.mrf.mxu0
      %v1451 = vadd.f32 %v1241, %v1450
      %v1452 = vand.u32 %v487, 4294901760
      %v1453 = vsub.f32 %v487, %v1452
      %v1454 = vand.u32 %v1453, 4294901760
      %1455 = vmatmul.f32.gmra.mxu0 %v1454
      %v1456 = vpop.f32.mrf.mxu0
      %v1457 = vadd.f32 %v1246, %v1456
      %v1458 = vand.u32 %v490, 4294901760
      %v1459 = vsub.f32 %v490, %v1458
      %v1460 = vand.u32 %v1459, 4294901760
      %1461 = vmatmul.f32.gmra.mxu0 %v1460
      %v1462 = vpop.f32.mrf.mxu0
      %v1463 = vadd.f32 %v1251, %v1462
      %v1464 = vand.u32 %v493, 4294901760
      %v1465 = vsub.f32 %v493, %v1464
      %v1466 = vand.u32 %v1465, 4294901760
      %1467 = vmatmul.f32.gmra.mxu0 %v1466
      %v1468 = vpop.f32.mrf.mxu0
      %v1469 = vadd.f32 %v1256, %v1468
      %v1470 = vand.u32 %v496, 4294901760
      %v1471 = vsub.f32 %v496, %v1470
      %v1472 = vand.u32 %v1471, 4294901760
      %1473 = vmatmul.f32.gmra.mxu0 %v1472
      %v1474 = vpop.f32.mrf.mxu0
      %v1475 = vadd.f32 %v1261, %v1474
      %v1476 = vand.u32 %v499, 4294901760
      %v1477 = vsub.f32 %v499, %v1476
      %v1478 = vand.u32 %v1477, 4294901760
      %1479 = vmatmul.f32.gmra.mxu0 %v1478
      %v1480 = vpop.f32.mrf.mxu0
      %v1481 = vadd.f32 %v1266, %v1480
      %v1482 = vand.u32 %v502, 4294901760
      %v1483 = vsub.f32 %v502, %v1482
      %v1484 = vand.u32 %v1483, 4294901760
      %1485 = vmatmul.f32.gmra.mxu0 %v1484
      %v1486 = vpop.f32.mrf.mxu0
      %v1487 = vadd.f32 %v1271, %v1486
      %v1488 = vand.u32 %v505, 4294901760
      %v1489 = vsub.f32 %v505, %v1488
      %v1490 = vand.u32 %v1489, 4294901760
      %1491 = vmatmul.f32.gmra.mxu0 %v1490
      %v1492 = vpop.f32.mrf.mxu0
      %v1493 = vadd.f32 %v1276, %v1492
      %v1494 = vand.u32 %v508, 4294901760
      %v1495 = vsub.f32 %v508, %v1494
      %v1496 = vand.u32 %v1495, 4294901760
      %1497 = vmatmul.f32.gmra.mxu0 %v1496
      %v1498 = vpop.f32.mrf.mxu0
      %v1499 = vadd.f32 %v1281, %v1498
      %v1500 = vand.u32 %v511, 4294901760
      %v1501 = vsub.f32 %v511, %v1500
      %v1502 = vand.u32 %v1501, 4294901760
      %1503 = vmatmul.f32.gmra.mxu0 %v1502
      %v1504 = vpop.f32.mrf.mxu0
      %v1505 = vadd.f32 %v1286, %v1504
      %v1506 = vand.u32 %v514, 4294901760
      %v1507 = vsub.f32 %v514, %v1506
      %v1508 = vand.u32 %v1507, 4294901760
      %1509 = vmatmul.f32.gmra.mxu0 %v1508
      %v1510 = vpop.f32.mrf.mxu0
      %v1511 = vadd.f32 %v1291, %v1510
      %v1512 = vand.u32 %v517, 4294901760
      %v1513 = vsub.f32 %v517, %v1512
      %v1514 = vand.u32 %v1513, 4294901760
      %1515 = vmatmul.f32.gmra.mxu0 %v1514
      %v1516 = vpop.f32.mrf.mxu0
      %v1517 = vadd.f32 %v1296, %v1516
      %v1518 = vand.u32 %v520, 4294901760
      %v1519 = vsub.f32 %v520, %v1518
      %v1520 = vand.u32 %v1519, 4294901760
      %1521 = vmatmul.f32.gmra.mxu0 %v1520
      %v1522 = vpop.f32.mrf.mxu0
      %v1523 = vadd.f32 %v1301, %v1522
      %v1524 = vand.u32 %v523, 4294901760
      %v1525 = vsub.f32 %v523, %v1524
      %v1526 = vand.u32 %v1525, 4294901760
      %1527 = vmatmul.f32.gmra.mxu0 %v1526
      %v1528 = vpop.f32.mrf.mxu0
      %v1529 = vadd.f32 %v1306, %v1528
      %v1530 = vand.u32 %v526, 4294901760
      %v1531 = vsub.f32 %v526, %v1530
      %v1532 = vand.u32 %v1531, 4294901760
      %1533 = vmatmul.f32.gmra.mxu0 %v1532
      %v1534 = vpop.f32.mrf.mxu0
      %v1535 = vadd.f32 %v1311, %v1534
      %v1536 = vand.u32 %v529, 4294901760
      %v1537 = vsub.f32 %v529, %v1536
      %v1538 = vand.u32 %v1537, 4294901760
      %1539 = vmatmul.f32.gmra.mxu0 %v1538
      %v1540 = vpop.f32.mrf.mxu0
      %v1541 = vadd.f32 %v1316, %v1540
      %1542 = vdwg.mxu0
      %v1543 = vand.u32 %v561, 4294901760
      %v1544 = vsub.f32 %v561, %v1543
      %v1545 = vand.u32 %v1544, 4294901760
      %1546 = vmatpush.xpose.msra.mxu0 %v1545
      %v1547 = vand.u32 %v559, 4294901760
      %v1548 = vsub.f32 %v559, %v1547
      %v1549 = vand.u32 %v1548, 4294901760
      %1550 = vmatpush.xpose.msra.mxu0 %v1549
      %v1551 = vand.u32 %v557, 4294901760
      %v1552 = vsub.f32 %v557, %v1551
      %v1553 = vand.u32 %v1552, 4294901760
      %1554 = vmatpush.xpose.msra.mxu0 %v1553
      %v1555 = vand.u32 %v555, 4294901760
      %v1556 = vsub.f32 %v555, %v1555
      %v1557 = vand.u32 %v1556, 4294901760
      %1558 = vmatpush.xpose.msra.mxu0 %v1557
      %v1559 = vand.u32 %v553, 4294901760
      %v1560 = vsub.f32 %v553, %v1559
      %v1561 = vand.u32 %v1560, 4294901760
      %1562 = vmatpush.xpose.msra.mxu0 %v1561
      %v1563 = vand.u32 %v551, 4294901760
      %v1564 = vsub.f32 %v551, %v1563
      %v1565 = vand.u32 %v1564, 4294901760
      %1566 = vmatpush.xpose.msra.mxu0 %v1565
      %v1567 = vand.u32 %v549, 4294901760
      %v1568 = vsub.f32 %v549, %v1567
      %v1569 = vand.u32 %v1568, 4294901760
      %1570 = vmatpush.xpose.msra.mxu0 %v1569
      %v1571 = vand.u32 %v547, 4294901760
      %v1572 = vsub.f32 %v547, %v1571
      %v1573 = vand.u32 %v1572, 4294901760
      %1574 = vmatpush.xpose.msra.mxu0 %v1573
      %v1575 = vand.u32 %v545, 4294901760
      %v1576 = vsub.f32 %v545, %v1575
      %v1577 = vand.u32 %v1576, 4294901760
      %1578 = vmatpush.xpose.msra.mxu0 %v1577
      %v1579 = vand.u32 %v543, 4294901760
      %v1580 = vsub.f32 %v543, %v1579
      %v1581 = vand.u32 %v1580, 4294901760
      %1582 = vmatpush.xpose.msra.mxu0 %v1581
      %v1583 = vand.u32 %v541, 4294901760
      %v1584 = vsub.f32 %v541, %v1583
      %v1585 = vand.u32 %v1584, 4294901760
      %1586 = vmatpush.xpose.msra.mxu0 %v1585
      %v1587 = vand.u32 %v539, 4294901760
      %v1588 = vsub.f32 %v539, %v1587
      %v1589 = vand.u32 %v1588, 4294901760
      %1590 = vmatpush.xpose.msra.mxu0 %v1589
      %v1591 = vand.u32 %v537, 4294901760
      %v1592 = vsub.f32 %v537, %v1591
      %v1593 = vand.u32 %v1592, 4294901760
      %1594 = vmatpush.xpose.msra.mxu0 %v1593
      %v1595 = vand.u32 %v535, 4294901760
      %v1596 = vsub.f32 %v535, %v1595
      %v1597 = vand.u32 %v1596, 4294901760
      %1598 = vmatpush.xpose.msra.mxu0 %v1597
      %v1599 = vand.u32 %v533, 4294901760
      %v1600 = vsub.f32 %v533, %v1599
      %v1601 = vand.u32 %v1600, 4294901760
      %1602 = vmatpush.xpose.msra.mxu0 %v1601
      %v1603 = vand.u32 %v531, 4294901760
      %v1604 = vsub.f32 %v531, %v1603
      %v1605 = vand.u32 %v1604, 4294901760
      %1606 = vmatpush.xpose.msra.mxu0 %v1605
      %v1607 = vand.u32 %v436, 4294901760
      %1608 = vmatmul.f32.gmra.mxu0 %v1607
      %v1609 = vpop.f32.mrf.mxu0
      %v1610 = vadd.f32 %v1355, %v1609
      %v1611 = vand.u32 %v439, 4294901760
      %1612 = vmatmul.f32.gmra.mxu0 %v1611
      %v1613 = vpop.f32.mrf.mxu0
      %v1614 = vadd.f32 %v1361, %v1613
      %v1615 = vand.u32 %v442, 4294901760
      %1616 = vmatmul.f32.gmra.mxu0 %v1615
      %v1617 = vpop.f32.mrf.mxu0
      %v1618 = vadd.f32 %v1367, %v1617
      %v1619 = vand.u32 %v445, 4294901760
      %1620 = vmatmul.f32.gmra.mxu0 %v1619
      %v1621 = vpop.f32.mrf.mxu0
      %v1622 = vadd.f32 %v1373, %v1621
      %v1623 = vand.u32 %v448, 4294901760
      %1624 = vmatmul.f32.gmra.mxu0 %v1623
      %v1625 = vpop.f32.mrf.mxu0
      %v1626 = vadd.f32 %v1379, %v1625
      %v1627 = vand.u32 %v451, 4294901760
      %1628 = vmatmul.f32.gmra.mxu0 %v1627
      %v1629 = vpop.f32.mrf.mxu0
      %v1630 = vadd.f32 %v1385, %v1629
      %v1631 = vand.u32 %v454, 4294901760
      %1632 = vmatmul.f32.gmra.mxu0 %v1631
      %v1633 = vpop.f32.mrf.mxu0
      %v1634 = vadd.f32 %v1391, %v1633
      %v1635 = vand.u32 %v457, 4294901760
      %1636 = vmatmul.f32.gmra.mxu0 %v1635
      %v1637 = vpop.f32.mrf.mxu0
      %v1638 = vadd.f32 %v1397, %v1637
      %v1639 = vand.u32 %v460, 4294901760
      %1640 = vmatmul.f32.gmra.mxu0 %v1639
      %v1641 = vpop.f32.mrf.mxu0
      %v1642 = vadd.f32 %v1403, %v1641
      %v1643 = vand.u32 %v463, 4294901760
      %1644 = vmatmul.f32.gmra.mxu0 %v1643
      %v1645 = vpop.f32.mrf.mxu0
      %v1646 = vadd.f32 %v1409, %v1645
      %v1647 = vand.u32 %v466, 4294901760
      %1648 = vmatmul.f32.gmra.mxu0 %v1647
      %v1649 = vpop.f32.mrf.mxu0
      %v1650 = vadd.f32 %v1415, %v1649
      %v1651 = vand.u32 %v469, 4294901760
      %1652 = vmatmul.f32.gmra.mxu0 %v1651
      %v1653 = vpop.f32.mrf.mxu0
      %v1654 = vadd.f32 %v1421, %v1653
      %v1655 = vand.u32 %v472, 4294901760
      %1656 = vmatmul.f32.gmra.mxu0 %v1655
      %v1657 = vpop.f32.mrf.mxu0
      %v1658 = vadd.f32 %v1427, %v1657
      %v1659 = vand.u32 %v475, 4294901760
      %1660 = vmatmul.f32.gmra.mxu0 %v1659
      %v1661 = vpop.f32.mrf.mxu0
      %v1662 = vadd.f32 %v1433, %v1661
      %v1663 = vand.u32 %v478, 4294901760
      %1664 = vmatmul.f32.gmra.mxu0 %v1663
      %v1665 = vpop.f32.mrf.mxu0
      %v1666 = vadd.f32 %v1439, %v1665
      %v1667 = vand.u32 %v481, 4294901760
      %1668 = vmatmul.f32.gmra.mxu0 %v1667
      %v1669 = vpop.f32.mrf.mxu0
      %v1670 = vadd.f32 %v1445, %v1669
      %v1671 = vand.u32 %v484, 4294901760
      %1672 = vmatmul.f32.gmra.mxu0 %v1671
      %v1673 = vpop.f32.mrf.mxu0
      %v1674 = vadd.f32 %v1451, %v1673
      %v1675 = vand.u32 %v487, 4294901760
      %1676 = vmatmul.f32.gmra.mxu0 %v1675
      %v1677 = vpop.f32.mrf.mxu0
      %v1678 = vadd.f32 %v1457, %v1677
      %v1679 = vand.u32 %v490, 4294901760
      %1680 = vmatmul.f32.gmra.mxu0 %v1679
      %v1681 = vpop.f32.mrf.mxu0
      %v1682 = vadd.f32 %v1463, %v1681
      %v1683 = vand.u32 %v493, 4294901760
      %1684 = vmatmul.f32.gmra.mxu0 %v1683
      %v1685 = vpop.f32.mrf.mxu0
      %v1686 = vadd.f32 %v1469, %v1685
      %v1687 = vand.u32 %v496, 4294901760
      %1688 = vmatmul.f32.gmra.mxu0 %v1687
      %v1689 = vpop.f32.mrf.mxu0
      %v1690 = vadd.f32 %v1475, %v1689
      %v1691 = vand.u32 %v499, 4294901760
      %1692 = vmatmul.f32.gmra.mxu0 %v1691
      %v1693 = vpop.f32.mrf.mxu0
      %v1694 = vadd.f32 %v1481, %v1693
      %v1695 = vand.u32 %v502, 4294901760
      %1696 = vmatmul.f32.gmra.mxu0 %v1695
      %v1697 = vpop.f32.mrf.mxu0
      %v1698 = vadd.f32 %v1487, %v1697
      %v1699 = vand.u32 %v505, 4294901760
      %1700 = vmatmul.f32.gmra.mxu0 %v1699
      %v1701 = vpop.f32.mrf.mxu0
      %v1702 = vadd.f32 %v1493, %v1701
      %v1703 = vand.u32 %v508, 4294901760
      %1704 = vmatmul.f32.gmra.mxu0 %v1703
      %v1705 = vpop.f32.mrf.mxu0
      %v1706 = vadd.f32 %v1499, %v1705
      %v1707 = vand.u32 %v511, 4294901760
      %1708 = vmatmul.f32.gmra.mxu0 %v1707
      %v1709 = vpop.f32.mrf.mxu0
      %v1710 = vadd.f32 %v1505, %v1709
      %v1711 = vand.u32 %v514, 4294901760
      %1712 = vmatmul.f32.gmra.mxu0 %v1711
      %v1713 = vpop.f32.mrf.mxu0
      %v1714 = vadd.f32 %v1511, %v1713
      %v1715 = vand.u32 %v517, 4294901760
      %1716 = vmatmul.f32.gmra.mxu0 %v1715
      %v1717 = vpop.f32.mrf.mxu0
      %v1718 = vadd.f32 %v1517, %v1717
      %v1719 = vand.u32 %v520, 4294901760
      %1720 = vmatmul.f32.gmra.mxu0 %v1719
      %v1721 = vpop.f32.mrf.mxu0
      %v1722 = vadd.f32 %v1523, %v1721
      %v1723 = vand.u32 %v523, 4294901760
      %1724 = vmatmul.f32.gmra.mxu0 %v1723
      %v1725 = vpop.f32.mrf.mxu0
      %v1726 = vadd.f32 %v1529, %v1725
      %v1727 = vand.u32 %v526, 4294901760
      %1728 = vmatmul.f32.gmra.mxu0 %v1727
      %v1729 = vpop.f32.mrf.mxu0
      %v1730 = vadd.f32 %v1535, %v1729
      %v1731 = vand.u32 %v529, 4294901760
      %1732 = vmatmul.f32.gmra.mxu0 %v1731
      %v1733 = vpop.f32.mrf.mxu0
      %v1734 = vadd.f32 %v1541, %v1733
      %1735 = vdwg.mxu0
      %v1736 = vand.u32 %v561, 4294901760
      %1737 = vmatpush.xpose.msra.mxu0 %v1736
      %v1738 = vand.u32 %v559, 4294901760
      %1739 = vmatpush.xpose.msra.mxu0 %v1738
      %v1740 = vand.u32 %v557, 4294901760
      %1741 = vmatpush.xpose.msra.mxu0 %v1740
      %v1742 = vand.u32 %v555, 4294901760
      %1743 = vmatpush.xpose.msra.mxu0 %v1742
      %v1744 = vand.u32 %v553, 4294901760
      %1745 = vmatpush.xpose.msra.mxu0 %v1744
      %v1746 = vand.u32 %v551, 4294901760
      %1747 = vmatpush.xpose.msra.mxu0 %v1746
      %v1748 = vand.u32 %v549, 4294901760
      %1749 = vmatpush.xpose.msra.mxu0 %v1748
      %v1750 = vand.u32 %v547, 4294901760
      %1751 = vmatpush.xpose.msra.mxu0 %v1750
      %v1752 = vand.u32 %v545, 4294901760
      %1753 = vmatpush.xpose.msra.mxu0 %v1752
      %v1754 = vand.u32 %v543, 4294901760
      %1755 = vmatpush.xpose.msra.mxu0 %v1754
      %v1756 = vand.u32 %v541, 4294901760
      %1757 = vmatpush.xpose.msra.mxu0 %v1756
      %v1758 = vand.u32 %v539, 4294901760
      %1759 = vmatpush.xpose.msra.mxu0 %v1758
      %v1760 = vand.u32 %v537, 4294901760
      %1761 = vmatpush.xpose.msra.mxu0 %v1760
      %v1762 = vand.u32 %v535, 4294901760
      %1763 = vmatpush.xpose.msra.mxu0 %v1762
      %v1764 = vand.u32 %v533, 4294901760
      %1765 = vmatpush.xpose.msra.mxu0 %v1764
      %v1766 = vand.u32 %v531, 4294901760
      %1767 = vmatpush.xpose.msra.mxu0 %v1766
      %v1768 = vand.u32 %v436, 4294901760
      %1769 = vmatmul.f32.gmra.mxu0 %v1768
      %v1770 = vpop.f32.mrf.mxu0
      %v1771 = vadd.f32 %v1610, %v1770
      %v1772 = vand.u32 %v439, 4294901760
      %1773 = vmatmul.f32.gmra.mxu0 %v1772
      %v1774 = vpop.f32.mrf.mxu0
      %v1775 = vadd.f32 %v1614, %v1774
      %v1776 = vand.u32 %v442, 4294901760
      %1777 = vmatmul.f32.gmra.mxu0 %v1776
      %v1778 = vpop.f32.mrf.mxu0
      %v1779 = vadd.f32 %v1618, %v1778
      %v1780 = vand.u32 %v445, 4294901760
      %1781 = vmatmul.f32.gmra.mxu0 %v1780
      %v1782 = vpop.f32.mrf.mxu0
      %v1783 = vadd.f32 %v1622, %v1782
      %v1784 = vand.u32 %v448, 4294901760
      %1785 = vmatmul.f32.gmra.mxu0 %v1784
      %v1786 = vpop.f32.mrf.mxu0
      %v1787 = vadd.f32 %v1626, %v1786
      %v1788 = vand.u32 %v451, 4294901760
      %1789 = vmatmul.f32.gmra.mxu0 %v1788
      %v1790 = vpop.f32.mrf.mxu0
      %v1791 = vadd.f32 %v1630, %v1790
      %v1792 = vand.u32 %v454, 4294901760
      %1793 = vmatmul.f32.gmra.mxu0 %v1792
      %v1794 = vpop.f32.mrf.mxu0
      %v1795 = vadd.f32 %v1634, %v1794
      %v1796 = vand.u32 %v457, 4294901760
      %1797 = vmatmul.f32.gmra.mxu0 %v1796
      %v1798 = vpop.f32.mrf.mxu0
      %v1799 = vadd.f32 %v1638, %v1798
      %v1800 = vand.u32 %v460, 4294901760
      %1801 = vmatmul.f32.gmra.mxu0 %v1800
      %v1802 = vpop.f32.mrf.mxu0
      %v1803 = vadd.f32 %v1642, %v1802
      %v1804 = vand.u32 %v463, 4294901760
      %1805 = vmatmul.f32.gmra.mxu0 %v1804
      %v1806 = vpop.f32.mrf.mxu0
      %v1807 = vadd.f32 %v1646, %v1806
      %v1808 = vand.u32 %v466, 4294901760
      %1809 = vmatmul.f32.gmra.mxu0 %v1808
      %v1810 = vpop.f32.mrf.mxu0
      %v1811 = vadd.f32 %v1650, %v1810
      %v1812 = vand.u32 %v469, 4294901760
      %1813 = vmatmul.f32.gmra.mxu0 %v1812
      %v1814 = vpop.f32.mrf.mxu0
      %v1815 = vadd.f32 %v1654, %v1814
      %v1816 = vand.u32 %v472, 4294901760
      %1817 = vmatmul.f32.gmra.mxu0 %v1816
      %v1818 = vpop.f32.mrf.mxu0
      %v1819 = vadd.f32 %v1658, %v1818
      %v1820 = vand.u32 %v475, 4294901760
      %1821 = vmatmul.f32.gmra.mxu0 %v1820
      %v1822 = vpop.f32.mrf.mxu0
      %v1823 = vadd.f32 %v1662, %v1822
      %v1824 = vand.u32 %v478, 4294901760
      %1825 = vmatmul.f32.gmra.mxu0 %v1824
      %v1826 = vpop.f32.mrf.mxu0
      %v1827 = vadd.f32 %v1666, %v1826
      %v1828 = vand.u32 %v481, 4294901760
      %1829 = vmatmul.f32.gmra.mxu0 %v1828
      %v1830 = vpop.f32.mrf.mxu0
      %v1831 = vadd.f32 %v1670, %v1830
      %v1832 = vand.u32 %v484, 4294901760
      %1833 = vmatmul.f32.gmra.mxu0 %v1832
      %v1834 = vpop.f32.mrf.mxu0
      %v1835 = vadd.f32 %v1674, %v1834
      %v1836 = vand.u32 %v487, 4294901760
      %1837 = vmatmul.f32.gmra.mxu0 %v1836
      %v1838 = vpop.f32.mrf.mxu0
      %v1839 = vadd.f32 %v1678, %v1838
      %v1840 = vand.u32 %v490, 4294901760
      %1841 = vmatmul.f32.gmra.mxu0 %v1840
      %v1842 = vpop.f32.mrf.mxu0
      %v1843 = vadd.f32 %v1682, %v1842
      %v1844 = vand.u32 %v493, 4294901760
      %1845 = vmatmul.f32.gmra.mxu0 %v1844
      %v1846 = vpop.f32.mrf.mxu0
      %v1847 = vadd.f32 %v1686, %v1846
      %v1848 = vand.u32 %v496, 4294901760
      %1849 = vmatmul.f32.gmra.mxu0 %v1848
      %v1850 = vpop.f32.mrf.mxu0
      %v1851 = vadd.f32 %v1690, %v1850
      %v1852 = vand.u32 %v499, 4294901760
      %1853 = vmatmul.f32.gmra.mxu0 %v1852
      %v1854 = vpop.f32.mrf.mxu0
      %v1855 = vadd.f32 %v1694, %v1854
      %v1856 = vand.u32 %v502, 4294901760
      %1857 = vmatmul.f32.gmra.mxu0 %v1856
      %v1858 = vpop.f32.mrf.mxu0
      %v1859 = vadd.f32 %v1698, %v1858
      %v1860 = vand.u32 %v505, 4294901760
      %1861 = vmatmul.f32.gmra.mxu0 %v1860
      %v1862 = vpop.f32.mrf.mxu0
      %v1863 = vadd.f32 %v1702, %v1862
      %v1864 = vand.u32 %v508, 4294901760
      %1865 = vmatmul.f32.gmra.mxu0 %v1864
      %v1866 = vpop.f32.mrf.mxu0
      %v1867 = vadd.f32 %v1706, %v1866
      %v1868 = vand.u32 %v511, 4294901760
      %1869 = vmatmul.f32.gmra.mxu0 %v1868
      %v1870 = vpop.f32.mrf.mxu0
      %v1871 = vadd.f32 %v1710, %v1870
      %v1872 = vand.u32 %v514, 4294901760
      %1873 = vmatmul.f32.gmra.mxu0 %v1872
      %v1874 = vpop.f32.mrf.mxu0
      %v1875 = vadd.f32 %v1714, %v1874
      %v1876 = vand.u32 %v517, 4294901760
      %1877 = vmatmul.f32.gmra.mxu0 %v1876
      %v1878 = vpop.f32.mrf.mxu0
      %v1879 = vadd.f32 %v1718, %v1878
      %v1880 = vand.u32 %v520, 4294901760
      %1881 = vmatmul.f32.gmra.mxu0 %v1880
      %v1882 = vpop.f32.mrf.mxu0
      %v1883 = vadd.f32 %v1722, %v1882
      %v1884 = vand.u32 %v523, 4294901760
      %1885 = vmatmul.f32.gmra.mxu0 %v1884
      %v1886 = vpop.f32.mrf.mxu0
      %v1887 = vadd.f32 %v1726, %v1886
      %v1888 = vand.u32 %v526, 4294901760
      %1889 = vmatmul.f32.gmra.mxu0 %v1888
      %v1890 = vpop.f32.mrf.mxu0
      %v1891 = vadd.f32 %v1730, %v1890
      %v1892 = vand.u32 %v529, 4294901760
      %1893 = vmatmul.f32.gmra.mxu0 %v1892
      %v1894 = vpop.f32.mrf.mxu0
      %v1895 = vadd.f32 %v1734, %v1894
      %1896 = vdwg.mxu0
      %v1897 = vand.u32 %v593, 4294901760
      %1898 = vmatpush.xpose.msra.mxu0 %v1897
      %v1899 = vand.u32 %v591, 4294901760
      %1900 = vmatpush.xpose.msra.mxu0 %v1899
      %v1901 = vand.u32 %v589, 4294901760
      %1902 = vmatpush.xpose.msra.mxu0 %v1901
      %v1903 = vand.u32 %v587, 4294901760
      %1904 = vmatpush.xpose.msra.mxu0 %v1903
      %v1905 = vand.u32 %v585, 4294901760
      %1906 = vmatpush.xpose.msra.mxu0 %v1905
      %v1907 = vand.u32 %v583, 4294901760
      %1908 = vmatpush.xpose.msra.mxu0 %v1907
      %v1909 = vand.u32 %v581, 4294901760
      %1910 = vmatpush.xpose.msra.mxu0 %v1909
      %v1911 = vand.u32 %v579, 4294901760
      %1912 = vmatpush.xpose.msra.mxu0 %v1911
      %v1913 = vand.u32 %v577, 4294901760
      %1914 = vmatpush.xpose.msra.mxu0 %v1913
      %v1915 = vand.u32 %v575, 4294901760
      %1916 = vmatpush.xpose.msra.mxu0 %v1915
      %v1917 = vand.u32 %v573, 4294901760
      %1918 = vmatpush.xpose.msra.mxu0 %v1917
      %v1919 = vand.u32 %v571, 4294901760
      %1920 = vmatpush.xpose.msra.mxu0 %v1919
      %v1921 = vand.u32 %v569, 4294901760
      %1922 = vmatpush.xpose.msra.mxu0 %v1921
      %v1923 = vand.u32 %v567, 4294901760
      %1924 = vmatpush.xpose.msra.mxu0 %v1923
      %v1925 = vand.u32 %v565, 4294901760
      %1926 = vmatpush.xpose.msra.mxu0 %v1925
      %v1927 = vand.u32 %v563, 4294901760
      %1928 = vmatpush.xpose.msra.mxu0 %v1927
      %v1929 = vand.u32 %v436, 4294901760
      %v1930 = vsub.f32 %v436, %v1929
      %v1931 = vand.u32 %v1930, 4294901760
      %v1932 = vsub.f32 %v1930, %v1931
      %v1933 = vand.u32 %v1932, 4294901760
      %1934 = vmatmul.f32.gmra.mxu0 %v1933
      %v1935 = vpop.f32.mrf.mxu0
      %v1936 = vadd.f32 0.0, %v1935
      %v1937 = vand.u32 %v439, 4294901760
      %v1938 = vsub.f32 %v439, %v1937
      %v1939 = vand.u32 %v1938, 4294901760
      %v1940 = vsub.f32 %v1938, %v1939
      %v1941 = vand.u32 %v1940, 4294901760
      %1942 = vmatmul.f32.gmra.mxu0 %v1941
      %v1943 = vpop.f32.mrf.mxu0
      %v1944 = vadd.f32 0.0, %v1943
      %v1945 = vand.u32 %v442, 4294901760
      %v1946 = vsub.f32 %v442, %v1945
      %v1947 = vand.u32 %v1946, 4294901760
      %v1948 = vsub.f32 %v1946, %v1947
      %v1949 = vand.u32 %v1948, 4294901760
      %1950 = vmatmul.f32.gmra.mxu0 %v1949
      %v1951 = vpop.f32.mrf.mxu0
      %v1952 = vadd.f32 0.0, %v1951
      %v1953 = vand.u32 %v445, 4294901760
      %v1954 = vsub.f32 %v445, %v1953
      %v1955 = vand.u32 %v1954, 4294901760
      %v1956 = vsub.f32 %v1954, %v1955
      %v1957 = vand.u32 %v1956, 4294901760
      %1958 = vmatmul.f32.gmra.mxu0 %v1957
      %v1959 = vpop.f32.mrf.mxu0
      %v1960 = vadd.f32 0.0, %v1959
      %v1961 = vand.u32 %v448, 4294901760
      %v1962 = vsub.f32 %v448, %v1961
      %v1963 = vand.u32 %v1962, 4294901760
      %v1964 = vsub.f32 %v1962, %v1963
      %v1965 = vand.u32 %v1964, 4294901760
      %1966 = vmatmul.f32.gmra.mxu0 %v1965
      %v1967 = vpop.f32.mrf.mxu0
      %v1968 = vadd.f32 0.0, %v1967
      %v1969 = vand.u32 %v451, 4294901760
      %v1970 = vsub.f32 %v451, %v1969
      %v1971 = vand.u32 %v1970, 4294901760
      %v1972 = vsub.f32 %v1970, %v1971
      %v1973 = vand.u32 %v1972, 4294901760
      %1974 = vmatmul.f32.gmra.mxu0 %v1973
      %v1975 = vpop.f32.mrf.mxu0
      %v1976 = vadd.f32 0.0, %v1975
      %v1977 = vand.u32 %v454, 4294901760
      %v1978 = vsub.f32 %v454, %v1977
      %v1979 = vand.u32 %v1978, 4294901760
      %v1980 = vsub.f32 %v1978, %v1979
      %v1981 = vand.u32 %v1980, 4294901760
      %1982 = vmatmul.f32.gmra.mxu0 %v1981
      %v1983 = vpop.f32.mrf.mxu0
      %v1984 = vadd.f32 0.0, %v1983
      %v1985 = vand.u32 %v457, 4294901760
      %v1986 = vsub.f32 %v457, %v1985
      %v1987 = vand.u32 %v1986, 4294901760
      %v1988 = vsub.f32 %v1986, %v1987
      %v1989 = vand.u32 %v1988, 4294901760
      %1990 = vmatmul.f32.gmra.mxu0 %v1989
      %v1991 = vpop.f32.mrf.mxu0
      %v1992 = vadd.f32 0.0, %v1991
      %v1993 = vand.u32 %v460, 4294901760
      %v1994 = vsub.f32 %v460, %v1993
      %v1995 = vand.u32 %v1994, 4294901760
      %v1996 = vsub.f32 %v1994, %v1995
      %v1997 = vand.u32 %v1996, 4294901760
      %1998 = vmatmul.f32.gmra.mxu0 %v1997
      %v1999 = vpop.f32.mrf.mxu0
      %v2000 = vadd.f32 0.0, %v1999
      %v2001 = vand.u32 %v463, 4294901760
      %v2002 = vsub.f32 %v463, %v2001
      %v2003 = vand.u32 %v2002, 4294901760
      %v2004 = vsub.f32 %v2002, %v2003
      %v2005 = vand.u32 %v2004, 4294901760
      %2006 = vmatmul.f32.gmra.mxu0 %v2005
      %v2007 = vpop.f32.mrf.mxu0
      %v2008 = vadd.f32 0.0, %v2007
      %v2009 = vand.u32 %v466, 4294901760
      %v2010 = vsub.f32 %v466, %v2009
      %v2011 = vand.u32 %v2010, 4294901760
      %v2012 = vsub.f32 %v2010, %v2011
      %v2013 = vand.u32 %v2012, 4294901760
      %2014 = vmatmul.f32.gmra.mxu0 %v2013
      %v2015 = vpop.f32.mrf.mxu0
      %v2016 = vadd.f32 0.0, %v2015
      %v2017 = vand.u32 %v469, 4294901760
      %v2018 = vsub.f32 %v469, %v2017
      %v2019 = vand.u32 %v2018, 4294901760
      %v2020 = vsub.f32 %v2018, %v2019
      %v2021 = vand.u32 %v2020, 4294901760
      %2022 = vmatmul.f32.gmra.mxu0 %v2021
      %v2023 = vpop.f32.mrf.mxu0
      %v2024 = vadd.f32 0.0, %v2023
      %v2025 = vand.u32 %v472, 4294901760
      %v2026 = vsub.f32 %v472, %v2025
      %v2027 = vand.u32 %v2026, 4294901760
      %v2028 = vsub.f32 %v2026, %v2027
      %v2029 = vand.u32 %v2028, 4294901760
      %2030 = vmatmul.f32.gmra.mxu0 %v2029
      %v2031 = vpop.f32.mrf.mxu0
      %v2032 = vadd.f32 0.0, %v2031
      %v2033 = vand.u32 %v475, 4294901760
      %v2034 = vsub.f32 %v475, %v2033
      %v2035 = vand.u32 %v2034, 4294901760
      %v2036 = vsub.f32 %v2034, %v2035
      %v2037 = vand.u32 %v2036, 4294901760
      %2038 = vmatmul.f32.gmra.mxu0 %v2037
      %v2039 = vpop.f32.mrf.mxu0
      %v2040 = vadd.f32 0.0, %v2039
      %v2041 = vand.u32 %v478, 4294901760
      %v2042 = vsub.f32 %v478, %v2041
      %v2043 = vand.u32 %v2042, 4294901760
      %v2044 = vsub.f32 %v2042, %v2043
      %v2045 = vand.u32 %v2044, 4294901760
      %2046 = vmatmul.f32.gmra.mxu0 %v2045
      %v2047 = vpop.f32.mrf.mxu0
      %v2048 = vadd.f32 0.0, %v2047
      %v2049 = vand.u32 %v481, 4294901760
      %v2050 = vsub.f32 %v481, %v2049
      %v2051 = vand.u32 %v2050, 4294901760
      %v2052 = vsub.f32 %v2050, %v2051
      %v2053 = vand.u32 %v2052, 4294901760
      %2054 = vmatmul.f32.gmra.mxu0 %v2053
      %v2055 = vpop.f32.mrf.mxu0
      %v2056 = vadd.f32 0.0, %v2055
      %v2057 = vand.u32 %v484, 4294901760
      %v2058 = vsub.f32 %v484, %v2057
      %v2059 = vand.u32 %v2058, 4294901760
      %v2060 = vsub.f32 %v2058, %v2059
      %v2061 = vand.u32 %v2060, 4294901760
      %2062 = vmatmul.f32.gmra.mxu0 %v2061
      %v2063 = vpop.f32.mrf.mxu0
      %v2064 = vadd.f32 0.0, %v2063
      %v2065 = vand.u32 %v487, 4294901760
      %v2066 = vsub.f32 %v487, %v2065
      %v2067 = vand.u32 %v2066, 4294901760
      %v2068 = vsub.f32 %v2066, %v2067
      %v2069 = vand.u32 %v2068, 4294901760
      %2070 = vmatmul.f32.gmra.mxu0 %v2069
      %v2071 = vpop.f32.mrf.mxu0
      %v2072 = vadd.f32 0.0, %v2071
      %v2073 = vand.u32 %v490, 4294901760
      %v2074 = vsub.f32 %v490, %v2073
      %v2075 = vand.u32 %v2074, 4294901760
      %v2076 = vsub.f32 %v2074, %v2075
      %v2077 = vand.u32 %v2076, 4294901760
      %2078 = vmatmul.f32.gmra.mxu0 %v2077
      %v2079 = vpop.f32.mrf.mxu0
      %v2080 = vadd.f32 0.0, %v2079
      %v2081 = vand.u32 %v493, 4294901760
      %v2082 = vsub.f32 %v493, %v2081
      %v2083 = vand.u32 %v2082, 4294901760
      %v2084 = vsub.f32 %v2082, %v2083
      %v2085 = vand.u32 %v2084, 4294901760
      %2086 = vmatmul.f32.gmra.mxu0 %v2085
      %v2087 = vpop.f32.mrf.mxu0
      %v2088 = vadd.f32 0.0, %v2087
      %v2089 = vand.u32 %v496, 4294901760
      %v2090 = vsub.f32 %v496, %v2089
      %v2091 = vand.u32 %v2090, 4294901760
      %v2092 = vsub.f32 %v2090, %v2091
      %v2093 = vand.u32 %v2092, 4294901760
      %2094 = vmatmul.f32.gmra.mxu0 %v2093
      %v2095 = vpop.f32.mrf.mxu0
      %v2096 = vadd.f32 0.0, %v2095
      %v2097 = vand.u32 %v499, 4294901760
      %v2098 = vsub.f32 %v499, %v2097
      %v2099 = vand.u32 %v2098, 4294901760
      %v2100 = vsub.f32 %v2098, %v2099
      %v2101 = vand.u32 %v2100, 4294901760
      %2102 = vmatmul.f32.gmra.mxu0 %v2101
      %v2103 = vpop.f32.mrf.mxu0
      %v2104 = vadd.f32 0.0, %v2103
      %v2105 = vand.u32 %v502, 4294901760
      %v2106 = vsub.f32 %v502, %v2105
      %v2107 = vand.u32 %v2106, 4294901760
      %v2108 = vsub.f32 %v2106, %v2107
      %v2109 = vand.u32 %v2108, 4294901760
      %2110 = vmatmul.f32.gmra.mxu0 %v2109
      %v2111 = vpop.f32.mrf.mxu0
      %v2112 = vadd.f32 0.0, %v2111
      %v2113 = vand.u32 %v505, 4294901760
      %v2114 = vsub.f32 %v505, %v2113
      %v2115 = vand.u32 %v2114, 4294901760
      %v2116 = vsub.f32 %v2114, %v2115
      %v2117 = vand.u32 %v2116, 4294901760
      %2118 = vmatmul.f32.gmra.mxu0 %v2117
      %v2119 = vpop.f32.mrf.mxu0
      %v2120 = vadd.f32 0.0, %v2119
      %v2121 = vand.u32 %v508, 4294901760
      %v2122 = vsub.f32 %v508, %v2121
      %v2123 = vand.u32 %v2122, 4294901760
      %v2124 = vsub.f32 %v2122, %v2123
      %v2125 = vand.u32 %v2124, 4294901760
      %2126 = vmatmul.f32.gmra.mxu0 %v2125
      %v2127 = vpop.f32.mrf.mxu0
      %v2128 = vadd.f32 0.0, %v2127
      %v2129 = vand.u32 %v511, 4294901760
      %v2130 = vsub.f32 %v511, %v2129
      %v2131 = vand.u32 %v2130, 4294901760
      %v2132 = vsub.f32 %v2130, %v2131
      %v2133 = vand.u32 %v2132, 4294901760
      %2134 = vmatmul.f32.gmra.mxu0 %v2133
      %v2135 = vpop.f32.mrf.mxu0
      %v2136 = vadd.f32 0.0, %v2135
      %v2137 = vand.u32 %v514, 4294901760
      %v2138 = vsub.f32 %v514, %v2137
      %v2139 = vand.u32 %v2138, 4294901760
      %v2140 = vsub.f32 %v2138, %v2139
      %v2141 = vand.u32 %v2140, 4294901760
      %2142 = vmatmul.f32.gmra.mxu0 %v2141
      %v2143 = vpop.f32.mrf.mxu0
      %v2144 = vadd.f32 0.0, %v2143
      %v2145 = vand.u32 %v517, 4294901760
      %v2146 = vsub.f32 %v517, %v2145
      %v2147 = vand.u32 %v2146, 4294901760
      %v2148 = vsub.f32 %v2146, %v2147
      %v2149 = vand.u32 %v2148, 4294901760
      %2150 = vmatmul.f32.gmra.mxu0 %v2149
      %v2151 = vpop.f32.mrf.mxu0
      %v2152 = vadd.f32 0.0, %v2151
      %v2153 = vand.u32 %v520, 4294901760
      %v2154 = vsub.f32 %v520, %v2153
      %v2155 = vand.u32 %v2154, 4294901760
      %v2156 = vsub.f32 %v2154, %v2155
      %v2157 = vand.u32 %v2156, 4294901760
      %2158 = vmatmul.f32.gmra.mxu0 %v2157
      %v2159 = vpop.f32.mrf.mxu0
      %v2160 = vadd.f32 0.0, %v2159
      %v2161 = vand.u32 %v523, 4294901760
      %v2162 = vsub.f32 %v523, %v2161
      %v2163 = vand.u32 %v2162, 4294901760
      %v2164 = vsub.f32 %v2162, %v2163
      %v2165 = vand.u32 %v2164, 4294901760
      %2166 = vmatmul.f32.gmra.mxu0 %v2165
      %v2167 = vpop.f32.mrf.mxu0
      %v2168 = vadd.f32 0.0, %v2167
      %v2169 = vand.u32 %v526, 4294901760
      %v2170 = vsub.f32 %v526, %v2169
      %v2171 = vand.u32 %v2170, 4294901760
      %v2172 = vsub.f32 %v2170, %v2171
      %v2173 = vand.u32 %v2172, 4294901760
      %2174 = vmatmul.f32.gmra.mxu0 %v2173
      %v2175 = vpop.f32.mrf.mxu0
      %v2176 = vadd.f32 0.0, %v2175
      %v2177 = vand.u32 %v529, 4294901760
      %v2178 = vsub.f32 %v529, %v2177
      %v2179 = vand.u32 %v2178, 4294901760
      %v2180 = vsub.f32 %v2178, %v2179
      %v2181 = vand.u32 %v2180, 4294901760
      %2182 = vmatmul.f32.gmra.mxu0 %v2181
      %v2183 = vpop.f32.mrf.mxu0
      %v2184 = vadd.f32 0.0, %v2183
      %2185 = vdwg.mxu0
      %v2186 = vand.u32 %v593, 4294901760
      %v2187 = vsub.f32 %v593, %v2186
      %v2188 = vand.u32 %v2187, 4294901760
      %v2189 = vsub.f32 %v2187, %v2188
      %v2190 = vand.u32 %v2189, 4294901760
      %2191 = vmatpush.xpose.msra.mxu0 %v2190
      %v2192 = vand.u32 %v591, 4294901760
      %v2193 = vsub.f32 %v591, %v2192
      %v2194 = vand.u32 %v2193, 4294901760
      %v2195 = vsub.f32 %v2193, %v2194
      %v2196 = vand.u32 %v2195, 4294901760
      %2197 = vmatpush.xpose.msra.mxu0 %v2196
      %v2198 = vand.u32 %v589, 4294901760
      %v2199 = vsub.f32 %v589, %v2198
      %v2200 = vand.u32 %v2199, 4294901760
      %v2201 = vsub.f32 %v2199, %v2200
      %v2202 = vand.u32 %v2201, 4294901760
      %2203 = vmatpush.xpose.msra.mxu0 %v2202
      %v2204 = vand.u32 %v587, 4294901760
      %v2205 = vsub.f32 %v587, %v2204
      %v2206 = vand.u32 %v2205, 4294901760
      %v2207 = vsub.f32 %v2205, %v2206
      %v2208 = vand.u32 %v2207, 4294901760
      %2209 = vmatpush.xpose.msra.mxu0 %v2208
      %v2210 = vand.u32 %v585, 4294901760
      %v2211 = vsub.f32 %v585, %v2210
      %v2212 = vand.u32 %v2211, 4294901760
      %v2213 = vsub.f32 %v2211, %v2212
      %v2214 = vand.u32 %v2213, 4294901760
      %2215 = vmatpush.xpose.msra.mxu0 %v2214
      %v2216 = vand.u32 %v583, 4294901760
      %v2217 = vsub.f32 %v583, %v2216
      %v2218 = vand.u32 %v2217, 4294901760
      %v2219 = vsub.f32 %v2217, %v2218
      %v2220 = vand.u32 %v2219, 4294901760
      %2221 = vmatpush.xpose.msra.mxu0 %v2220
      %v2222 = vand.u32 %v581, 4294901760
      %v2223 = vsub.f32 %v581, %v2222
      %v2224 = vand.u32 %v2223, 4294901760
      %v2225 = vsub.f32 %v2223, %v2224
      %v2226 = vand.u32 %v2225, 4294901760
      %2227 = vmatpush.xpose.msra.mxu0 %v2226
      %v2228 = vand.u32 %v579, 4294901760
      %v2229 = vsub.f32 %v579, %v2228
      %v2230 = vand.u32 %v2229, 4294901760
      %v2231 = vsub.f32 %v2229, %v2230
      %v2232 = vand.u32 %v2231, 4294901760
      %2233 = vmatpush.xpose.msra.mxu0 %v2232
      %v2234 = vand.u32 %v577, 4294901760
      %v2235 = vsub.f32 %v577, %v2234
      %v2236 = vand.u32 %v2235, 4294901760
      %v2237 = vsub.f32 %v2235, %v2236
      %v2238 = vand.u32 %v2237, 4294901760
      %2239 = vmatpush.xpose.msra.mxu0 %v2238
      %v2240 = vand.u32 %v575, 4294901760
      %v2241 = vsub.f32 %v575, %v2240
      %v2242 = vand.u32 %v2241, 4294901760
      %v2243 = vsub.f32 %v2241, %v2242
      %v2244 = vand.u32 %v2243, 4294901760
      %2245 = vmatpush.xpose.msra.mxu0 %v2244
      %v2246 = vand.u32 %v573, 4294901760
      %v2247 = vsub.f32 %v573, %v2246
      %v2248 = vand.u32 %v2247, 4294901760
      %v2249 = vsub.f32 %v2247, %v2248
      %v2250 = vand.u32 %v2249, 4294901760
      %2251 = vmatpush.xpose.msra.mxu0 %v2250
      %v2252 = vand.u32 %v571, 4294901760
      %v2253 = vsub.f32 %v571, %v2252
      %v2254 = vand.u32 %v2253, 4294901760
      %v2255 = vsub.f32 %v2253, %v2254
      %v2256 = vand.u32 %v2255, 4294901760
      %2257 = vmatpush.xpose.msra.mxu0 %v2256
      %v2258 = vand.u32 %v569, 4294901760
      %v2259 = vsub.f32 %v569, %v2258
      %v2260 = vand.u32 %v2259, 4294901760
      %v2261 = vsub.f32 %v2259, %v2260
      %v2262 = vand.u32 %v2261, 4294901760
      %2263 = vmatpush.xpose.msra.mxu0 %v2262
      %v2264 = vand.u32 %v567, 4294901760
      %v2265 = vsub.f32 %v567, %v2264
      %v2266 = vand.u32 %v2265, 4294901760
      %v2267 = vsub.f32 %v2265, %v2266
      %v2268 = vand.u32 %v2267, 4294901760
      %2269 = vmatpush.xpose.msra.mxu0 %v2268
      %v2270 = vand.u32 %v565, 4294901760
      %v2271 = vsub.f32 %v565, %v2270
      %v2272 = vand.u32 %v2271, 4294901760
      %v2273 = vsub.f32 %v2271, %v2272
      %v2274 = vand.u32 %v2273, 4294901760
      %2275 = vmatpush.xpose.msra.mxu0 %v2274
      %v2276 = vand.u32 %v563, 4294901760
      %v2277 = vsub.f32 %v563, %v2276
      %v2278 = vand.u32 %v2277, 4294901760
      %v2279 = vsub.f32 %v2277, %v2278
      %v2280 = vand.u32 %v2279, 4294901760
      %2281 = vmatpush.xpose.msra.mxu0 %v2280
      %v2282 = vand.u32 %v436, 4294901760
      %2283 = vmatmul.f32.gmra.mxu0 %v2282
      %v2284 = vpop.f32.mrf.mxu0
      %v2285 = vadd.f32 %v1936, %v2284
      %v2286 = vand.u32 %v439, 4294901760
      %2287 = vmatmul.f32.gmra.mxu0 %v2286
      %v2288 = vpop.f32.mrf.mxu0
      %v2289 = vadd.f32 %v1944, %v2288
      %v2290 = vand.u32 %v442, 4294901760
      %2291 = vmatmul.f32.gmra.mxu0 %v2290
      %v2292 = vpop.f32.mrf.mxu0
      %v2293 = vadd.f32 %v1952, %v2292
      %v2294 = vand.u32 %v445, 4294901760
      %2295 = vmatmul.f32.gmra.mxu0 %v2294
      %v2296 = vpop.f32.mrf.mxu0
      %v2297 = vadd.f32 %v1960, %v2296
      %v2298 = vand.u32 %v448, 4294901760
      %2299 = vmatmul.f32.gmra.mxu0 %v2298
      %v2300 = vpop.f32.mrf.mxu0
      %v2301 = vadd.f32 %v1968, %v2300
      %v2302 = vand.u32 %v451, 4294901760
      %2303 = vmatmul.f32.gmra.mxu0 %v2302
      %v2304 = vpop.f32.mrf.mxu0
      %v2305 = vadd.f32 %v1976, %v2304
      %v2306 = vand.u32 %v454, 4294901760
      %2307 = vmatmul.f32.gmra.mxu0 %v2306
      %v2308 = vpop.f32.mrf.mxu0
      %v2309 = vadd.f32 %v1984, %v2308
      %v2310 = vand.u32 %v457, 4294901760
      %2311 = vmatmul.f32.gmra.mxu0 %v2310
      %v2312 = vpop.f32.mrf.mxu0
      %v2313 = vadd.f32 %v1992, %v2312
      %v2314 = vand.u32 %v460, 4294901760
      %2315 = vmatmul.f32.gmra.mxu0 %v2314
      %v2316 = vpop.f32.mrf.mxu0
      %v2317 = vadd.f32 %v2000, %v2316
      %v2318 = vand.u32 %v463, 4294901760
      %2319 = vmatmul.f32.gmra.mxu0 %v2318
      %v2320 = vpop.f32.mrf.mxu0
      %v2321 = vadd.f32 %v2008, %v2320
      %v2322 = vand.u32 %v466, 4294901760
      %2323 = vmatmul.f32.gmra.mxu0 %v2322
      %v2324 = vpop.f32.mrf.mxu0
      %v2325 = vadd.f32 %v2016, %v2324
      %v2326 = vand.u32 %v469, 4294901760
      %2327 = vmatmul.f32.gmra.mxu0 %v2326
      %v2328 = vpop.f32.mrf.mxu0
      %v2329 = vadd.f32 %v2024, %v2328
      %v2330 = vand.u32 %v472, 4294901760
      %2331 = vmatmul.f32.gmra.mxu0 %v2330
      %v2332 = vpop.f32.mrf.mxu0
      %v2333 = vadd.f32 %v2032, %v2332
      %v2334 = vand.u32 %v475, 4294901760
      %2335 = vmatmul.f32.gmra.mxu0 %v2334
      %v2336 = vpop.f32.mrf.mxu0
      %v2337 = vadd.f32 %v2040, %v2336
      %v2338 = vand.u32 %v478, 4294901760
      %2339 = vmatmul.f32.gmra.mxu0 %v2338
      %v2340 = vpop.f32.mrf.mxu0
      %v2341 = vadd.f32 %v2048, %v2340
      %v2342 = vand.u32 %v481, 4294901760
      %2343 = vmatmul.f32.gmra.mxu0 %v2342
      %v2344 = vpop.f32.mrf.mxu0
      %v2345 = vadd.f32 %v2056, %v2344
      %v2346 = vand.u32 %v484, 4294901760
      %2347 = vmatmul.f32.gmra.mxu0 %v2346
      %v2348 = vpop.f32.mrf.mxu0
      %v2349 = vadd.f32 %v2064, %v2348
      %v2350 = vand.u32 %v487, 4294901760
      %2351 = vmatmul.f32.gmra.mxu0 %v2350
      %v2352 = vpop.f32.mrf.mxu0
      %v2353 = vadd.f32 %v2072, %v2352
      %v2354 = vand.u32 %v490, 4294901760
      %2355 = vmatmul.f32.gmra.mxu0 %v2354
      %v2356 = vpop.f32.mrf.mxu0
      %v2357 = vadd.f32 %v2080, %v2356
      %v2358 = vand.u32 %v493, 4294901760
      %2359 = vmatmul.f32.gmra.mxu0 %v2358
      %v2360 = vpop.f32.mrf.mxu0
      %v2361 = vadd.f32 %v2088, %v2360
      %v2362 = vand.u32 %v496, 4294901760
      %2363 = vmatmul.f32.gmra.mxu0 %v2362
      %v2364 = vpop.f32.mrf.mxu0
      %v2365 = vadd.f32 %v2096, %v2364
      %v2366 = vand.u32 %v499, 4294901760
      %2367 = vmatmul.f32.gmra.mxu0 %v2366
      %v2368 = vpop.f32.mrf.mxu0
      %v2369 = vadd.f32 %v2104, %v2368
      %v2370 = vand.u32 %v502, 4294901760
      %2371 = vmatmul.f32.gmra.mxu0 %v2370
      %v2372 = vpop.f32.mrf.mxu0
      %v2373 = vadd.f32 %v2112, %v2372
      %v2374 = vand.u32 %v505, 4294901760
      %2375 = vmatmul.f32.gmra.mxu0 %v2374
      %v2376 = vpop.f32.mrf.mxu0
      %v2377 = vadd.f32 %v2120, %v2376
      %v2378 = vand.u32 %v508, 4294901760
      %2379 = vmatmul.f32.gmra.mxu0 %v2378
      %v2380 = vpop.f32.mrf.mxu0
      %v2381 = vadd.f32 %v2128, %v2380
      %v2382 = vand.u32 %v511, 4294901760
      %2383 = vmatmul.f32.gmra.mxu0 %v2382
      %v2384 = vpop.f32.mrf.mxu0
      %v2385 = vadd.f32 %v2136, %v2384
      %v2386 = vand.u32 %v514, 4294901760
      %2387 = vmatmul.f32.gmra.mxu0 %v2386
      %v2388 = vpop.f32.mrf.mxu0
      %v2389 = vadd.f32 %v2144, %v2388
      %v2390 = vand.u32 %v517, 4294901760
      %2391 = vmatmul.f32.gmra.mxu0 %v2390
      %v2392 = vpop.f32.mrf.mxu0
      %v2393 = vadd.f32 %v2152, %v2392
      %v2394 = vand.u32 %v520, 4294901760
      %2395 = vmatmul.f32.gmra.mxu0 %v2394
      %v2396 = vpop.f32.mrf.mxu0
      %v2397 = vadd.f32 %v2160, %v2396
      %v2398 = vand.u32 %v523, 4294901760
      %2399 = vmatmul.f32.gmra.mxu0 %v2398
      %v2400 = vpop.f32.mrf.mxu0
      %v2401 = vadd.f32 %v2168, %v2400
      %v2402 = vand.u32 %v526, 4294901760
      %2403 = vmatmul.f32.gmra.mxu0 %v2402
      %v2404 = vpop.f32.mrf.mxu0
      %v2405 = vadd.f32 %v2176, %v2404
      %v2406 = vand.u32 %v529, 4294901760
      %2407 = vmatmul.f32.gmra.mxu0 %v2406
      %v2408 = vpop.f32.mrf.mxu0
      %v2409 = vadd.f32 %v2184, %v2408
      %2410 = vdwg.mxu0
      %v2411 = vand.u32 %v593, 4294901760
      %v2412 = vsub.f32 %v593, %v2411
      %2413 = vmatpush.xpose.msra.mxu0 %v2412
      %v2414 = vand.u32 %v591, 4294901760
      %v2415 = vsub.f32 %v591, %v2414
      %2416 = vmatpush.xpose.msra.mxu0 %v2415
      %v2417 = vand.u32 %v589, 4294901760
      %v2418 = vsub.f32 %v589, %v2417
      %2419 = vmatpush.xpose.msra.mxu0 %v2418
      %v2420 = vand.u32 %v587, 4294901760
      %v2421 = vsub.f32 %v587, %v2420
      %2422 = vmatpush.xpose.msra.mxu0 %v2421
      %v2423 = vand.u32 %v585, 4294901760
      %v2424 = vsub.f32 %v585, %v2423
      %2425 = vmatpush.xpose.msra.mxu0 %v2424
      %v2426 = vand.u32 %v583, 4294901760
      %v2427 = vsub.f32 %v583, %v2426
      %2428 = vmatpush.xpose.msra.mxu0 %v2427
      %v2429 = vand.u32 %v581, 4294901760
      %v2430 = vsub.f32 %v581, %v2429
      %2431 = vmatpush.xpose.msra.mxu0 %v2430
      %v2432 = vand.u32 %v579, 4294901760
      %v2433 = vsub.f32 %v579, %v2432
      %2434 = vmatpush.xpose.msra.mxu0 %v2433
      %v2435 = vand.u32 %v577, 4294901760
      %v2436 = vsub.f32 %v577, %v2435
      %2437 = vmatpush.xpose.msra.mxu0 %v2436
      %v2438 = vand.u32 %v575, 4294901760
      %v2439 = vsub.f32 %v575, %v2438
      %2440 = vmatpush.xpose.msra.mxu0 %v2439
      %v2441 = vand.u32 %v573, 4294901760
      %v2442 = vsub.f32 %v573, %v2441
      %2443 = vmatpush.xpose.msra.mxu0 %v2442
      %v2444 = vand.u32 %v571, 4294901760
      %v2445 = vsub.f32 %v571, %v2444
      %2446 = vmatpush.xpose.msra.mxu0 %v2445
      %v2447 = vand.u32 %v569, 4294901760
      %v2448 = vsub.f32 %v569, %v2447
      %2449 = vmatpush.xpose.msra.mxu0 %v2448
      %v2450 = vand.u32 %v567, 4294901760
      %v2451 = vsub.f32 %v567, %v2450
      %2452 = vmatpush.xpose.msra.mxu0 %v2451
      %v2453 = vand.u32 %v565, 4294901760
      %v2454 = vsub.f32 %v565, %v2453
      %2455 = vmatpush.xpose.msra.mxu0 %v2454
      %v2456 = vand.u32 %v563, 4294901760
      %v2457 = vsub.f32 %v563, %v2456
      %2458 = vmatpush.xpose.msra.mxu0 %v2457
      %v2459 = vand.u32 %v436, 4294901760
      %v2460 = vsub.f32 %v436, %v2459
      %2461 = vmatmul.f32.gmra.mxu0 %v2460
      %v2462 = vpop.f32.mrf.mxu0
      %v2463 = vadd.f32 %v2285, %v2462
      %v2464 = vand.u32 %v439, 4294901760
      %v2465 = vsub.f32 %v439, %v2464
      %2466 = vmatmul.f32.gmra.mxu0 %v2465
      %v2467 = vpop.f32.mrf.mxu0
      %v2468 = vadd.f32 %v2289, %v2467
      %v2469 = vand.u32 %v442, 4294901760
      %v2470 = vsub.f32 %v442, %v2469
      %2471 = vmatmul.f32.gmra.mxu0 %v2470
      %v2472 = vpop.f32.mrf.mxu0
      %v2473 = vadd.f32 %v2293, %v2472
      %v2474 = vand.u32 %v445, 4294901760
      %v2475 = vsub.f32 %v445, %v2474
      %2476 = vmatmul.f32.gmra.mxu0 %v2475
      %v2477 = vpop.f32.mrf.mxu0
      %v2478 = vadd.f32 %v2297, %v2477
      %v2479 = vand.u32 %v448, 4294901760
      %v2480 = vsub.f32 %v448, %v2479
      %2481 = vmatmul.f32.gmra.mxu0 %v2480
      %v2482 = vpop.f32.mrf.mxu0
      %v2483 = vadd.f32 %v2301, %v2482
      %v2484 = vand.u32 %v451, 4294901760
      %v2485 = vsub.f32 %v451, %v2484
      %2486 = vmatmul.f32.gmra.mxu0 %v2485
      %v2487 = vpop.f32.mrf.mxu0
      %v2488 = vadd.f32 %v2305, %v2487
      %v2489 = vand.u32 %v454, 4294901760
      %v2490 = vsub.f32 %v454, %v2489
      %2491 = vmatmul.f32.gmra.mxu0 %v2490
      %v2492 = vpop.f32.mrf.mxu0
      %v2493 = vadd.f32 %v2309, %v2492
      %v2494 = vand.u32 %v457, 4294901760
      %v2495 = vsub.f32 %v457, %v2494
      %2496 = vmatmul.f32.gmra.mxu0 %v2495
      %v2497 = vpop.f32.mrf.mxu0
      %v2498 = vadd.f32 %v2313, %v2497
      %v2499 = vand.u32 %v460, 4294901760
      %v2500 = vsub.f32 %v460, %v2499
      %2501 = vmatmul.f32.gmra.mxu0 %v2500
      %v2502 = vpop.f32.mrf.mxu0
      %v2503 = vadd.f32 %v2317, %v2502
      %v2504 = vand.u32 %v463, 4294901760
      %v2505 = vsub.f32 %v463, %v2504
      %2506 = vmatmul.f32.gmra.mxu0 %v2505
      %v2507 = vpop.f32.mrf.mxu0
      %v2508 = vadd.f32 %v2321, %v2507
      %v2509 = vand.u32 %v466, 4294901760
      %v2510 = vsub.f32 %v466, %v2509
      %2511 = vmatmul.f32.gmra.mxu0 %v2510
      %v2512 = vpop.f32.mrf.mxu0
      %v2513 = vadd.f32 %v2325, %v2512
      %v2514 = vand.u32 %v469, 4294901760
      %v2515 = vsub.f32 %v469, %v2514
      %2516 = vmatmul.f32.gmra.mxu0 %v2515
      %v2517 = vpop.f32.mrf.mxu0
      %v2518 = vadd.f32 %v2329, %v2517
      %v2519 = vand.u32 %v472, 4294901760
      %v2520 = vsub.f32 %v472, %v2519
      %2521 = vmatmul.f32.gmra.mxu0 %v2520
      %v2522 = vpop.f32.mrf.mxu0
      %v2523 = vadd.f32 %v2333, %v2522
      %v2524 = vand.u32 %v475, 4294901760
      %v2525 = vsub.f32 %v475, %v2524
      %2526 = vmatmul.f32.gmra.mxu0 %v2525
      %v2527 = vpop.f32.mrf.mxu0
      %v2528 = vadd.f32 %v2337, %v2527
      %v2529 = vand.u32 %v478, 4294901760
      %v2530 = vsub.f32 %v478, %v2529
      %2531 = vmatmul.f32.gmra.mxu0 %v2530
      %v2532 = vpop.f32.mrf.mxu0
      %v2533 = vadd.f32 %v2341, %v2532
      %v2534 = vand.u32 %v481, 4294901760
      %v2535 = vsub.f32 %v481, %v2534
      %2536 = vmatmul.f32.gmra.mxu0 %v2535
      %v2537 = vpop.f32.mrf.mxu0
      %v2538 = vadd.f32 %v2345, %v2537
      %v2539 = vand.u32 %v484, 4294901760
      %v2540 = vsub.f32 %v484, %v2539
      %2541 = vmatmul.f32.gmra.mxu0 %v2540
      %v2542 = vpop.f32.mrf.mxu0
      %v2543 = vadd.f32 %v2349, %v2542
      %v2544 = vand.u32 %v487, 4294901760
      %v2545 = vsub.f32 %v487, %v2544
      %2546 = vmatmul.f32.gmra.mxu0 %v2545
      %v2547 = vpop.f32.mrf.mxu0
      %v2548 = vadd.f32 %v2353, %v2547
      %v2549 = vand.u32 %v490, 4294901760
      %v2550 = vsub.f32 %v490, %v2549
      %2551 = vmatmul.f32.gmra.mxu0 %v2550
      %v2552 = vpop.f32.mrf.mxu0
      %v2553 = vadd.f32 %v2357, %v2552
      %v2554 = vand.u32 %v493, 4294901760
      %v2555 = vsub.f32 %v493, %v2554
      %2556 = vmatmul.f32.gmra.mxu0 %v2555
      %v2557 = vpop.f32.mrf.mxu0
      %v2558 = vadd.f32 %v2361, %v2557
      %v2559 = vand.u32 %v496, 4294901760
      %v2560 = vsub.f32 %v496, %v2559
      %2561 = vmatmul.f32.gmra.mxu0 %v2560
      %v2562 = vpop.f32.mrf.mxu0
      %v2563 = vadd.f32 %v2365, %v2562
      %v2564 = vand.u32 %v499, 4294901760
      %v2565 = vsub.f32 %v499, %v2564
      %2566 = vmatmul.f32.gmra.mxu0 %v2565
      %v2567 = vpop.f32.mrf.mxu0
      %v2568 = vadd.f32 %v2369, %v2567
      %v2569 = vand.u32 %v502, 4294901760
      %v2570 = vsub.f32 %v502, %v2569
      %2571 = vmatmul.f32.gmra.mxu0 %v2570
      %v2572 = vpop.f32.mrf.mxu0
      %v2573 = vadd.f32 %v2373, %v2572
      %v2574 = vand.u32 %v505, 4294901760
      %v2575 = vsub.f32 %v505, %v2574
      %2576 = vmatmul.f32.gmra.mxu0 %v2575
      %v2577 = vpop.f32.mrf.mxu0
      %v2578 = vadd.f32 %v2377, %v2577
      %v2579 = vand.u32 %v508, 4294901760
      %v2580 = vsub.f32 %v508, %v2579
      %2581 = vmatmul.f32.gmra.mxu0 %v2580
      %v2582 = vpop.f32.mrf.mxu0
      %v2583 = vadd.f32 %v2381, %v2582
      %v2584 = vand.u32 %v511, 4294901760
      %v2585 = vsub.f32 %v511, %v2584
      %2586 = vmatmul.f32.gmra.mxu0 %v2585
      %v2587 = vpop.f32.mrf.mxu0
      %v2588 = vadd.f32 %v2385, %v2587
      %v2589 = vand.u32 %v514, 4294901760
      %v2590 = vsub.f32 %v514, %v2589
      %2591 = vmatmul.f32.gmra.mxu0 %v2590
      %v2592 = vpop.f32.mrf.mxu0
      %v2593 = vadd.f32 %v2389, %v2592
      %v2594 = vand.u32 %v517, 4294901760
      %v2595 = vsub.f32 %v517, %v2594
      %2596 = vmatmul.f32.gmra.mxu0 %v2595
      %v2597 = vpop.f32.mrf.mxu0
      %v2598 = vadd.f32 %v2393, %v2597
      %v2599 = vand.u32 %v520, 4294901760
      %v2600 = vsub.f32 %v520, %v2599
      %2601 = vmatmul.f32.gmra.mxu0 %v2600
      %v2602 = vpop.f32.mrf.mxu0
      %v2603 = vadd.f32 %v2397, %v2602
      %v2604 = vand.u32 %v523, 4294901760
      %v2605 = vsub.f32 %v523, %v2604
      %2606 = vmatmul.f32.gmra.mxu0 %v2605
      %v2607 = vpop.f32.mrf.mxu0
      %v2608 = vadd.f32 %v2401, %v2607
      %v2609 = vand.u32 %v526, 4294901760
      %v2610 = vsub.f32 %v526, %v2609
      %2611 = vmatmul.f32.gmra.mxu0 %v2610
      %v2612 = vpop.f32.mrf.mxu0
      %v2613 = vadd.f32 %v2405, %v2612
      %v2614 = vand.u32 %v529, 4294901760
      %v2615 = vsub.f32 %v529, %v2614
      %2616 = vmatmul.f32.gmra.mxu0 %v2615
      %v2617 = vpop.f32.mrf.mxu0
      %v2618 = vadd.f32 %v2409, %v2617
      %2619 = vdwg.mxu0
      %v2620 = vand.u32 %v593, 4294901760
      %2621 = vmatpush.xpose.msra.mxu0 %v2620
      %v2622 = vand.u32 %v591, 4294901760
      %2623 = vmatpush.xpose.msra.mxu0 %v2622
      %v2624 = vand.u32 %v589, 4294901760
      %2625 = vmatpush.xpose.msra.mxu0 %v2624
      %v2626 = vand.u32 %v587, 4294901760
      %2627 = vmatpush.xpose.msra.mxu0 %v2626
      %v2628 = vand.u32 %v585, 4294901760
      %2629 = vmatpush.xpose.msra.mxu0 %v2628
      %v2630 = vand.u32 %v583, 4294901760
      %2631 = vmatpush.xpose.msra.mxu0 %v2630
      %v2632 = vand.u32 %v581, 4294901760
      %2633 = vmatpush.xpose.msra.mxu0 %v2632
      %v2634 = vand.u32 %v579, 4294901760
      %2635 = vmatpush.xpose.msra.mxu0 %v2634
      %v2636 = vand.u32 %v577, 4294901760
      %2637 = vmatpush.xpose.msra.mxu0 %v2636
      %v2638 = vand.u32 %v575, 4294901760
      %2639 = vmatpush.xpose.msra.mxu0 %v2638
      %v2640 = vand.u32 %v573, 4294901760
      %2641 = vmatpush.xpose.msra.mxu0 %v2640
      %v2642 = vand.u32 %v571, 4294901760
      %2643 = vmatpush.xpose.msra.mxu0 %v2642
      %v2644 = vand.u32 %v569, 4294901760
      %2645 = vmatpush.xpose.msra.mxu0 %v2644
      %v2646 = vand.u32 %v567, 4294901760
      %2647 = vmatpush.xpose.msra.mxu0 %v2646
      %v2648 = vand.u32 %v565, 4294901760
      %2649 = vmatpush.xpose.msra.mxu0 %v2648
      %v2650 = vand.u32 %v563, 4294901760
      %2651 = vmatpush.xpose.msra.mxu0 %v2650
      %v2652 = vand.u32 %v436, 4294901760
      %v2653 = vsub.f32 %v436, %v2652
      %v2654 = vand.u32 %v2653, 4294901760
      %2655 = vmatmul.f32.gmra.mxu0 %v2654
      %v2656 = vpop.f32.mrf.mxu0
      %v2657 = vadd.f32 %v2463, %v2656
      %v2658 = vand.u32 %v439, 4294901760
      %v2659 = vsub.f32 %v439, %v2658
      %v2660 = vand.u32 %v2659, 4294901760
      %2661 = vmatmul.f32.gmra.mxu0 %v2660
      %v2662 = vpop.f32.mrf.mxu0
      %v2663 = vadd.f32 %v2468, %v2662
      %v2664 = vand.u32 %v442, 4294901760
      %v2665 = vsub.f32 %v442, %v2664
      %v2666 = vand.u32 %v2665, 4294901760
      %2667 = vmatmul.f32.gmra.mxu0 %v2666
      %v2668 = vpop.f32.mrf.mxu0
      %v2669 = vadd.f32 %v2473, %v2668
      %v2670 = vand.u32 %v445, 4294901760
      %v2671 = vsub.f32 %v445, %v2670
      %v2672 = vand.u32 %v2671, 4294901760
      %2673 = vmatmul.f32.gmra.mxu0 %v2672
      %v2674 = vpop.f32.mrf.mxu0
      %v2675 = vadd.f32 %v2478, %v2674
      %v2676 = vand.u32 %v448, 4294901760
      %v2677 = vsub.f32 %v448, %v2676
      %v2678 = vand.u32 %v2677, 4294901760
      %2679 = vmatmul.f32.gmra.mxu0 %v2678
      %v2680 = vpop.f32.mrf.mxu0
      %v2681 = vadd.f32 %v2483, %v2680
      %v2682 = vand.u32 %v451, 4294901760
      %v2683 = vsub.f32 %v451, %v2682
      %v2684 = vand.u32 %v2683, 4294901760
      %2685 = vmatmul.f32.gmra.mxu0 %v2684
      %v2686 = vpop.f32.mrf.mxu0
      %v2687 = vadd.f32 %v2488, %v2686
      %v2688 = vand.u32 %v454, 4294901760
      %v2689 = vsub.f32 %v454, %v2688
      %v2690 = vand.u32 %v2689, 4294901760
      %2691 = vmatmul.f32.gmra.mxu0 %v2690
      %v2692 = vpop.f32.mrf.mxu0
      %v2693 = vadd.f32 %v2493, %v2692
      %v2694 = vand.u32 %v457, 4294901760
      %v2695 = vsub.f32 %v457, %v2694
      %v2696 = vand.u32 %v2695, 4294901760
      %2697 = vmatmul.f32.gmra.mxu0 %v2696
      %v2698 = vpop.f32.mrf.mxu0
      %v2699 = vadd.f32 %v2498, %v2698
      %v2700 = vand.u32 %v460, 4294901760
      %v2701 = vsub.f32 %v460, %v2700
      %v2702 = vand.u32 %v2701, 4294901760
      %2703 = vmatmul.f32.gmra.mxu0 %v2702
      %v2704 = vpop.f32.mrf.mxu0
      %v2705 = vadd.f32 %v2503, %v2704
      %v2706 = vand.u32 %v463, 4294901760
      %v2707 = vsub.f32 %v463, %v2706
      %v2708 = vand.u32 %v2707, 4294901760
      %2709 = vmatmul.f32.gmra.mxu0 %v2708
      %v2710 = vpop.f32.mrf.mxu0
      %v2711 = vadd.f32 %v2508, %v2710
      %v2712 = vand.u32 %v466, 4294901760
      %v2713 = vsub.f32 %v466, %v2712
      %v2714 = vand.u32 %v2713, 4294901760
      %2715 = vmatmul.f32.gmra.mxu0 %v2714
      %v2716 = vpop.f32.mrf.mxu0
      %v2717 = vadd.f32 %v2513, %v2716
      %v2718 = vand.u32 %v469, 4294901760
      %v2719 = vsub.f32 %v469, %v2718
      %v2720 = vand.u32 %v2719, 4294901760
      %2721 = vmatmul.f32.gmra.mxu0 %v2720
      %v2722 = vpop.f32.mrf.mxu0
      %v2723 = vadd.f32 %v2518, %v2722
      %v2724 = vand.u32 %v472, 4294901760
      %v2725 = vsub.f32 %v472, %v2724
      %v2726 = vand.u32 %v2725, 4294901760
      %2727 = vmatmul.f32.gmra.mxu0 %v2726
      %v2728 = vpop.f32.mrf.mxu0
      %v2729 = vadd.f32 %v2523, %v2728
      %v2730 = vand.u32 %v475, 4294901760
      %v2731 = vsub.f32 %v475, %v2730
      %v2732 = vand.u32 %v2731, 4294901760
      %2733 = vmatmul.f32.gmra.mxu0 %v2732
      %v2734 = vpop.f32.mrf.mxu0
      %v2735 = vadd.f32 %v2528, %v2734
      %v2736 = vand.u32 %v478, 4294901760
      %v2737 = vsub.f32 %v478, %v2736
      %v2738 = vand.u32 %v2737, 4294901760
      %2739 = vmatmul.f32.gmra.mxu0 %v2738
      %v2740 = vpop.f32.mrf.mxu0
      %v2741 = vadd.f32 %v2533, %v2740
      %v2742 = vand.u32 %v481, 4294901760
      %v2743 = vsub.f32 %v481, %v2742
      %v2744 = vand.u32 %v2743, 4294901760
      %2745 = vmatmul.f32.gmra.mxu0 %v2744
      %v2746 = vpop.f32.mrf.mxu0
      %v2747 = vadd.f32 %v2538, %v2746
      %v2748 = vand.u32 %v484, 4294901760
      %v2749 = vsub.f32 %v484, %v2748
      %v2750 = vand.u32 %v2749, 4294901760
      %2751 = vmatmul.f32.gmra.mxu0 %v2750
      %v2752 = vpop.f32.mrf.mxu0
      %v2753 = vadd.f32 %v2543, %v2752
      %v2754 = vand.u32 %v487, 4294901760
      %v2755 = vsub.f32 %v487, %v2754
      %v2756 = vand.u32 %v2755, 4294901760
      %2757 = vmatmul.f32.gmra.mxu0 %v2756
      %v2758 = vpop.f32.mrf.mxu0
      %v2759 = vadd.f32 %v2548, %v2758
      %v2760 = vand.u32 %v490, 4294901760
      %v2761 = vsub.f32 %v490, %v2760
      %v2762 = vand.u32 %v2761, 4294901760
      %2763 = vmatmul.f32.gmra.mxu0 %v2762
      %v2764 = vpop.f32.mrf.mxu0
      %v2765 = vadd.f32 %v2553, %v2764
      %v2766 = vand.u32 %v493, 4294901760
      %v2767 = vsub.f32 %v493, %v2766
      %v2768 = vand.u32 %v2767, 4294901760
      %2769 = vmatmul.f32.gmra.mxu0 %v2768
      %v2770 = vpop.f32.mrf.mxu0
      %v2771 = vadd.f32 %v2558, %v2770
      %v2772 = vand.u32 %v496, 4294901760
      %v2773 = vsub.f32 %v496, %v2772
      %v2774 = vand.u32 %v2773, 4294901760
      %2775 = vmatmul.f32.gmra.mxu0 %v2774
      %v2776 = vpop.f32.mrf.mxu0
      %v2777 = vadd.f32 %v2563, %v2776
      %v2778 = vand.u32 %v499, 4294901760
      %v2779 = vsub.f32 %v499, %v2778
      %v2780 = vand.u32 %v2779, 4294901760
      %2781 = vmatmul.f32.gmra.mxu0 %v2780
      %v2782 = vpop.f32.mrf.mxu0
      %v2783 = vadd.f32 %v2568, %v2782
      %v2784 = vand.u32 %v502, 4294901760
      %v2785 = vsub.f32 %v502, %v2784
      %v2786 = vand.u32 %v2785, 4294901760
      %2787 = vmatmul.f32.gmra.mxu0 %v2786
      %v2788 = vpop.f32.mrf.mxu0
      %v2789 = vadd.f32 %v2573, %v2788
      %v2790 = vand.u32 %v505, 4294901760
      %v2791 = vsub.f32 %v505, %v2790
      %v2792 = vand.u32 %v2791, 4294901760
      %2793 = vmatmul.f32.gmra.mxu0 %v2792
      %v2794 = vpop.f32.mrf.mxu0
      %v2795 = vadd.f32 %v2578, %v2794
      %v2796 = vand.u32 %v508, 4294901760
      %v2797 = vsub.f32 %v508, %v2796
      %v2798 = vand.u32 %v2797, 4294901760
      %2799 = vmatmul.f32.gmra.mxu0 %v2798
      %v2800 = vpop.f32.mrf.mxu0
      %v2801 = vadd.f32 %v2583, %v2800
      %v2802 = vand.u32 %v511, 4294901760
      %v2803 = vsub.f32 %v511, %v2802
      %v2804 = vand.u32 %v2803, 4294901760
      %2805 = vmatmul.f32.gmra.mxu0 %v2804
      %v2806 = vpop.f32.mrf.mxu0
      %v2807 = vadd.f32 %v2588, %v2806
      %v2808 = vand.u32 %v514, 4294901760
      %v2809 = vsub.f32 %v514, %v2808
      %v2810 = vand.u32 %v2809, 4294901760
      %2811 = vmatmul.f32.gmra.mxu0 %v2810
      %v2812 = vpop.f32.mrf.mxu0
      %v2813 = vadd.f32 %v2593, %v2812
      %v2814 = vand.u32 %v517, 4294901760
      %v2815 = vsub.f32 %v517, %v2814
      %v2816 = vand.u32 %v2815, 4294901760
      %2817 = vmatmul.f32.gmra.mxu0 %v2816
      %v2818 = vpop.f32.mrf.mxu0
      %v2819 = vadd.f32 %v2598, %v2818
      %v2820 = vand.u32 %v520, 4294901760
      %v2821 = vsub.f32 %v520, %v2820
      %v2822 = vand.u32 %v2821, 4294901760
      %2823 = vmatmul.f32.gmra.mxu0 %v2822
      %v2824 = vpop.f32.mrf.mxu0
      %v2825 = vadd.f32 %v2603, %v2824
      %v2826 = vand.u32 %v523, 4294901760
      %v2827 = vsub.f32 %v523, %v2826
      %v2828 = vand.u32 %v2827, 4294901760
      %2829 = vmatmul.f32.gmra.mxu0 %v2828
      %v2830 = vpop.f32.mrf.mxu0
      %v2831 = vadd.f32 %v2608, %v2830
      %v2832 = vand.u32 %v526, 4294901760
      %v2833 = vsub.f32 %v526, %v2832
      %v2834 = vand.u32 %v2833, 4294901760
      %2835 = vmatmul.f32.gmra.mxu0 %v2834
      %v2836 = vpop.f32.mrf.mxu0
      %v2837 = vadd.f32 %v2613, %v2836
      %v2838 = vand.u32 %v529, 4294901760
      %v2839 = vsub.f32 %v529, %v2838
      %v2840 = vand.u32 %v2839, 4294901760
      %2841 = vmatmul.f32.gmra.mxu0 %v2840
      %v2842 = vpop.f32.mrf.mxu0
      %v2843 = vadd.f32 %v2618, %v2842
      %2844 = vdwg.mxu0
      %v2845 = vand.u32 %v593, 4294901760
      %v2846 = vsub.f32 %v593, %v2845
      %v2847 = vand.u32 %v2846, 4294901760
      %2848 = vmatpush.xpose.msra.mxu0 %v2847
      %v2849 = vand.u32 %v591, 4294901760
      %v2850 = vsub.f32 %v591, %v2849
      %v2851 = vand.u32 %v2850, 4294901760
      %2852 = vmatpush.xpose.msra.mxu0 %v2851
      %v2853 = vand.u32 %v589, 4294901760
      %v2854 = vsub.f32 %v589, %v2853
      %v2855 = vand.u32 %v2854, 4294901760
      %2856 = vmatpush.xpose.msra.mxu0 %v2855
      %v2857 = vand.u32 %v587, 4294901760
      %v2858 = vsub.f32 %v587, %v2857
      %v2859 = vand.u32 %v2858, 4294901760
      %2860 = vmatpush.xpose.msra.mxu0 %v2859
      %v2861 = vand.u32 %v585, 4294901760
      %v2862 = vsub.f32 %v585, %v2861
      %v2863 = vand.u32 %v2862, 4294901760
      %2864 = vmatpush.xpose.msra.mxu0 %v2863
      %v2865 = vand.u32 %v583, 4294901760
      %v2866 = vsub.f32 %v583, %v2865
      %v2867 = vand.u32 %v2866, 4294901760
      %2868 = vmatpush.xpose.msra.mxu0 %v2867
      %v2869 = vand.u32 %v581, 4294901760
      %v2870 = vsub.f32 %v581, %v2869
      %v2871 = vand.u32 %v2870, 4294901760
      %2872 = vmatpush.xpose.msra.mxu0 %v2871
      %v2873 = vand.u32 %v579, 4294901760
      %v2874 = vsub.f32 %v579, %v2873
      %v2875 = vand.u32 %v2874, 4294901760
      %2876 = vmatpush.xpose.msra.mxu0 %v2875
      %v2877 = vand.u32 %v577, 4294901760
      %v2878 = vsub.f32 %v577, %v2877
      %v2879 = vand.u32 %v2878, 4294901760
      %2880 = vmatpush.xpose.msra.mxu0 %v2879
      %v2881 = vand.u32 %v575, 4294901760
      %v2882 = vsub.f32 %v575, %v2881
      %v2883 = vand.u32 %v2882, 4294901760
      %2884 = vmatpush.xpose.msra.mxu0 %v2883
      %v2885 = vand.u32 %v573, 4294901760
      %v2886 = vsub.f32 %v573, %v2885
      %v2887 = vand.u32 %v2886, 4294901760
      %2888 = vmatpush.xpose.msra.mxu0 %v2887
      %v2889 = vand.u32 %v571, 4294901760
      %v2890 = vsub.f32 %v571, %v2889
      %v2891 = vand.u32 %v2890, 4294901760
      %2892 = vmatpush.xpose.msra.mxu0 %v2891
      %v2893 = vand.u32 %v569, 4294901760
      %v2894 = vsub.f32 %v569, %v2893
      %v2895 = vand.u32 %v2894, 4294901760
      %2896 = vmatpush.xpose.msra.mxu0 %v2895
      %v2897 = vand.u32 %v567, 4294901760
      %v2898 = vsub.f32 %v567, %v2897
      %v2899 = vand.u32 %v2898, 4294901760
      %2900 = vmatpush.xpose.msra.mxu0 %v2899
      %v2901 = vand.u32 %v565, 4294901760
      %v2902 = vsub.f32 %v565, %v2901
      %v2903 = vand.u32 %v2902, 4294901760
      %2904 = vmatpush.xpose.msra.mxu0 %v2903
      %v2905 = vand.u32 %v563, 4294901760
      %v2906 = vsub.f32 %v563, %v2905
      %v2907 = vand.u32 %v2906, 4294901760
      %2908 = vmatpush.xpose.msra.mxu0 %v2907
      %v2909 = vand.u32 %v436, 4294901760
      %2910 = vmatmul.f32.gmra.mxu0 %v2909
      %v2911 = vpop.f32.mrf.mxu0
      %v2912 = vadd.f32 %v2657, %v2911
      %v2913 = vand.u32 %v439, 4294901760
      %2914 = vmatmul.f32.gmra.mxu0 %v2913
      %v2915 = vpop.f32.mrf.mxu0
      %v2916 = vadd.f32 %v2663, %v2915
      %v2917 = vand.u32 %v442, 4294901760
      %2918 = vmatmul.f32.gmra.mxu0 %v2917
      %v2919 = vpop.f32.mrf.mxu0
      %v2920 = vadd.f32 %v2669, %v2919
      %v2921 = vand.u32 %v445, 4294901760
      %2922 = vmatmul.f32.gmra.mxu0 %v2921
      %v2923 = vpop.f32.mrf.mxu0
      %v2924 = vadd.f32 %v2675, %v2923
      %v2925 = vand.u32 %v448, 4294901760
      %2926 = vmatmul.f32.gmra.mxu0 %v2925
      %v2927 = vpop.f32.mrf.mxu0
      %v2928 = vadd.f32 %v2681, %v2927
      %v2929 = vand.u32 %v451, 4294901760
      %2930 = vmatmul.f32.gmra.mxu0 %v2929
      %v2931 = vpop.f32.mrf.mxu0
      %v2932 = vadd.f32 %v2687, %v2931
      %v2933 = vand.u32 %v454, 4294901760
      %2934 = vmatmul.f32.gmra.mxu0 %v2933
      %v2935 = vpop.f32.mrf.mxu0
      %v2936 = vadd.f32 %v2693, %v2935
      %v2937 = vand.u32 %v457, 4294901760
      %2938 = vmatmul.f32.gmra.mxu0 %v2937
      %v2939 = vpop.f32.mrf.mxu0
      %v2940 = vadd.f32 %v2699, %v2939
      %v2941 = vand.u32 %v460, 4294901760
      %2942 = vmatmul.f32.gmra.mxu0 %v2941
      %v2943 = vpop.f32.mrf.mxu0
      %v2944 = vadd.f32 %v2705, %v2943
      %v2945 = vand.u32 %v463, 4294901760
      %2946 = vmatmul.f32.gmra.mxu0 %v2945
      %v2947 = vpop.f32.mrf.mxu0
      %v2948 = vadd.f32 %v2711, %v2947
      %v2949 = vand.u32 %v466, 4294901760
      %2950 = vmatmul.f32.gmra.mxu0 %v2949
      %v2951 = vpop.f32.mrf.mxu0
      %v2952 = vadd.f32 %v2717, %v2951
      %v2953 = vand.u32 %v469, 4294901760
      %2954 = vmatmul.f32.gmra.mxu0 %v2953
      %v2955 = vpop.f32.mrf.mxu0
      %v2956 = vadd.f32 %v2723, %v2955
      %v2957 = vand.u32 %v472, 4294901760
      %2958 = vmatmul.f32.gmra.mxu0 %v2957
      %v2959 = vpop.f32.mrf.mxu0
      %v2960 = vadd.f32 %v2729, %v2959
      %v2961 = vand.u32 %v475, 4294901760
      %2962 = vmatmul.f32.gmra.mxu0 %v2961
      %v2963 = vpop.f32.mrf.mxu0
      %v2964 = vadd.f32 %v2735, %v2963
      %v2965 = vand.u32 %v478, 4294901760
      %2966 = vmatmul.f32.gmra.mxu0 %v2965
      %v2967 = vpop.f32.mrf.mxu0
      %v2968 = vadd.f32 %v2741, %v2967
      %v2969 = vand.u32 %v481, 4294901760
      %2970 = vmatmul.f32.gmra.mxu0 %v2969
      %v2971 = vpop.f32.mrf.mxu0
      %v2972 = vadd.f32 %v2747, %v2971
      %v2973 = vand.u32 %v484, 4294901760
      %2974 = vmatmul.f32.gmra.mxu0 %v2973
      %v2975 = vpop.f32.mrf.mxu0
      %v2976 = vadd.f32 %v2753, %v2975
      %v2977 = vand.u32 %v487, 4294901760
      %2978 = vmatmul.f32.gmra.mxu0 %v2977
      %v2979 = vpop.f32.mrf.mxu0
      %v2980 = vadd.f32 %v2759, %v2979
      %v2981 = vand.u32 %v490, 4294901760
      %2982 = vmatmul.f32.gmra.mxu0 %v2981
      %v2983 = vpop.f32.mrf.mxu0
      %v2984 = vadd.f32 %v2765, %v2983
      %v2985 = vand.u32 %v493, 4294901760
      %2986 = vmatmul.f32.gmra.mxu0 %v2985
      %v2987 = vpop.f32.mrf.mxu0
      %v2988 = vadd.f32 %v2771, %v2987
      %v2989 = vand.u32 %v496, 4294901760
      %2990 = vmatmul.f32.gmra.mxu0 %v2989
      %v2991 = vpop.f32.mrf.mxu0
      %v2992 = vadd.f32 %v2777, %v2991
      %v2993 = vand.u32 %v499, 4294901760
      %2994 = vmatmul.f32.gmra.mxu0 %v2993
      %v2995 = vpop.f32.mrf.mxu0
      %v2996 = vadd.f32 %v2783, %v2995
      %v2997 = vand.u32 %v502, 4294901760
      %2998 = vmatmul.f32.gmra.mxu0 %v2997
      %v2999 = vpop.f32.mrf.mxu0
      %v3000 = vadd.f32 %v2789, %v2999
      %v3001 = vand.u32 %v505, 4294901760
      %3002 = vmatmul.f32.gmra.mxu0 %v3001
      %v3003 = vpop.f32.mrf.mxu0
      %v3004 = vadd.f32 %v2795, %v3003
      %v3005 = vand.u32 %v508, 4294901760
      %3006 = vmatmul.f32.gmra.mxu0 %v3005
      %v3007 = vpop.f32.mrf.mxu0
      %v3008 = vadd.f32 %v2801, %v3007
      %v3009 = vand.u32 %v511, 4294901760
      %3010 = vmatmul.f32.gmra.mxu0 %v3009
      %v3011 = vpop.f32.mrf.mxu0
      %v3012 = vadd.f32 %v2807, %v3011
      %v3013 = vand.u32 %v514, 4294901760
      %3014 = vmatmul.f32.gmra.mxu0 %v3013
      %v3015 = vpop.f32.mrf.mxu0
      %v3016 = vadd.f32 %v2813, %v3015
      %v3017 = vand.u32 %v517, 4294901760
      %3018 = vmatmul.f32.gmra.mxu0 %v3017
      %v3019 = vpop.f32.mrf.mxu0
      %v3020 = vadd.f32 %v2819, %v3019
      %v3021 = vand.u32 %v520, 4294901760
      %3022 = vmatmul.f32.gmra.mxu0 %v3021
      %v3023 = vpop.f32.mrf.mxu0
      %v3024 = vadd.f32 %v2825, %v3023
      %v3025 = vand.u32 %v523, 4294901760
      %3026 = vmatmul.f32.gmra.mxu0 %v3025
      %v3027 = vpop.f32.mrf.mxu0
      %v3028 = vadd.f32 %v2831, %v3027
      %v3029 = vand.u32 %v526, 4294901760
      %3030 = vmatmul.f32.gmra.mxu0 %v3029
      %v3031 = vpop.f32.mrf.mxu0
      %v3032 = vadd.f32 %v2837, %v3031
      %v3033 = vand.u32 %v529, 4294901760
      %3034 = vmatmul.f32.gmra.mxu0 %v3033
      %v3035 = vpop.f32.mrf.mxu0
      %v3036 = vadd.f32 %v2843, %v3035
      %3037 = vdwg.mxu0
      %v3038 = vand.u32 %v593, 4294901760
      %3039 = vmatpush.xpose.msra.mxu0 %v3038
      %v3040 = vand.u32 %v591, 4294901760
      %3041 = vmatpush.xpose.msra.mxu0 %v3040
      %v3042 = vand.u32 %v589, 4294901760
      %3043 = vmatpush.xpose.msra.mxu0 %v3042
      %v3044 = vand.u32 %v587, 4294901760
      %3045 = vmatpush.xpose.msra.mxu0 %v3044
      %v3046 = vand.u32 %v585, 4294901760
      %3047 = vmatpush.xpose.msra.mxu0 %v3046
      %v3048 = vand.u32 %v583, 4294901760
      %3049 = vmatpush.xpose.msra.mxu0 %v3048
      %v3050 = vand.u32 %v581, 4294901760
      %3051 = vmatpush.xpose.msra.mxu0 %v3050
      %v3052 = vand.u32 %v579, 4294901760
      %3053 = vmatpush.xpose.msra.mxu0 %v3052
      %v3054 = vand.u32 %v577, 4294901760
      %3055 = vmatpush.xpose.msra.mxu0 %v3054
      %v3056 = vand.u32 %v575, 4294901760
      %3057 = vmatpush.xpose.msra.mxu0 %v3056
      %v3058 = vand.u32 %v573, 4294901760
      %3059 = vmatpush.xpose.msra.mxu0 %v3058
      %v3060 = vand.u32 %v571, 4294901760
      %3061 = vmatpush.xpose.msra.mxu0 %v3060
      %v3062 = vand.u32 %v569, 4294901760
      %3063 = vmatpush.xpose.msra.mxu0 %v3062
      %v3064 = vand.u32 %v567, 4294901760
      %3065 = vmatpush.xpose.msra.mxu0 %v3064
      %v3066 = vand.u32 %v565, 4294901760
      %3067 = vmatpush.xpose.msra.mxu0 %v3066
      %v3068 = vand.u32 %v563, 4294901760
      %3069 = vmatpush.xpose.msra.mxu0 %v3068
      %v3070 = vand.u32 %v436, 4294901760
      %3071 = vmatmul.f32.gmra.mxu0 %v3070
      %v3072 = vpop.f32.mrf.mxu0
      %v3073 = vadd.f32 %v2912, %v3072
      %v3074 = vand.u32 %v439, 4294901760
      %3075 = vmatmul.f32.gmra.mxu0 %v3074
      %v3076 = vpop.f32.mrf.mxu0
      %v3077 = vadd.f32 %v2916, %v3076
      %v3078 = vand.u32 %v442, 4294901760
      %3079 = vmatmul.f32.gmra.mxu0 %v3078
      %v3080 = vpop.f32.mrf.mxu0
      %v3081 = vadd.f32 %v2920, %v3080
      %v3082 = vand.u32 %v445, 4294901760
      %3083 = vmatmul.f32.gmra.mxu0 %v3082
      %v3084 = vpop.f32.mrf.mxu0
      %v3085 = vadd.f32 %v2924, %v3084
      %v3086 = vand.u32 %v448, 4294901760
      %3087 = vmatmul.f32.gmra.mxu0 %v3086
      %v3088 = vpop.f32.mrf.mxu0
      %v3089 = vadd.f32 %v2928, %v3088
      %v3090 = vand.u32 %v451, 4294901760
      %3091 = vmatmul.f32.gmra.mxu0 %v3090
      %v3092 = vpop.f32.mrf.mxu0
      %v3093 = vadd.f32 %v2932, %v3092
      %v3094 = vand.u32 %v454, 4294901760
      %3095 = vmatmul.f32.gmra.mxu0 %v3094
      %v3096 = vpop.f32.mrf.mxu0
      %v3097 = vadd.f32 %v2936, %v3096
      %v3098 = vand.u32 %v457, 4294901760
      %3099 = vmatmul.f32.gmra.mxu0 %v3098
      %v3100 = vpop.f32.mrf.mxu0
      %v3101 = vadd.f32 %v2940, %v3100
      %v3102 = vand.u32 %v460, 4294901760
      %3103 = vmatmul.f32.gmra.mxu0 %v3102
      %v3104 = vpop.f32.mrf.mxu0
      %v3105 = vadd.f32 %v2944, %v3104
      %v3106 = vand.u32 %v463, 4294901760
      %3107 = vmatmul.f32.gmra.mxu0 %v3106
      %v3108 = vpop.f32.mrf.mxu0
      %v3109 = vadd.f32 %v2948, %v3108
      %v3110 = vand.u32 %v466, 4294901760
      %3111 = vmatmul.f32.gmra.mxu0 %v3110
      %v3112 = vpop.f32.mrf.mxu0
      %v3113 = vadd.f32 %v2952, %v3112
      %v3114 = vand.u32 %v469, 4294901760
      %3115 = vmatmul.f32.gmra.mxu0 %v3114
      %v3116 = vpop.f32.mrf.mxu0
      %v3117 = vadd.f32 %v2956, %v3116
      %v3118 = vand.u32 %v472, 4294901760
      %3119 = vmatmul.f32.gmra.mxu0 %v3118
      %v3120 = vpop.f32.mrf.mxu0
      %v3121 = vadd.f32 %v2960, %v3120
      %v3122 = vand.u32 %v475, 4294901760
      %3123 = vmatmul.f32.gmra.mxu0 %v3122
      %v3124 = vpop.f32.mrf.mxu0
      %v3125 = vadd.f32 %v2964, %v3124
      %v3126 = vand.u32 %v478, 4294901760
      %3127 = vmatmul.f32.gmra.mxu0 %v3126
      %v3128 = vpop.f32.mrf.mxu0
      %v3129 = vadd.f32 %v2968, %v3128
      %v3130 = vand.u32 %v481, 4294901760
      %3131 = vmatmul.f32.gmra.mxu0 %v3130
      %v3132 = vpop.f32.mrf.mxu0
      %v3133 = vadd.f32 %v2972, %v3132
      %v3134 = vand.u32 %v484, 4294901760
      %3135 = vmatmul.f32.gmra.mxu0 %v3134
      %v3136 = vpop.f32.mrf.mxu0
      %v3137 = vadd.f32 %v2976, %v3136
      %v3138 = vand.u32 %v487, 4294901760
      %3139 = vmatmul.f32.gmra.mxu0 %v3138
      %v3140 = vpop.f32.mrf.mxu0
      %v3141 = vadd.f32 %v2980, %v3140
      %v3142 = vand.u32 %v490, 4294901760
      %3143 = vmatmul.f32.gmra.mxu0 %v3142
      %v3144 = vpop.f32.mrf.mxu0
      %v3145 = vadd.f32 %v2984, %v3144
      %v3146 = vand.u32 %v493, 4294901760
      %3147 = vmatmul.f32.gmra.mxu0 %v3146
      %v3148 = vpop.f32.mrf.mxu0
      %v3149 = vadd.f32 %v2988, %v3148
      %v3150 = vand.u32 %v496, 4294901760
      %3151 = vmatmul.f32.gmra.mxu0 %v3150
      %v3152 = vpop.f32.mrf.mxu0
      %v3153 = vadd.f32 %v2992, %v3152
      %v3154 = vand.u32 %v499, 4294901760
      %3155 = vmatmul.f32.gmra.mxu0 %v3154
      %v3156 = vpop.f32.mrf.mxu0
      %v3157 = vadd.f32 %v2996, %v3156
      %v3158 = vand.u32 %v502, 4294901760
      %3159 = vmatmul.f32.gmra.mxu0 %v3158
      %v3160 = vpop.f32.mrf.mxu0
      %v3161 = vadd.f32 %v3000, %v3160
      %v3162 = vand.u32 %v505, 4294901760
      %3163 = vmatmul.f32.gmra.mxu0 %v3162
      %v3164 = vpop.f32.mrf.mxu0
      %v3165 = vadd.f32 %v3004, %v3164
      %v3166 = vand.u32 %v508, 4294901760
      %3167 = vmatmul.f32.gmra.mxu0 %v3166
      %v3168 = vpop.f32.mrf.mxu0
      %v3169 = vadd.f32 %v3008, %v3168
      %v3170 = vand.u32 %v511, 4294901760
      %3171 = vmatmul.f32.gmra.mxu0 %v3170
      %v3172 = vpop.f32.mrf.mxu0
      %v3173 = vadd.f32 %v3012, %v3172
      %v3174 = vand.u32 %v514, 4294901760
      %3175 = vmatmul.f32.gmra.mxu0 %v3174
      %v3176 = vpop.f32.mrf.mxu0
      %v3177 = vadd.f32 %v3016, %v3176
      %v3178 = vand.u32 %v517, 4294901760
      %3179 = vmatmul.f32.gmra.mxu0 %v3178
      %v3180 = vpop.f32.mrf.mxu0
      %v3181 = vadd.f32 %v3020, %v3180
      %v3182 = vand.u32 %v520, 4294901760
      %3183 = vmatmul.f32.gmra.mxu0 %v3182
      %v3184 = vpop.f32.mrf.mxu0
      %v3185 = vadd.f32 %v3024, %v3184
      %v3186 = vand.u32 %v523, 4294901760
      %3187 = vmatmul.f32.gmra.mxu0 %v3186
      %v3188 = vpop.f32.mrf.mxu0
      %v3189 = vadd.f32 %v3028, %v3188
      %v3190 = vand.u32 %v526, 4294901760
      %3191 = vmatmul.f32.gmra.mxu0 %v3190
      %v3192 = vpop.f32.mrf.mxu0
      %v3193 = vadd.f32 %v3032, %v3192
      %v3194 = vand.u32 %v529, 4294901760
      %3195 = vmatmul.f32.gmra.mxu0 %v3194
      %v3196 = vpop.f32.mrf.mxu0
      %v3197 = vadd.f32 %v3036, %v3196
      %3198 = vdwg.mxu0
      %v3199 = vmul.f32 %v1771, 1.442695
      %v3200 = vpow.pop %v3199
      %v3201 = vmul.f32 %v3073, 1.442695
      %v3202 = vpow.pop %v3201
      %v3203 = vmul.f32 %v1775, 1.442695
      %v3204 = vpow.pop %v3203
      %v3205 = vmul.f32 %v3077, 1.442695
      %v3206 = vpow.pop %v3205
      %v3207 = vmul.f32 %v1779, 1.442695
      %v3208 = vpow.pop %v3207
      %v3209 = vmul.f32 %v3081, 1.442695
      %v3210 = vpow.pop %v3209
      %v3211 = vmul.f32 %v1783, 1.442695
      %v3212 = vpow.pop %v3211
      %v3213 = vmul.f32 %v3085, 1.442695
      %v3214 = vpow.pop %v3213
      %v3215 = vmul.f32 %v1787, 1.442695
      %v3216 = vpow.pop %v3215
      %v3217 = vmul.f32 %v3089, 1.442695
      %v3218 = vpow.pop %v3217
      %v3219 = vmul.f32 %v1791, 1.442695
      %v3220 = vpow.pop %v3219
      %v3221 = vmul.f32 %v3093, 1.442695
      %v3222 = vpow.pop %v3221
      %v3223 = vmul.f32 %v1795, 1.442695
      %v3224 = vpow.pop %v3223
      %v3225 = vmul.f32 %v3097, 1.442695
      %v3226 = vpow.pop %v3225
      %v3227 = vmul.f32 %v1799, 1.442695
      %v3228 = vpow.pop %v3227
      %v3229 = vmul.f32 %v3101, 1.442695
      %v3230 = vpow.pop %v3229
      %v3231 = vmul.f32 %v1803, 1.442695
      %v3232 = vpow.pop %v3231
      %v3233 = vmul.f32 %v3105, 1.442695
      %v3234 = vpow.pop %v3233
      %v3235 = vmul.f32 %v1807, 1.442695
      %v3236 = vpow.pop %v3235
      %v3237 = vmul.f32 %v3109, 1.442695
      %v3238 = vpow.pop %v3237
      %v3239 = vmul.f32 %v1811, 1.442695
      %v3240 = vpow.pop %v3239
      %v3241 = vmul.f32 %v3113, 1.442695
      %v3242 = vpow.pop %v3241
      %v3243 = vmul.f32 %v1815, 1.442695
      %v3244 = vpow.pop %v3243
      %v3245 = vmul.f32 %v3117, 1.442695
      %v3246 = vpow.pop %v3245
      %v3247 = vmul.f32 %v1819, 1.442695
      %v3248 = vpow.pop %v3247
      %v3249 = vmul.f32 %v3121, 1.442695
      %v3250 = vpow.pop %v3249
      %v3251 = vmul.f32 %v1823, 1.442695
      %v3252 = vpow.pop %v3251
      %v3253 = vmul.f32 %v3125, 1.442695
      %v3254 = vpow.pop %v3253
      %v3255 = vmul.f32 %v1827, 1.442695
      %v3256 = vpow.pop %v3255
      %v3257 = vmul.f32 %v3129, 1.442695
      %v3258 = vpow.pop %v3257
      %v3259 = vmul.f32 %v1831, 1.442695
      %v3260 = vpow.pop %v3259
      %v3261 = vmul.f32 %v3133, 1.442695
      %v3262 = vpow.pop %v3261
      %v3263 = vmul.f32 %v1835, 1.442695
      %v3264 = vpow.pop %v3263
      %v3265 = vmul.f32 %v3137, 1.442695
      %v3266 = vpow.pop %v3265
      %v3267 = vmul.f32 %v1839, 1.442695
      %v3268 = vpow.pop %v3267
      %v3269 = vmul.f32 %v3141, 1.442695
      %v3270 = vpow.pop %v3269
      %v3271 = vmul.f32 %v1843, 1.442695
      %v3272 = vpow.pop %v3271
      %v3273 = vmul.f32 %v3145, 1.442695
      %v3274 = vpow.pop %v3273
      %v3275 = vmul.f32 %v1847, 1.442695
      %v3276 = vpow.pop %v3275
      %v3277 = vmul.f32 %v3149, 1.442695
      %v3278 = vpow.pop %v3277
      %v3279 = vmul.f32 %v1851, 1.442695
      %v3280 = vpow.pop %v3279
      %v3281 = vmul.f32 %v3153, 1.442695
      %v3282 = vpow.pop %v3281
      %v3283 = vmul.f32 %v1855, 1.442695
      %v3284 = vpow.pop %v3283
      %v3285 = vmul.f32 %v3157, 1.442695
      %v3286 = vpow.pop %v3285
      %v3287 = vmul.f32 %v1859, 1.442695
      %v3288 = vpow.pop %v3287
      %v3289 = vmul.f32 %v3161, 1.442695
      %v3290 = vpow.pop %v3289
      %v3291 = vmul.f32 %v1863, 1.442695
      %v3292 = vpow.pop %v3291
      %v3293 = vmul.f32 %v3165, 1.442695
      %v3294 = vpow.pop %v3293
      %v3295 = vmul.f32 %v1867, 1.442695
      %v3296 = vpow.pop %v3295
      %v3297 = vmul.f32 %v3169, 1.442695
      %v3298 = vpow.pop %v3297
      %v3299 = vmul.f32 %v1871, 1.442695
      %v3300 = vpow.pop %v3299
      %v3301 = vmul.f32 %v3173, 1.442695
      %v3302 = vpow.pop %v3301
      %v3303 = vmul.f32 %v1875, 1.442695
      %v3304 = vpow.pop %v3303
      %v3305 = vmul.f32 %v3177, 1.442695
      %v3306 = vpow.pop %v3305
      %v3307 = vmul.f32 %v1879, 1.442695
      %v3308 = vpow.pop %v3307
      %v3309 = vmul.f32 %v3181, 1.442695
      %v3310 = vpow.pop %v3309
      %v3311 = vmul.f32 %v1883, 1.442695
      %v3312 = vpow.pop %v3311
      %v3313 = vmul.f32 %v3185, 1.442695
      %v3314 = vpow.pop %v3313
      %v3315 = vmul.f32 %v1887, 1.442695
      %v3316 = vpow.pop %v3315
      %v3317 = vmul.f32 %v3189, 1.442695
      %v3318 = vpow.pop %v3317
      %v3319 = vmul.f32 %v1891, 1.442695
      %v3320 = vpow.pop %v3319
      %v3321 = vmul.f32 %v3193, 1.442695
      %v3322 = vpow.pop %v3321
      %v3323 = vmul.f32 %v1895, 1.442695
      %v3324 = vpow.pop %v3323
      %v3325 = vmul.f32 %v3197, 1.442695
      %v3326 = vpow.pop %v3325
      %3327 = vrot.lane.b32.xlu0 %v306, 108
      %v3328 = vpop.permute.xlu0 %3327
      %3329 = vrot.lane.b32.xlu0 %v307, 108
      %v3330 = vpop.permute.xlu0 %3329
      %3331 = vrot.lane.b32.xlu0 %v308, 108
      %v3332 = vpop.permute.xlu0 %3331
      %3333 = vrot.lane.b32.xlu0 %v309, 108
      %v3334 = vpop.permute.xlu0 %3333
      %3335 = vrot.lane.b32.xlu0 %v310, 108
      %v3336 = vpop.permute.xlu0 %3335
      %3337 = vrot.lane.b32.xlu0 %v311, 108
      %v3338 = vpop.permute.xlu0 %3337
      %3339 = vrot.lane.b32.xlu0 %v312, 108
      %v3340 = vpop.permute.xlu0 %3339
      %3341 = vrot.lane.b32.xlu0 %v313, 108
      %v3342 = vpop.permute.xlu0 %3341
      %3343 = vrot.lane.b32.xlu0 %v314, 108
      %v3344 = vpop.permute.xlu0 %3343
      %3345 = vrot.lane.b32.xlu0 %v315, 108
      %v3346 = vpop.permute.xlu0 %3345
      %3347 = vrot.lane.b32.xlu0 %v316, 108
      %v3348 = vpop.permute.xlu0 %3347
      %3349 = vrot.lane.b32.xlu0 %v317, 108
      %v3350 = vpop.permute.xlu0 %3349
      %3351 = vrot.lane.b32.xlu0 %v318, 108
      %v3352 = vpop.permute.xlu0 %3351
      %3353 = vrot.lane.b32.xlu0 %v319, 108
      %v3354 = vpop.permute.xlu0 %3353
      %3355 = vrot.lane.b32.xlu0 %v320, 108
      %v3356 = vpop.permute.xlu0 %3355
      %3357 = vrot.lane.b32.xlu0 %v321, 108
      %v3358 = vpop.permute.xlu0 %3357
      %3359 = vrot.lane.b32.xlu0 %v322, 108
      %v3360 = vpop.permute.xlu0 %3359
      %3361 = vrot.lane.b32.xlu0 %v323, 108
      %v3362 = vpop.permute.xlu0 %3361
      %3363 = vrot.lane.b32.xlu0 %v324, 108
      %v3364 = vpop.permute.xlu0 %3363
      %3365 = vrot.lane.b32.xlu0 %v325, 108
      %v3366 = vpop.permute.xlu0 %3365
      %3367 = vrot.lane.b32.xlu0 %v326, 108
      %v3368 = vpop.permute.xlu0 %3367
      %3369 = vrot.lane.b32.xlu0 %v327, 108
      %v3370 = vpop.permute.xlu0 %3369
      %3371 = vrot.lane.b32.xlu0 %v328, 108
      %v3372 = vpop.permute.xlu0 %3371
      %3373 = vrot.lane.b32.xlu0 %v329, 108
      %v3374 = vpop.permute.xlu0 %3373
      %3375 = vrot.lane.b32.xlu0 %v330, 108
      %v3376 = vpop.permute.xlu0 %3375
      %3377 = vrot.lane.b32.xlu0 %v331, 108
      %v3378 = vpop.permute.xlu0 %3377
      %3379 = vrot.lane.b32.xlu0 %v332, 108
      %v3380 = vpop.permute.xlu0 %3379
      %3381 = vrot.lane.b32.xlu0 %v333, 108
      %v3382 = vpop.permute.xlu0 %3381
      %3383 = vrot.lane.b32.xlu0 %v334, 108
      %v3384 = vpop.permute.xlu0 %3383
      %3385 = vrot.lane.b32.xlu0 %v335, 108
      %v3386 = vpop.permute.xlu0 %3385
      %3387 = vrot.lane.b32.xlu0 %v336, 108
      %v3388 = vpop.permute.xlu0 %3387
      %3389 = vrot.lane.b32.xlu0 %v337, 108
      %v3390 = vpop.permute.xlu0 %3389
      %3423 = vmatpush.msra.mxu0 %v3358
      %3424 = vmatpush.msra.mxu0 %v3356
      %3425 = vmatpush.msra.mxu0 %v3354
      %3426 = vmatpush.msra.mxu0 %v3352
      %3427 = vmatpush.msra.mxu0 %v3350
      %3428 = vmatpush.msra.mxu0 %v3348
      %3429 = vmatpush.msra.mxu0 %v3346
      %3430 = vmatpush.msra.mxu0 %v3344
      %3431 = vmatpush.msra.mxu0 %v3342
      %3432 = vmatpush.msra.mxu0 %v3340
      %3433 = vmatpush.msra.mxu0 %v3338
      %3434 = vmatpush.msra.mxu0 %v3336
      %3435 = vmatpush.msra.mxu0 %v3334
      %3436 = vmatpush.msra.mxu0 %v3332
      %3437 = vmatpush.msra.mxu0 %v3330
      %3438 = vmatpush.msra.mxu0 %v3328
      %3439 = vmatmul.f32.gmra.mxu0 %v3200
      %v3440 = vpop.f32.mrf.mxu0
      %v3441 = vadd.f32 0.0, %v3440
      %3442 = vmatmul.f32.gmra.mxu0 %v3204
      %v3443 = vpop.f32.mrf.mxu0
      %v3444 = vadd.f32 0.0, %v3443
      %3445 = vmatmul.f32.gmra.mxu0 %v3208
      %v3446 = vpop.f32.mrf.mxu0
      %v3447 = vadd.f32 0.0, %v3446
      %3448 = vmatmul.f32.gmra.mxu0 %v3212
      %v3449 = vpop.f32.mrf.mxu0
      %v3450 = vadd.f32 0.0, %v3449
      %3451 = vmatmul.f32.gmra.mxu0 %v3216
      %v3452 = vpop.f32.mrf.mxu0
      %v3453 = vadd.f32 0.0, %v3452
      %3454 = vmatmul.f32.gmra.mxu0 %v3220
      %v3455 = vpop.f32.mrf.mxu0
      %v3456 = vadd.f32 0.0, %v3455
      %3457 = vmatmul.f32.gmra.mxu0 %v3224
      %v3458 = vpop.f32.mrf.mxu0
      %v3459 = vadd.f32 0.0, %v3458
      %3460 = vmatmul.f32.gmra.mxu0 %v3228
      %v3461 = vpop.f32.mrf.mxu0
      %v3462 = vadd.f32 0.0, %v3461
      %3463 = vmatmul.f32.gmra.mxu0 %v3232
      %v3464 = vpop.f32.mrf.mxu0
      %v3465 = vadd.f32 0.0, %v3464
      %3466 = vmatmul.f32.gmra.mxu0 %v3236
      %v3467 = vpop.f32.mrf.mxu0
      %v3468 = vadd.f32 0.0, %v3467
      %3469 = vmatmul.f32.gmra.mxu0 %v3240
      %v3470 = vpop.f32.mrf.mxu0
      %v3471 = vadd.f32 0.0, %v3470
      %3472 = vmatmul.f32.gmra.mxu0 %v3244
      %v3473 = vpop.f32.mrf.mxu0
      %v3474 = vadd.f32 0.0, %v3473
      %3475 = vmatmul.f32.gmra.mxu0 %v3248
      %v3476 = vpop.f32.mrf.mxu0
      %v3477 = vadd.f32 0.0, %v3476
      %3478 = vmatmul.f32.gmra.mxu0 %v3252
      %v3479 = vpop.f32.mrf.mxu0
      %v3480 = vadd.f32 0.0, %v3479
      %3481 = vmatmul.f32.gmra.mxu0 %v3256
      %v3482 = vpop.f32.mrf.mxu0
      %v3483 = vadd.f32 0.0, %v3482
      %3484 = vmatmul.f32.gmra.mxu0 %v3260
      %v3485 = vpop.f32.mrf.mxu0
      %v3486 = vadd.f32 0.0, %v3485
      %3487 = vmatmul.f32.gmra.mxu0 %v3264
      %v3488 = vpop.f32.mrf.mxu0
      %v3489 = vadd.f32 0.0, %v3488
      %3490 = vmatmul.f32.gmra.mxu0 %v3268
      %v3491 = vpop.f32.mrf.mxu0
      %v3492 = vadd.f32 0.0, %v3491
      %3493 = vmatmul.f32.gmra.mxu0 %v3272
      %v3494 = vpop.f32.mrf.mxu0
      %v3495 = vadd.f32 0.0, %v3494
      %3496 = vmatmul.f32.gmra.mxu0 %v3276
      %v3497 = vpop.f32.mrf.mxu0
      %v3498 = vadd.f32 0.0, %v3497
      %3499 = vmatmul.f32.gmra.mxu0 %v3280
      %v3500 = vpop.f32.mrf.mxu0
      %v3501 = vadd.f32 0.0, %v3500
      %3502 = vmatmul.f32.gmra.mxu0 %v3284
      %v3503 = vpop.f32.mrf.mxu0
      %v3504 = vadd.f32 0.0, %v3503
      %3505 = vmatmul.f32.gmra.mxu0 %v3288
      %v3506 = vpop.f32.mrf.mxu0
      %v3507 = vadd.f32 0.0, %v3506
      %3508 = vmatmul.f32.gmra.mxu0 %v3292
      %v3509 = vpop.f32.mrf.mxu0
      %v3510 = vadd.f32 0.0, %v3509
      %3511 = vmatmul.f32.gmra.mxu0 %v3296
      %v3512 = vpop.f32.mrf.mxu0
      %v3513 = vadd.f32 0.0, %v3512
      %3514 = vmatmul.f32.gmra.mxu0 %v3300
      %v3515 = vpop.f32.mrf.mxu0
      %v3516 = vadd.f32 0.0, %v3515
      %3517 = vmatmul.f32.gmra.mxu0 %v3304
      %v3518 = vpop.f32.mrf.mxu0
      %v3519 = vadd.f32 0.0, %v3518
      %3520 = vmatmul.f32.gmra.mxu0 %v3308
      %v3521 = vpop.f32.mrf.mxu0
      %v3522 = vadd.f32 0.0, %v3521
      %3523 = vmatmul.f32.gmra.mxu0 %v3312
      %v3524 = vpop.f32.mrf.mxu0
      %v3525 = vadd.f32 0.0, %v3524
      %3526 = vmatmul.f32.gmra.mxu0 %v3316
      %v3527 = vpop.f32.mrf.mxu0
      %v3528 = vadd.f32 0.0, %v3527
      %3529 = vmatmul.f32.gmra.mxu0 %v3320
      %v3530 = vpop.f32.mrf.mxu0
      %v3531 = vadd.f32 0.0, %v3530
      %3532 = vmatmul.f32.gmra.mxu0 %v3324
      %v3533 = vpop.f32.mrf.mxu0
      %v3534 = vadd.f32 0.0, %v3533
      %3535 = vdwg.mxu0
      %3536 = vmatpush.msra.mxu0 %v3390
      %3537 = vmatpush.msra.mxu0 %v3388
      %3538 = vmatpush.msra.mxu0 %v3386
      %3539 = vmatpush.msra.mxu0 %v3384
      %3540 = vmatpush.msra.mxu0 %v3382
      %3541 = vmatpush.msra.mxu0 %v3380
      %3542 = vmatpush.msra.mxu0 %v3378
      %3543 = vmatpush.msra.mxu0 %v3376
      %3544 = vmatpush.msra.mxu0 %v3374
      %3545 = vmatpush.msra.mxu0 %v3372
      %3546 = vmatpush.msra.mxu0 %v3370
      %3547 = vmatpush.msra.mxu0 %v3368
      %3548 = vmatpush.msra.mxu0 %v3366
      %3549 = vmatpush.msra.mxu0 %v3364
      %3550 = vmatpush.msra.mxu0 %v3362
      %3551 = vmatpush.msra.mxu0 %v3360
      %3552 = vmatmul.f32.gmra.mxu0 %v3202
      %v3553 = vpop.f32.mrf.mxu0
      %v3554 = vadd.f32 %v3441, %v3553
      %3555 = vmatmul.f32.gmra.mxu0 %v3206
      %v3556 = vpop.f32.mrf.mxu0
      %v3557 = vadd.f32 %v3444, %v3556
      %3558 = vmatmul.f32.gmra.mxu0 %v3210
      %v3559 = vpop.f32.mrf.mxu0
      %v3560 = vadd.f32 %v3447, %v3559
      %3561 = vmatmul.f32.gmra.mxu0 %v3214
      %v3562 = vpop.f32.mrf.mxu0
      %v3563 = vadd.f32 %v3450, %v3562
      %3564 = vmatmul.f32.gmra.mxu0 %v3218
      %v3565 = vpop.f32.mrf.mxu0
      %v3566 = vadd.f32 %v3453, %v3565
      %3567 = vmatmul.f32.gmra.mxu0 %v3222
      %v3568 = vpop.f32.mrf.mxu0
      %v3569 = vadd.f32 %v3456, %v3568
      %3570 = vmatmul.f32.gmra.mxu0 %v3226
      %v3571 = vpop.f32.mrf.mxu0
      %v3572 = vadd.f32 %v3459, %v3571
      %3573 = vmatmul.f32.gmra.mxu0 %v3230
      %v3574 = vpop.f32.mrf.mxu0
      %v3575 = vadd.f32 %v3462, %v3574
      %3576 = vmatmul.f32.gmra.mxu0 %v3234
      %v3577 = vpop.f32.mrf.mxu0
      %v3578 = vadd.f32 %v3465, %v3577
      %3579 = vmatmul.f32.gmra.mxu0 %v3238
      %v3580 = vpop.f32.mrf.mxu0
      %v3581 = vadd.f32 %v3468, %v3580
      %3582 = vmatmul.f32.gmra.mxu0 %v3242
      %v3583 = vpop.f32.mrf.mxu0
      %v3584 = vadd.f32 %v3471, %v3583
      %3585 = vmatmul.f32.gmra.mxu0 %v3246
      %v3586 = vpop.f32.mrf.mxu0
      %v3587 = vadd.f32 %v3474, %v3586
      %3588 = vmatmul.f32.gmra.mxu0 %v3250
      %v3589 = vpop.f32.mrf.mxu0
      %v3590 = vadd.f32 %v3477, %v3589
      %3591 = vmatmul.f32.gmra.mxu0 %v3254
      %v3592 = vpop.f32.mrf.mxu0
      %v3593 = vadd.f32 %v3480, %v3592
      %3594 = vmatmul.f32.gmra.mxu0 %v3258
      %v3595 = vpop.f32.mrf.mxu0
      %v3596 = vadd.f32 %v3483, %v3595
      %3597 = vmatmul.f32.gmra.mxu0 %v3262
      %v3598 = vpop.f32.mrf.mxu0
      %v3599 = vadd.f32 %v3486, %v3598
      %3600 = vmatmul.f32.gmra.mxu0 %v3266
      %v3601 = vpop.f32.mrf.mxu0
      %v3602 = vadd.f32 %v3489, %v3601
      %3603 = vmatmul.f32.gmra.mxu0 %v3270
      %v3604 = vpop.f32.mrf.mxu0
      %v3605 = vadd.f32 %v3492, %v3604
      %3606 = vmatmul.f32.gmra.mxu0 %v3274
      %v3607 = vpop.f32.mrf.mxu0
      %v3608 = vadd.f32 %v3495, %v3607
      %3609 = vmatmul.f32.gmra.mxu0 %v3278
      %v3610 = vpop.f32.mrf.mxu0
      %v3611 = vadd.f32 %v3498, %v3610
      %3612 = vmatmul.f32.gmra.mxu0 %v3282
      %v3613 = vpop.f32.mrf.mxu0
      %v3614 = vadd.f32 %v3501, %v3613
      %3615 = vmatmul.f32.gmra.mxu0 %v3286
      %v3616 = vpop.f32.mrf.mxu0
      %v3617 = vadd.f32 %v3504, %v3616
      %3618 = vmatmul.f32.gmra.mxu0 %v3290
      %v3619 = vpop.f32.mrf.mxu0
      %v3620 = vadd.f32 %v3507, %v3619
      %3621 = vmatmul.f32.gmra.mxu0 %v3294
      %v3622 = vpop.f32.mrf.mxu0
      %v3623 = vadd.f32 %v3510, %v3622
      %3624 = vmatmul.f32.gmra.mxu0 %v3298
      %v3625 = vpop.f32.mrf.mxu0
      %v3626 = vadd.f32 %v3513, %v3625
      %3627 = vmatmul.f32.gmra.mxu0 %v3302
      %v3628 = vpop.f32.mrf.mxu0
      %v3629 = vadd.f32 %v3516, %v3628
      %3630 = vmatmul.f32.gmra.mxu0 %v3306
      %v3631 = vpop.f32.mrf.mxu0
      %v3632 = vadd.f32 %v3519, %v3631
      %3633 = vmatmul.f32.gmra.mxu0 %v3310
      %v3634 = vpop.f32.mrf.mxu0
      %v3635 = vadd.f32 %v3522, %v3634
      %3636 = vmatmul.f32.gmra.mxu0 %v3314
      %v3637 = vpop.f32.mrf.mxu0
      %v3638 = vadd.f32 %v3525, %v3637
      %3639 = vmatmul.f32.gmra.mxu0 %v3318
      %v3640 = vpop.f32.mrf.mxu0
      %v3641 = vadd.f32 %v3528, %v3640
      %3642 = vmatmul.f32.gmra.mxu0 %v3322
      %v3643 = vpop.f32.mrf.mxu0
      %v3644 = vadd.f32 %v3531, %v3643
      %3645 = vmatmul.f32.gmra.mxu0 %v3326
      %v3646 = vpop.f32.mrf.mxu0
      %v3647 = vadd.f32 %v3534, %v3646
      %3648 = vdwg.mxu0
      %s3649 = scalar_select %p237, 0.5, 1.0
      %v3650 = vld [vmem:[#allocation2] sm:$0xff]
      %v3651 = vld [vmem:[#allocation2 + $0x8] sm:$0xff]
      %v3652 = vld [vmem:[#allocation2 + $0x10] sm:$0xff]
      %v3653 = vld [vmem:[#allocation2 + $0x18] sm:$0xff]
      %v3654 = vld [vmem:[#allocation2 + $0x20] sm:$0xff]
      %v3655 = vld [vmem:[#allocation2 + $0x28] sm:$0xff]
      %v3656 = vld [vmem:[#allocation2 + $0x30] sm:$0xff]
      %v3657 = vld [vmem:[#allocation2 + $0x38] sm:$0xff]
      %v3658 = vld [vmem:[#allocation2 + $0x40] sm:$0xff]
      %v3659 = vld [vmem:[#allocation2 + $0x48] sm:$0xff]
      %v3660 = vld [vmem:[#allocation2 + $0x50] sm:$0xff]
      %v3661 = vld [vmem:[#allocation2 + $0x58] sm:$0xff]
      %v3662 = vld [vmem:[#allocation2 + $0x60] sm:$0xff]
      %v3663 = vld [vmem:[#allocation2 + $0x68] sm:$0xff]
      %v3664 = vld [vmem:[#allocation2 + $0x70] sm:$0xff]
      %v3665 = vld [vmem:[#allocation2 + $0x78] sm:$0xff]
      %v3666 = vld [vmem:[#allocation2 + $0x80] sm:$0xff]
      %v3667 = vld [vmem:[#allocation2 + $0x88] sm:$0xff]
      %v3668 = vld [vmem:[#allocation2 + $0x90] sm:$0xff]
      %v3669 = vld [vmem:[#allocation2 + $0x98] sm:$0xff]
      %v3670 = vld [vmem:[#allocation2 + $0xa0] sm:$0xff]
      %v3671 = vld [vmem:[#allocation2 + $0xa8] sm:$0xff]
      %v3672 = vld [vmem:[#allocation2 + $0xb0] sm:$0xff]
      %v3673 = vld [vmem:[#allocation2 + $0xb8] sm:$0xff]
      %v3674 = vld [vmem:[#allocation2 + $0xc0] sm:$0xff]
      %v3675 = vld [vmem:[#allocation2 + $0xc8] sm:$0xff]
      %v3676 = vld [vmem:[#allocation2 + $0xd0] sm:$0xff]
      %v3677 = vld [vmem:[#allocation2 + $0xd8] sm:$0xff]
      %v3678 = vld [vmem:[#allocation2 + $0xe0] sm:$0xff]
      %v3679 = vld [vmem:[#allocation2 + $0xe8] sm:$0xff]
      %v3680 = vld [vmem:[#allocation2 + $0xf0] sm:$0xff]
      %v3681 = vld [vmem:[#allocation2 + $0xf8] sm:$0xff]
      %3714 = vrot.lane.b32.xlu0 %v3554, 16
      %v3715 = vpop.permute.xlu0 %3714
      %3716 = vrot.lane.b32.xlu0 %v3557, 16
      %v3717 = vpop.permute.xlu0 %3716
      %3718 = vrot.lane.b32.xlu0 %v3560, 16
      %v3719 = vpop.permute.xlu0 %3718
      %3720 = vrot.lane.b32.xlu0 %v3563, 16
      %v3721 = vpop.permute.xlu0 %3720
      %3722 = vrot.lane.b32.xlu0 %v3566, 16
      %v3723 = vpop.permute.xlu0 %3722
      %3724 = vrot.lane.b32.xlu0 %v3569, 16
      %v3725 = vpop.permute.xlu0 %3724
      %3726 = vrot.lane.b32.xlu0 %v3572, 16
      %v3727 = vpop.permute.xlu0 %3726
      %3728 = vrot.lane.b32.xlu0 %v3575, 16
      %v3729 = vpop.permute.xlu0 %3728
      %3730 = vrot.lane.b32.xlu0 %v3578, 16
      %v3731 = vpop.permute.xlu0 %3730
      %3732 = vrot.lane.b32.xlu0 %v3581, 16
      %v3733 = vpop.permute.xlu0 %3732
      %3734 = vrot.lane.b32.xlu0 %v3584, 16
      %v3735 = vpop.permute.xlu0 %3734
      %3736 = vrot.lane.b32.xlu0 %v3587, 16
      %v3737 = vpop.permute.xlu0 %3736
      %3738 = vrot.lane.b32.xlu0 %v3590, 16
      %v3739 = vpop.permute.xlu0 %3738
      %3740 = vrot.lane.b32.xlu0 %v3593, 16
      %v3741 = vpop.permute.xlu0 %3740
      %3742 = vrot.lane.b32.xlu0 %v3596, 16
      %v3743 = vpop.permute.xlu0 %3742
      %3744 = vrot.lane.b32.xlu0 %v3599, 16
      %v3745 = vpop.permute.xlu0 %3744
      %3746 = vrot.lane.b32.xlu0 %v3602, 16
      %v3747 = vpop.permute.xlu0 %3746
      %3748 = vrot.lane.b32.xlu0 %v3605, 16
      %v3749 = vpop.permute.xlu0 %3748
      %3750 = vrot.lane.b32.xlu0 %v3608, 16
      %v3751 = vpop.permute.xlu0 %3750
      %3752 = vrot.lane.b32.xlu0 %v3611, 16
      %v3753 = vpop.permute.xlu0 %3752
      %3754 = vrot.lane.b32.xlu0 %v3614, 16
      %v3755 = vpop.permute.xlu0 %3754
      %3756 = vrot.lane.b32.xlu0 %v3617, 16
      %v3757 = vpop.permute.xlu0 %3756
      %3758 = vrot.lane.b32.xlu0 %v3620, 16
      %v3759 = vpop.permute.xlu0 %3758
      %3760 = vrot.lane.b32.xlu0 %v3623, 16
      %v3761 = vpop.permute.xlu0 %3760
      %3762 = vrot.lane.b32.xlu0 %v3626, 16
      %v3763 = vpop.permute.xlu0 %3762
      %3764 = vrot.lane.b32.xlu0 %v3629, 16
      %v3765 = vpop.permute.xlu0 %3764
      %3766 = vrot.lane.b32.xlu0 %v3632, 16
      %v3767 = vpop.permute.xlu0 %3766
      %3768 = vrot.lane.b32.xlu0 %v3635, 16
      %v3769 = vpop.permute.xlu0 %3768
      %3770 = vrot.lane.b32.xlu0 %v3638, 16
      %v3771 = vpop.permute.xlu0 %3770
      %3772 = vrot.lane.b32.xlu0 %v3641, 16
      %v3773 = vpop.permute.xlu0 %3772
      %3774 = vrot.lane.b32.xlu0 %v3644, 16
      %v3775 = vpop.permute.xlu0 %3774
      %3776 = vrot.lane.b32.xlu0 %v3647, 16
      %v3777 = vpop.permute.xlu0 %3776
      %v3810 = vmul.f32 %v274, %v3715
      %v3811 = vmul.f32 %v275, %v3717
      %v3812 = vmul.f32 %v276, %v3719
      %v3813 = vmul.f32 %v277, %v3721
      %v3814 = vmul.f32 %v278, %v3723
      %v3815 = vmul.f32 %v279, %v3725
      %v3816 = vmul.f32 %v280, %v3727
      %v3817 = vmul.f32 %v281, %v3729
      %v3818 = vmul.f32 %v282, %v3731
      %v3819 = vmul.f32 %v283, %v3733
      %v3820 = vmul.f32 %v284, %v3735
      %v3821 = vmul.f32 %v285, %v3737
      %v3822 = vmul.f32 %v286, %v3739
      %v3823 = vmul.f32 %v287, %v3741
      %v3824 = vmul.f32 %v288, %v3743
      %v3825 = vmul.f32 %v289, %v3745
      %v3826 = vmul.f32 %v290, %v3747
      %v3827 = vmul.f32 %v291, %v3749
      %v3828 = vmul.f32 %v292, %v3751
      %v3829 = vmul.f32 %v293, %v3753
      %v3830 = vmul.f32 %v294, %v3755
      %v3831 = vmul.f32 %v295, %v3757
      %v3832 = vmul.f32 %v296, %v3759
      %v3833 = vmul.f32 %v297, %v3761
      %v3834 = vmul.f32 %v298, %v3763
      %v3835 = vmul.f32 %v299, %v3765
      %v3836 = vmul.f32 %v300, %v3767
      %v3837 = vmul.f32 %v301, %v3769
      %v3838 = vmul.f32 %v302, %v3771
      %v3839 = vmul.f32 %v303, %v3773
      %v3840 = vmul.f32 %v304, %v3775
      %v3841 = vmul.f32 %v305, %v3777
      %v3842 = vstv %s3649
      %v3843 = vmul.f32 %v3842, %v3810
      %v3844 = vmul.f32 %v3842, %v3811
      %v3845 = vmul.f32 %v3842, %v3812
      %v3846 = vmul.f32 %v3842, %v3813
      %v3847 = vmul.f32 %v3842, %v3814
      %v3848 = vmul.f32 %v3842, %v3815
      %v3849 = vmul.f32 %v3842, %v3816
      %v3850 = vmul.f32 %v3842, %v3817
      %v3851 = vmul.f32 %v3842, %v3818
      %v3852 = vmul.f32 %v3842, %v3819
      %v3853 = vmul.f32 %v3842, %v3820
      %v3854 = vmul.f32 %v3842, %v3821
      %v3855 = vmul.f32 %v3842, %v3822
      %v3856 = vmul.f32 %v3842, %v3823
      %v3857 = vmul.f32 %v3842, %v3824
      %v3858 = vmul.f32 %v3842, %v3825
      %v3859 = vmul.f32 %v3842, %v3826
      %v3860 = vmul.f32 %v3842, %v3827
      %v3861 = vmul.f32 %v3842, %v3828
      %v3862 = vmul.f32 %v3842, %v3829
      %v3863 = vmul.f32 %v3842, %v3830
      %v3864 = vmul.f32 %v3842, %v3831
      %v3865 = vmul.f32 %v3842, %v3832
      %v3866 = vmul.f32 %v3842, %v3833
      %v3867 = vmul.f32 %v3842, %v3834
      %v3868 = vmul.f32 %v3842, %v3835
      %v3869 = vmul.f32 %v3842, %v3836
      %v3870 = vmul.f32 %v3842, %v3837
      %v3871 = vmul.f32 %v3842, %v3838
      %v3872 = vmul.f32 %v3842, %v3839
      %v3873 = vmul.f32 %v3842, %v3840
      %v3874 = vmul.f32 %v3842, %v3841
      %3907 = vrot.lane.b32.xlu0 %v3843, 112
      %v3908 = vpop.permute.xlu0 %3907
      %3909 = vrot.lane.b32.xlu0 %v3844, 112
      %v3910 = vpop.permute.xlu0 %3909
      %3911 = vrot.lane.b32.xlu0 %v3845, 112
      %v3912 = vpop.permute.xlu0 %3911
      %3913 = vrot.lane.b32.xlu0 %v3846, 112
      %v3914 = vpop.permute.xlu0 %3913
      %3915 = vrot.lane.b32.xlu0 %v3847, 112
      %v3916 = vpop.permute.xlu0 %3915
      %3917 = vrot.lane.b32.xlu0 %v3848, 112
      %v3918 = vpop.permute.xlu0 %3917
      %3919 = vrot.lane.b32.xlu0 %v3849, 112
      %v3920 = vpop.permute.xlu0 %3919
      %3921 = vrot.lane.b32.xlu0 %v3850, 112
      %v3922 = vpop.permute.xlu0 %3921
      %3923 = vrot.lane.b32.xlu0 %v3851, 112
      %v3924 = vpop.permute.xlu0 %3923
      %3925 = vrot.lane.b32.xlu0 %v3852, 112
      %v3926 = vpop.permute.xlu0 %3925
      %3927 = vrot.lane.b32.xlu0 %v3853, 112
      %v3928 = vpop.permute.xlu0 %3927
      %3929 = vrot.lane.b32.xlu0 %v3854, 112
      %v3930 = vpop.permute.xlu0 %3929
      %3931 = vrot.lane.b32.xlu0 %v3855, 112
      %v3932 = vpop.permute.xlu0 %3931
      %3933 = vrot.lane.b32.xlu0 %v3856, 112
      %v3934 = vpop.permute.xlu0 %3933
      %3935 = vrot.lane.b32.xlu0 %v3857, 112
      %v3936 = vpop.permute.xlu0 %3935
      %3937 = vrot.lane.b32.xlu0 %v3858, 112
      %v3938 = vpop.permute.xlu0 %3937
      %3939 = vrot.lane.b32.xlu0 %v3859, 112
      %v3940 = vpop.permute.xlu0 %3939
      %3941 = vrot.lane.b32.xlu0 %v3860, 112
      %v3942 = vpop.permute.xlu0 %3941
      %3943 = vrot.lane.b32.xlu0 %v3861, 112
      %v3944 = vpop.permute.xlu0 %3943
      %3945 = vrot.lane.b32.xlu0 %v3862, 112
      %v3946 = vpop.permute.xlu0 %3945
      %3947 = vrot.lane.b32.xlu0 %v3863, 112
      %v3948 = vpop.permute.xlu0 %3947
      %3949 = vrot.lane.b32.xlu0 %v3864, 112
      %v3950 = vpop.permute.xlu0 %3949
      %3951 = vrot.lane.b32.xlu0 %v3865, 112
      %v3952 = vpop.permute.xlu0 %3951
      %3953 = vrot.lane.b32.xlu0 %v3866, 112
      %v3954 = vpop.permute.xlu0 %3953
      %3955 = vrot.lane.b32.xlu0 %v3867, 112
      %v3956 = vpop.permute.xlu0 %3955
      %3957 = vrot.lane.b32.xlu0 %v3868, 112
      %v3958 = vpop.permute.xlu0 %3957
      %3959 = vrot.lane.b32.xlu0 %v3869, 112
      %v3960 = vpop.permute.xlu0 %3959
      %3961 = vrot.lane.b32.xlu0 %v3870, 112
      %v3962 = vpop.permute.xlu0 %3961
      %3963 = vrot.lane.b32.xlu0 %v3871, 112
      %v3964 = vpop.permute.xlu0 %3963
      %3965 = vrot.lane.b32.xlu0 %v3872, 112
      %v3966 = vpop.permute.xlu0 %3965
      %3967 = vrot.lane.b32.xlu0 %v3873, 112
      %v3968 = vpop.permute.xlu0 %3967
      %3969 = vrot.lane.b32.xlu0 %v3874, 112
      %v3970 = vpop.permute.xlu0 %3969
      %v4003 = vadd.f32 %v3650, %v3908
      %v4004 = vadd.f32 %v3651, %v3910
      %v4005 = vadd.f32 %v3652, %v3912
      %v4006 = vadd.f32 %v3653, %v3914
      %v4007 = vadd.f32 %v3654, %v3916
      %v4008 = vadd.f32 %v3655, %v3918
      %v4009 = vadd.f32 %v3656, %v3920
      %v4010 = vadd.f32 %v3657, %v3922
      %v4011 = vadd.f32 %v3658, %v3924
      %v4012 = vadd.f32 %v3659, %v3926
      %v4013 = vadd.f32 %v3660, %v3928
      %v4014 = vadd.f32 %v3661, %v3930
      %v4015 = vadd.f32 %v3662, %v3932
      %v4016 = vadd.f32 %v3663, %v3934
      %v4017 = vadd.f32 %v3664, %v3936
      %v4018 = vadd.f32 %v3665, %v3938
      %v4019 = vadd.f32 %v3666, %v3940
      %v4020 = vadd.f32 %v3667, %v3942
      %v4021 = vadd.f32 %v3668, %v3944
      %v4022 = vadd.f32 %v3669, %v3946
      %v4023 = vadd.f32 %v3670, %v3948
      %v4024 = vadd.f32 %v3671, %v3950
      %v4025 = vadd.f32 %v3672, %v3952
      %v4026 = vadd.f32 %v3673, %v3954
      %v4027 = vadd.f32 %v3674, %v3956
      %v4028 = vadd.f32 %v3675, %v3958
      %v4029 = vadd.f32 %v3676, %v3960
      %v4030 = vadd.f32 %v3677, %v3962
      %v4031 = vadd.f32 %v3678, %v3964
      %v4032 = vadd.f32 %v3679, %v3966
      %v4033 = vadd.f32 %v3680, %v3968
      %v4034 = vadd.f32 %v3681, %v3970
      %4035 = vst.msk [vmem:[#allocation2] sm:$0xff] %vm434, %v4003
      %4036 = vst.msk [vmem:[#allocation2 + $0x8] sm:$0xff] %vm434, %v4004
      %4037 = vst.msk [vmem:[#allocation2 + $0x10] sm:$0xff] %vm434, %v4005
      %4038 = vst.msk [vmem:[#allocation2 + $0x18] sm:$0xff] %vm434, %v4006
      %4039 = vst.msk [vmem:[#allocation2 + $0x20] sm:$0xff] %vm434, %v4007
      %4040 = vst.msk [vmem:[#allocation2 + $0x28] sm:$0xff] %vm434, %v4008
      %4041 = vst.msk [vmem:[#allocation2 + $0x30] sm:$0xff] %vm434, %v4009
      %4042 = vst.msk [vmem:[#allocation2 + $0x38] sm:$0xff] %vm434, %v4010
      %4043 = vst.msk [vmem:[#allocation2 + $0x40] sm:$0xff] %vm434, %v4011
      %4044 = vst.msk [vmem:[#allocation2 + $0x48] sm:$0xff] %vm434, %v4012
      %4045 = vst.msk [vmem:[#allocation2 + $0x50] sm:$0xff] %vm434, %v4013
      %4046 = vst.msk [vmem:[#allocation2 + $0x58] sm:$0xff] %vm434, %v4014
      %4047 = vst.msk [vmem:[#allocation2 + $0x60] sm:$0xff] %vm434, %v4015
      %4048 = vst.msk [vmem:[#allocation2 + $0x68] sm:$0xff] %vm434, %v4016
      %4049 = vst.msk [vmem:[#allocation2 + $0x70] sm:$0xff] %vm434, %v4017
      %4050 = vst.msk [vmem:[#allocation2 + $0x78] sm:$0xff] %vm434, %v4018
      %4051 = vst.msk [vmem:[#allocation2 + $0x80] sm:$0xff] %vm434, %v4019
      %4052 = vst.msk [vmem:[#allocation2 + $0x88] sm:$0xff] %vm434, %v4020
      %4053 = vst.msk [vmem:[#allocation2 + $0x90] sm:$0xff] %vm434, %v4021
      %4054 = vst.msk [vmem:[#allocation2 + $0x98] sm:$0xff] %vm434, %v4022
      %4055 = vst.msk [vmem:[#allocation2 + $0xa0] sm:$0xff] %vm434, %v4023
      %4056 = vst.msk [vmem:[#allocation2 + $0xa8] sm:$0xff] %vm434, %v4024
      %4057 = vst.msk [vmem:[#allocation2 + $0xb0] sm:$0xff] %vm434, %v4025
      %4058 = vst.msk [vmem:[#allocation2 + $0xb8] sm:$0xff] %vm434, %v4026
      %4059 = vst.msk [vmem:[#allocation2 + $0xc0] sm:$0xff] %vm434, %v4027
      %4060 = vst.msk [vmem:[#allocation2 + $0xc8] sm:$0xff] %vm434, %v4028
      %4061 = vst.msk [vmem:[#allocation2 + $0xd0] sm:$0xff] %vm434, %v4029
      %4062 = vst.msk [vmem:[#allocation2 + $0xd8] sm:$0xff] %vm434, %v4030
      %4063 = vst.msk [vmem:[#allocation2 + $0xe0] sm:$0xff] %vm434, %v4031
      %4064 = vst.msk [vmem:[#allocation2 + $0xe8] sm:$0xff] %vm434, %v4032
      %4065 = vst.msk [vmem:[#allocation2 + $0xf0] sm:$0xff] %vm434, %v4033
      %4066 = vst.msk [vmem:[#allocation2 + $0xf8] sm:$0xff] %vm434, %v4034
      %p4067 = scmp.eq.s32.totalorder %s236, 0
      // Predicated region
      $region33: #{tpu_custom_call.1} parent=27 // pred_check
        %p4068 = pneg %p4067
      $region34: #{tpu_custom_call.1} parent=27 // pred_check_branch
        %4070 = sbr.rel (%p4068) target = $region36
      $region35: #{tpu_custom_call.1} parent=27 // pred_region
        %v4071 = vld [vmem:[#allocation2] sm:$0xff]
        %v4072 = vld [vmem:[#allocation2 + $0x8] sm:$0xff]
        %v4073 = vld [vmem:[#allocation2 + $0x10] sm:$0xff]
        %v4074 = vld [vmem:[#allocation2 + $0x18] sm:$0xff]
        %v4075 = vld [vmem:[#allocation2 + $0x20] sm:$0xff]
        %v4076 = vld [vmem:[#allocation2 + $0x28] sm:$0xff]
        %v4077 = vld [vmem:[#allocation2 + $0x30] sm:$0xff]
        %v4078 = vld [vmem:[#allocation2 + $0x38] sm:$0xff]
        %v4079 = vld [vmem:[#allocation2 + $0x40] sm:$0xff]
        %v4080 = vld [vmem:[#allocation2 + $0x48] sm:$0xff]
        %v4081 = vld [vmem:[#allocation2 + $0x50] sm:$0xff]
        %v4082 = vld [vmem:[#allocation2 + $0x58] sm:$0xff]
        %v4083 = vld [vmem:[#allocation2 + $0x60] sm:$0xff]
        %v4084 = vld [vmem:[#allocation2 + $0x68] sm:$0xff]
        %v4085 = vld [vmem:[#allocation2 + $0x70] sm:$0xff]
        %v4086 = vld [vmem:[#allocation2 + $0x78] sm:$0xff]
        %v4087 = vld [vmem:[#allocation2 + $0x80] sm:$0xff]
        %v4088 = vld [vmem:[#allocation2 + $0x88] sm:$0xff]
        %v4089 = vld [vmem:[#allocation2 + $0x90] sm:$0xff]
        %v4090 = vld [vmem:[#allocation2 + $0x98] sm:$0xff]
        %v4091 = vld [vmem:[#allocation2 + $0xa0] sm:$0xff]
        %v4092 = vld [vmem:[#allocation2 + $0xa8] sm:$0xff]
        %v4093 = vld [vmem:[#allocation2 + $0xb0] sm:$0xff]
        %v4094 = vld [vmem:[#allocation2 + $0xb8] sm:$0xff]
        %v4095 = vld [vmem:[#allocation2 + $0xc0] sm:$0xff]
        %v4096 = vld [vmem:[#allocation2 + $0xc8] sm:$0xff]
        %v4097 = vld [vmem:[#allocation2 + $0xd0] sm:$0xff]
        %v4098 = vld [vmem:[#allocation2 + $0xd8] sm:$0xff]
        %v4099 = vld [vmem:[#allocation2 + $0xe0] sm:$0xff]
        %v4100 = vld [vmem:[#allocation2 + $0xe8] sm:$0xff]
        %v4101 = vld [vmem:[#allocation2 + $0xf0] sm:$0xff]
        %v4102 = vld [vmem:[#allocation2 + $0xf8] sm:$0xff]
        %v4103 = vsel %vm434, %v4071, 0.0
        %v4104 = vsel %vm434, %v4072, 0.0
        %v4105 = vadd.f32 %v4103, %v4104
        %v4106 = vsel %vm434, %v4073, 0.0
        %v4107 = vadd.f32 %v4105, %v4106
        %v4108 = vsel %vm434, %v4074, 0.0
        %v4109 = vadd.f32 %v4107, %v4108
        %v4110 = vsel %vm434, %v4075, 0.0
        %v4111 = vadd.f32 %v4109, %v4110
        %v4112 = vsel %vm434, %v4076, 0.0
        %v4113 = vadd.f32 %v4111, %v4112
        %v4114 = vsel %vm434, %v4077, 0.0
        %v4115 = vadd.f32 %v4113, %v4114
        %v4116 = vsel %vm434, %v4078, 0.0
        %v4117 = vadd.f32 %v4115, %v4116
        %v4118 = vsel %vm434, %v4079, 0.0
        %v4119 = vadd.f32 %v4117, %v4118
        %v4120 = vsel %vm434, %v4080, 0.0
        %v4121 = vadd.f32 %v4119, %v4120
        %v4122 = vsel %vm434, %v4081, 0.0
        %v4123 = vadd.f32 %v4121, %v4122
        %v4124 = vsel %vm434, %v4082, 0.0
        %v4125 = vadd.f32 %v4123, %v4124
        %v4126 = vsel %vm434, %v4083, 0.0
        %v4127 = vadd.f32 %v4125, %v4126
        %v4128 = vsel %vm434, %v4084, 0.0
        %v4129 = vadd.f32 %v4127, %v4128
        %v4130 = vsel %vm434, %v4085, 0.0
        %v4131 = vadd.f32 %v4129, %v4130
        %v4132 = vsel %vm434, %v4086, 0.0
        %v4133 = vadd.f32 %v4131, %v4132
        %v4134 = vsel %vm434, %v4087, 0.0
        %v4135 = vadd.f32 %v4133, %v4134
        %v4136 = vsel %vm434, %v4088, 0.0
        %v4137 = vadd.f32 %v4135, %v4136
        %v4138 = vsel %vm434, %v4089, 0.0
        %v4139 = vadd.f32 %v4137, %v4138
        %v4140 = vsel %vm434, %v4090, 0.0
        %v4141 = vadd.f32 %v4139, %v4140
        %v4142 = vsel %vm434, %v4091, 0.0
        %v4143 = vadd.f32 %v4141, %v4142
        %v4144 = vsel %vm434, %v4092, 0.0
        %v4145 = vadd.f32 %v4143, %v4144
        %v4146 = vsel %vm434, %v4093, 0.0
        %v4147 = vadd.f32 %v4145, %v4146
        %v4148 = vsel %vm434, %v4094, 0.0
        %v4149 = vadd.f32 %v4147, %v4148
        %v4150 = vsel %vm434, %v4095, 0.0
        %v4151 = vadd.f32 %v4149, %v4150
        %v4152 = vsel %vm434, %v4096, 0.0
        %v4153 = vadd.f32 %v4151, %v4152
        %v4154 = vsel %vm434, %v4097, 0.0
        %v4155 = vadd.f32 %v4153, %v4154
        %v4156 = vsel %vm434, %v4098, 0.0
        %v4157 = vadd.f32 %v4155, %v4156
        %v4158 = vsel %vm434, %v4099, 0.0
        %v4159 = vadd.f32 %v4157, %v4158
        %v4160 = vsel %vm434, %v4100, 0.0
        %v4161 = vadd.f32 %v4159, %v4160
        %v4162 = vsel %vm434, %v4101, 0.0
        %v4163 = vadd.f32 %v4161, %v4162
        %v4164 = vsel %vm434, %v4102, 0.0
        %v4165 = vadd.f32 %v4163, %v4164
        %4166 = vadd.xlane.f32.xlu0 %v4165
        %v4167 = vpop.xlane.xlu0 %4166
        %v4168 = vrot.slane %v4167, 4
        %v4169 = vadd.f32 %v4167, %v4168
        %v4170 = vrot.slane %v4169, 2
        %v4171 = vadd.f32 %v4169, %v4170
        %v4172 = vrot.slane %v4171, 1
        %v4173 = vadd.f32 %v4171, %v4172
        %s4174 = vtos %v4173
        %v4175 = vstv %s4174
        %v4176 = vadd.f32 %v4175, 0.0
        %vm4177 = vcmask 0
        %4178 = vst.msk [vmem:[%s233] sm:$0x1] %vm4177, %v4176
      $region36: #{tpu_custom_call.1} parent=27 // pred_fallthru
        _
      %s4179 = sld [smem:[#allocation4 + %s22]]
      %p4180 = scmp.lt.s32.totalorder %s21, 1
      %s4181 = scalar_select %p4180, %s21, 1
      %p4182 = scmp.lt.s32.totalorder %s4179, 0
      %s4183 = scalar_select %p4182, %s4179, 0
      %s4184 = sadd.s32 %s4183, %s4181
      %s4185 = scalar_lea.vmem %s4, %s4184
      // Predicated region
      $region37: #{tpu_custom_call.1} parent=27 // pred_check
        %p4186 = pneg %p111
      $region38: #{tpu_custom_call.1} parent=27 // pred_check_branch
        %4188 = sbr.rel (%p4186) target = $region40
      $region39: #{tpu_custom_call.1} parent=27 // pred_region
        %s4189 = sld [smem:[#allocation4 + %s22]]
      $region40: #{tpu_custom_call.1} parent=27 // pred_fallthru
        _
    $region28: #{tpu_custom_call.1} parent=5 // pred_fallthru
      _
    %p4190 = scmp.le.s32.totalorder 2, %s12
    // Predicated region
    $region41: #{tpu_custom_call.1} parent=5 // pred_check
      %p4191 = pneg %p4190
    $region42: #{tpu_custom_call.1} parent=5 // pred_check_branch
      %4193 = sbr.rel (%p4191) target = $region44
    $region43: #{tpu_custom_call.1} parent=5 // pred_region
      %s4194 = ssub.s32 %s12, 2
      // Predicated region
      $region45: #{tpu_custom_call.1} parent=43 // pred_check
        %p4195 = pneg %p117
      $region46: #{tpu_custom_call.1} parent=43 // pred_check_branch
        %4197 = sbr.rel (%p4195) target = $region48
      $region47: #{tpu_custom_call.1} parent=43 // pred_region
        %s4198 = sld [smem:[#allocation4 + %s24]]
        %p4199 = scmp.lt.s32.totalorder %s23, 1
        %s4200 = scalar_select %p4199, %s23, 1
        %p4201 = scmp.lt.s32.totalorder %s4198, 0
        %s4202 = scalar_select %p4201, %s4198, 0
        %s4203 = sadd.s32 %s4202, %s4200
        %s4204 = scalar_lea.vmem %s4, %s4203
      $region48: #{tpu_custom_call.1} parent=43 // pred_fallthru
        _
    $region44: #{tpu_custom_call.1} parent=5 // pred_fallthru
      _
  $region6: #{tpu_custom_call.1} parent=0 // loop_footer
    %s16 = sadd.s32 1, %s12
  $region7: #{tpu_custom_call.1} parent=0 // loop_footer_branch
    %11 = sbr.rel target = $region3
  $region8: #{tpu_custom_call.1} parent=0 // loop_exit
    _

</llo_original>
